<compile_context>
chip_gen: v7x
topology: tpu7x:2x2x1
jax: 0.10.0
libtpu: 0.0.40
codegen_flags: <defaults>
</compile_context>

<pallas_src>
import functools

import jax
import jax.numpy as jnp
from jax.experimental import pallas as pl
from jax.experimental.pallas import tpu as pltpu


# ----------------------------------------------------------------------------
# Fused Pallas kernel: whole VONet forward for one image per grid step.
# ----------------------------------------------------------------------------
def _vonet_kernel(av_ref, ves_ref,
                  gc_w1_ref, gc_b1_ref, gc_w2_ref, gc_b2_ref,
                  gc_w3_ref, gc_b3_ref,
                  gf_w1_ref, gf_b1_ref, gf_w2_ref, gf_b2_ref,
                  fc_w_ref, fc_b_ref,
                  h1_ref, h2_ref, vff_ref, g1_ref, avp_ref,
                  pad_ref,
                  *, H, W, pad, alpha):
    HW = H * W

    # Zero the padded scratch slab once per step; the left/right zero borders
    # make vertical (dy) out-of-range taps read zeros automatically.
    pad_ref[...] = jnp.zeros(pad_ref.shape, pad_ref.dtype)

    # Horizontal-wrap masks: a flattened shift with dx != 0 pulls in the edge
    # pixel of the neighbouring row; mask those lanes to zero.  Built once and
    # reused by all four 3x3 convolutions.
    col = jax.lax.broadcasted_iota(jnp.int32, (1, HW), 1) % W
    mask_l = col >= 1          # valid lanes for dx == -1
    mask_r = col < (W - 1)     # valid lanes for dx == +1
    taps = []
    for t in range(9):
        dy, dx = t // 3 - 1, t % 3 - 1
        m = mask_l if dx == -1 else (mask_r if dx == 1 else None)
        taps.append((dy * W + dx, m))

    def load_shift(c, off, m):
        xs = pad_ref[0:c, pad + off:pad + off + HW]
        return jnp.where(m, xs, 0.0) if m is not None else xs

    def conv3x3(c, w_ref, b_ref):
        # In-kernel im2col: 9 shifted [c, HW] slabs x per-tap [cout, c] weights.
        cout = w_ref.shape[1]
        acc = jnp.zeros((cout, HW), jnp.float32)
        for t, (off, m) in enumerate(taps):
            acc = acc + jnp.dot(w_ref[t], load_shift(c, off, m),
                                preferred_element_type=jnp.float32)
        return acc + b_ref[...]

    # ---- Gc = CirUnet(2 -> 1) stand-in (MS=True: returns a list) ----------
    pad_ref[0:2, pad:pad + HW] = ves_ref[0]
    h1 = jnp.maximum(conv3x3(2, gc_w1_ref, gc_b1_ref), 0.0)        # [2, HW]
    pad_ref[0:2, pad:pad + HW] = h1
    h2 = jnp.maximum(conv3x3(2, gc_w2_ref, gc_b2_ref), 0.0)        # [2, HW]
    # Fused 1x1 conv + sigmoid: outVessel = sigmoid(outVesselList[-1]).
    vlog = jnp.dot(gc_w3_ref[...], h2,
                   preferred_element_type=jnp.float32) + gc_b3_ref[...]
    vessel = 1.0 / (1.0 + jnp.exp(-vlog))                          # [1, HW]

    # ---- Gf = ConnectTrans(imgAv, outVessel) stand-in (CA=True) -----------
    # Channel concat folded in: imgAv and outVessel are written to adjacent
    # scratch rows and a single conv runs over cin_av + 1 channels.
    cin_av = av_ref.shape[1]
    pad_ref[0:cin_av, pad:pad + HW] = av_ref[0]
    pad_ref[cin_av:cin_av + 1, pad:pad + HW] = vessel
    g1 = jnp.maximum(conv3x3(cin_av + 1, gf_w1_ref, gf_b1_ref), 0.0)  # [16,HW]
    pad_ref[0:16, pad:pad + HW] = g1
    g2 = jnp.maximum(conv3x3(16, gf_w2_ref, gf_b2_ref), 0.0)          # [16,HW]

    # ---- FF + (outAv * outVessel) + finalAvConv (1x1) + softmax(dim=1) ----
    # TODO(synk): FFModule definition not provided; stand-in scales by alpha.
    vessel_ff = vessel * alpha                                     # [1, HW]
    y = g2 * vessel_ff                                             # [16, HW]
    logits = jnp.dot(fc_w_ref[...], y,
                     preferred_element_type=jnp.float32) + fc_b_ref[...]
    m = jnp.max(logits, axis=0, keepdims=True)
    e = jnp.exp(logits - m)
    prob = e * pl.reciprocal(jnp.sum(e, axis=0, keepdims=True), approx=True)

    h1_ref[0] = h1.astype(h1_ref.dtype)
    h2_ref[0] = h2.astype(h2_ref.dtype)
    vff_ref[0] = vessel_ff.astype(vff_ref.dtype)
    g1_ref[0] = g1.astype(g1_ref.dtype)
    avp_ref[0] = prob.astype(avp_ref.dtype)


# ----------------------------------------------------------------------------
# Wrapper: layout plumbing only (contiguous reshapes, no transposes).
# ----------------------------------------------------------------------------
@functools.partial(jax.jit, static_argnames=("alpha",))
def vonet_forward(params, imgAv, imgVes, *, alpha=1.0):
    """imgAv: [N, inputFeature, H, W], imgVes: [N, 2, H, W] (NCHW, like PyTorch)."""
    N, cin_av, H, W = imgAv.shape
    assert imgVes.shape == (N, 2, H, W)
    HW = H * W
    output_feature = params["fc_w"].shape[0]
    pad = max(128, ((W + 1 + 127) // 128) * 128)   # halo width, lane-aligned
    max_c = max(16, cin_av + 1)

    av = imgAv.reshape(N, cin_av, HW)    # NCHW -> [N, C, H*W] (free reshape)
    ves = imgVes.reshape(N, 2, HW)

    weight_names = ("gc_w1", "gc_b1", "gc_w2", "gc_b2", "gc_w3", "gc_b3",
                    "gf_w1", "gf_b1", "gf_w2", "gf_b2", "fc_w", "fc_b")
    weights = [params[k] for k in weight_names]

    def act_spec(c):
        return pl.BlockSpec((1, c, HW), lambda i: (i, 0, 0))

    def full_spec(arr):
        zeros = (0,) * arr.ndim
        return pl.BlockSpec(arr.shape, lambda i: zeros)

    kern = functools.partial(_vonet_kernel, H=H, W=W, pad=pad, alpha=alpha)

    h1, h2, vff, g1, avp = pl.pallas_call(
        kern,
        out_shape=(
            jax.ShapeDtypeStruct((N, 2, HW), jnp.float32),               # h1
            jax.ShapeDtypeStruct((N, 2, HW), jnp.float32),               # h2
            jax.ShapeDtypeStruct((N, 1, HW), jnp.float32),               # FF(vessel)
            jax.ShapeDtypeStruct((N, 16, HW), jnp.float32),              # g1
            jax.ShapeDtypeStruct((N, output_feature, HW), jnp.float32),  # softmax(outAv)
        ),
        grid_spec=pltpu.PrefetchScalarGridSpec(
            num_scalar_prefetch=0,
            grid=(N,),
            in_specs=[act_spec(cin_av), act_spec(2)]
                     + [full_spec(w) for w in weights],
            out_specs=(act_spec(2), act_spec(2), act_spec(1),
                       act_spec(16), act_spec(output_feature)),
            scratch_shapes=[pltpu.VMEM((max_c, HW + 2 * pad), jnp.float32)],
        ),
        compiler_params=pltpu.CompilerParams(
            dimension_semantics=("parallel",)),
    )(av, ves, *weights)

    # Assemble lists exactly as VONet.forward does (last elements replaced).
    outAvList = [g1.reshape(N, 16, H, W),
                 avp.reshape(N, output_feature, H, W)]
    outVesselList = [h1.reshape(N, 2, H, W),
                     h2.reshape(N, 2, H, W),
                     vff.reshape(N, 1, H, W)]
    return outAvList, outVesselList


# ----------------------------------------------------------------------------
# Parameter init (kaiming, channel-major weight layout [tap, Cout, Cin]).
# ----------------------------------------------------------------------------
def _kaiming(key, shape, fan_in):
    return jax.random.normal(key, shape, dtype=jnp.float32) * jnp.sqrt(2.0 / fan_in)


def init_params(key, input_feature, output_feature):
    ks = jax.random.split(key, 6)
    zb = lambda c: jnp.zeros((c, 1), jnp.float32)
    cin1 = input_feature + 1
    return {
        # Gc (CirUnet stand-in): 3x3(2->2) relu, 3x3(2->2) relu, 1x1(2->1)
        "gc_w1": _kaiming(ks[0], (9, 2, 2), 9 * 2), "gc_b1": zb(2),
        "gc_w2": _kaiming(ks[1], (9, 2, 2), 9 * 2), "gc_b2": zb(2),
        "gc_w3": _kaiming(ks[2], (1, 2), 2),        "gc_b3": zb(1),
        # Gf (ConnectTrans stand-in, CA=True): 3x3((cin+1)->16), 3x3(16->16)
        "gf_w1": _kaiming(ks[3], (9, 16, cin1), 9 * cin1), "gf_b1": zb(16),
        "gf_w2": _kaiming(ks[4], (9, 16, 16), 9 * 16),     "gf_b2": zb(16),
        # finalAvConv = ConvolutionPart([16, outputFeature], kernels=1, isRelu=False)
        "fc_w": _kaiming(ks[5], (output_feature, 16), 16), "fc_b": zb(output_feature),
    }


# ----------------------------------------------------------------------------
if __name__ == "__main__":
    N, H, W = 2, 16, 16
    input_feature, output_feature = 3, 3
    alpha = 1.0

    key = jax.random.PRNGKey(0)
    k_par, k_av, k_ves = jax.random.split(key, 3)

    params = init_params(k_par, input_feature, output_feature)
    imgAv = jax.random.normal(k_av, (N, input_feature, H, W), dtype=jnp.float32)
    imgVes = jax.random.normal(k_ves, (N, 2, H, W), dtype=jnp.float32)

    outAvList, outVesselList = vonet_forward(params, imgAv, imgVes, alpha=alpha)

    for t in outAvList + outVesselList:
        jax.block_until_ready(t)

    # Sanity: shapes, finiteness, and softmax over channel dim sums ~ 1
    # (approx EUP reciprocal in the softmax -> relaxed tolerance).
    assert outAvList[-1].shape == (N, output_feature, H, W)
    assert outVesselList[-1].shape == (N, 1, H, W)
    assert bool(jnp.all(jnp.isfinite(outAvList[-1])))
    assert bool(jnp.all(jnp.isfinite(outVesselList[-1])))
    s = jnp.sum(outAvList[-1], axis=1)
    assert bool(jnp.allclose(s, 1.0, atol=1e-2))

    print("KERNEL_OK")
</pallas_src>

<mosaic_0001>
module attributes {stable_mosaic.version = 11 : i64} {
  func.func @_vonet_kernel(%arg0: i32, %arg1: memref<1x3x256xf32, #tpu.memory_space<vmem>>, %arg2: memref<1x2x256xf32, #tpu.memory_space<vmem>>, %arg3: memref<9x2x2xf32, #tpu.memory_space<vmem>>, %arg4: memref<2x1xf32, #tpu.memory_space<vmem>>, %arg5: memref<9x2x2xf32, #tpu.memory_space<vmem>>, %arg6: memref<2x1xf32, #tpu.memory_space<vmem>>, %arg7: memref<1x2xf32, #tpu.memory_space<vmem>>, %arg8: memref<1x1xf32, #tpu.memory_space<vmem>>, %arg9: memref<9x16x4xf32, #tpu.memory_space<vmem>>, %arg10: memref<16x1xf32, #tpu.memory_space<vmem>>, %arg11: memref<9x16x16xf32, #tpu.memory_space<vmem>>, %arg12: memref<16x1xf32, #tpu.memory_space<vmem>>, %arg13: memref<3x16xf32, #tpu.memory_space<vmem>>, %arg14: memref<3x1xf32, #tpu.memory_space<vmem>>, %arg15: memref<1x2x256xf32, #tpu.memory_space<vmem>>, %arg16: memref<1x2x256xf32, #tpu.memory_space<vmem>>, %arg17: memref<1x1x256xf32, #tpu.memory_space<vmem>>, %arg18: memref<1x16x256xf32, #tpu.memory_space<vmem>>, %arg19: memref<1x3x256xf32, #tpu.memory_space<vmem>>, %arg20: memref<16x512xf32, #tpu.memory_space<vmem>>) attributes {dimension_semantics = [#tpu.dimension_semantics<parallel>], iteration_bounds = array<i64: 2>, scalar_prefetch = 0 : i64, scratch_operands = 1 : i64, tpu.core_type = #tpu.core_type<tc>, window_params = [{transform_indices = @transform_0, window_bounds = array<i64: 1, 3, 256>}, {transform_indices = @transform_1, window_bounds = array<i64: 1, 2, 256>}, {pipeline_mode = #tpu.pipeline_mode<synchronous>, transform_indices = @transform_2, window_bounds = array<i64: 9, 2, 2>}, {pipeline_mode = #tpu.pipeline_mode<synchronous>, transform_indices = @transform_3, window_bounds = array<i64: 2, 1>}, {pipeline_mode = #tpu.pipeline_mode<synchronous>, transform_indices = @transform_4, window_bounds = array<i64: 9, 2, 2>}, {pipeline_mode = #tpu.pipeline_mode<synchronous>, transform_indices = @transform_5, window_bounds = array<i64: 2, 1>}, {pipeline_mode = #tpu.pipeline_mode<synchronous>, transform_indices = @transform_6, window_bounds = array<i64: 1, 2>}, {pipeline_mode = #tpu.pipeline_mode<synchronous>, transform_indices = @transform_7, window_bounds = array<i64: 1, 1>}, {pipeline_mode = #tpu.pipeline_mode<synchronous>, transform_indices = @transform_8, window_bounds = array<i64: 9, 16, 4>}, {pipeline_mode = #tpu.pipeline_mode<synchronous>, transform_indices = @transform_9, window_bounds = array<i64: 16, 1>}, {pipeline_mode = #tpu.pipeline_mode<synchronous>, transform_indices = @transform_10, window_bounds = array<i64: 9, 16, 16>}, {pipeline_mode = #tpu.pipeline_mode<synchronous>, transform_indices = @transform_11, window_bounds = array<i64: 16, 1>}, {pipeline_mode = #tpu.pipeline_mode<synchronous>, transform_indices = @transform_12, window_bounds = array<i64: 3, 16>}, {pipeline_mode = #tpu.pipeline_mode<synchronous>, transform_indices = @transform_13, window_bounds = array<i64: 3, 1>}, {transform_indices = @transform_14, window_bounds = array<i64: 1, 2, 256>}, {transform_indices = @transform_15, window_bounds = array<i64: 1, 2, 256>}, {transform_indices = @transform_16, window_bounds = array<i64: 1, 1, 256>}, {transform_indices = @transform_17, window_bounds = array<i64: 1, 16, 256>}, {transform_indices = @transform_18, window_bounds = array<i64: 1, 3, 256>}]} {
    %cst = arith.constant 0.000000e+00 : f32
    %0 = vector.broadcast %cst : f32 to vector<16x512xf32>
    %c0 = arith.constant 0 : index
    %c0_0 = arith.constant 0 : index
    %1 = vector.load %arg20[%c0, %c0_0] : memref<16x512xf32, #tpu.memory_space<vmem>>, vector<16x512xf32>
    tpu.vector_store %arg20[%c0, %c0_0], %0 {strides = array<i32>} : memref<16x512xf32, #tpu.memory_space<vmem>>, vector<16x512xf32>,
    %2 = tpu.iota {dimensions = array<i32: 1>} : vector<1x256xi32>
    %c16_i32 = arith.constant 16 : i32
    %c0_i32 = arith.constant 0 : i32
    %3 = arith.cmpi eq, %c16_i32, %c0_i32 : i32
    %c1_i32 = arith.constant 1 : i32
    %4 = arith.select %3, %c1_i32, %c16_i32 : i32
    %5 = vector.broadcast %4 : i32 to vector<1x256xi32>
    %6 = arith.remsi %2, %5 : vector<1x256xi32>
    %c0_i32_1 = arith.constant 0 : i32
    %7 = vector.broadcast %c0_i32_1 : i32 to vector<1x256xi32>
    %8 = arith.cmpi ne, %6, %7 : vector<1x256xi32>
    %c0_i32_2 = arith.constant 0 : i32
    %9 = vector.broadcast %c0_i32_2 : i32 to vector<1x256xi32>
    %10 = arith.cmpi slt, %6, %9 : vector<1x256xi32>
    %c0_i32_3 = arith.constant 0 : i32
    %11 = arith.cmpi slt, %4, %c0_i32_3 : i32
    %12 = vector.broadcast %11 : i1 to vector<1x256xi1>
    %13 = vector.broadcast %12 : vector<1x256xi1> to vector<1x256xi1>
    %14 = arith.xori %10, %13 : vector<1x256xi1>
    %15 = arith.andi %14, %8 : vector<1x256xi1>
    %16 = vector.broadcast %4 : i32 to vector<1x256xi32>
    %17 = arith.addi %6, %16 : vector<1x256xi32>
    %18 = arith.select %15, %17, %6 : vector<1x256xi1>, vector<1x256xi32>
    %c1_i32_4 = arith.constant 1 : i32
    %19 = vector.broadcast %c1_i32_4 : i32 to vector<1x256xi32>
    %20 = arith.cmpi sge, %18, %19 : vector<1x256xi32>
    %c15_i32 = arith.constant 15 : i32
    %21 = vector.broadcast %c15_i32 : i32 to vector<1x256xi32>
    %22 = arith.cmpi slt, %18, %21 : vector<1x256xi32>
    %c0_5 = arith.constant 0 : index
    %c0_6 = arith.constant 0 : index
    %c0_7 = arith.constant 0 : index
    %23 = vector.load %arg2[%c0_5, %c0_6, %c0_7] : memref<1x2x256xf32, #tpu.memory_space<vmem>>, vector<1x2x256xf32>
    %24 = vector.shape_cast %23 : vector<1x2x256xf32> to vector<2x256xf32>
    %c0_8 = arith.constant 0 : index
    %c128 = arith.constant 128 : index
    %25 = vector.load %arg20[%c0_8, %c128] : memref<16x512xf32, #tpu.memory_space<vmem>>, vector<2x256xf32>
    tpu.vector_store %arg20[%c0_8, %c128], %24 {strides = array<i32>} : memref<16x512xf32, #tpu.memory_space<vmem>>, vector<2x256xf32>,
    %cst_9 = arith.constant 0.000000e+00 : f32
    %26 = vector.broadcast %cst_9 : f32 to vector<2x256xf32>
    %c0_10 = arith.constant 0 : index
    %c0_11 = arith.constant 0 : index
    %c0_12 = arith.constant 0 : index
    %27 = vector.load %arg3[%c0_10, %c0_11, %c0_12] : memref<9x2x2xf32, #tpu.memory_space<vmem>>, vector<1x2x2xf32>
    %28 = vector.shape_cast %27 : vector<1x2x2xf32> to vector<2x2xf32>
    %c0_13 = arith.constant 0 : index
    %c111 = arith.constant 111 : index
    %29 = vector.load %arg20[%c0_13, %c111] : memref<16x512xf32, #tpu.memory_space<vmem>>, vector<2x256xf32>
    %cst_14 = arith.constant 0.000000e+00 : f32
    %30 = vector.shape_cast %20 : vector<1x256xi1> to vector<1x256xi1>
    %31 = vector.broadcast %30 : vector<1x256xi1> to vector<2x256xi1>
    %32 = vector.broadcast %cst_14 : f32 to vector<2x256xf32>
    %33 = arith.select %31, %29, %32 : vector<2x256xi1>, vector<2x256xf32>
    %cst_15 = arith.constant dense<0.000000e+00> : vector<2x256xf32>
    %34 = tpu.matmul %28, %33, %cst_15 {dimension_numbers = #tpu.dot_dimension_numbers<[1], [0], [0], [1], [0, 0, 1, 1], [], []>} : vector<2x2xf32>, vector<2x256xf32>, vector<2x256xf32> -> vector<2x256xf32>
    %35 = arith.addf %26, %34 : vector<2x256xf32>
    %c1 = arith.constant 1 : index
    %c0_16 = arith.constant 0 : index
    %c0_17 = arith.constant 0 : index
    %36 = vector.load %arg3[%c1, %c0_16, %c0_17] : memref<9x2x2xf32, #tpu.memory_space<vmem>>, vector<1x2x2xf32>
    %37 = vector.shape_cast %36 : vector<1x2x2xf32> to vector<2x2xf32>
    %c0_18 = arith.constant 0 : index
    %c112 = arith.constant 112 : index
    %38 = vector.load %arg20[%c0_18, %c112] : memref<16x512xf32, #tpu.memory_space<vmem>>, vector<2x256xf32>
    %cst_19 = arith.constant dense<0.000000e+00> : vector<2x256xf32>
    %39 = tpu.matmul %37, %38, %cst_19 {dimension_numbers = #tpu.dot_dimension_numbers<[1], [0], [0], [1], [0, 0, 1, 1], [], []>} : vector<2x2xf32>, vector<2x256xf32>, vector<2x256xf32> -> vector<2x256xf32>
    %40 = arith.addf %35, %39 : vector<2x256xf32>
    %c2 = arith.constant 2 : index
    %c0_20 = arith.constant 0 : index
    %c0_21 = arith.constant 0 : index
    %41 = vector.load %arg3[%c2, %c0_20, %c0_21] : memref<9x2x2xf32, #tpu.memory_space<vmem>>, vector<1x2x2xf32>
    %42 = vector.shape_cast %41 : vector<1x2x2xf32> to vector<2x2xf32>
    %c0_22 = arith.constant 0 : index
    %c113 = arith.constant 113 : index
    %43 = vector.load %arg20[%c0_22, %c113] : memref<16x512xf32, #tpu.memory_space<vmem>>, vector<2x256xf32>
    %cst_23 = arith.constant 0.000000e+00 : f32
    %44 = vector.shape_cast %22 : vector<1x256xi1> to vector<1x256xi1>
    %45 = vector.broadcast %44 : vector<1x256xi1> to vector<2x256xi1>
    %46 = vector.broadcast %cst_23 : f32 to vector<2x256xf32>
    %47 = arith.select %45, %43, %46 : vector<2x256xi1>, vector<2x256xf32>
    %cst_24 = arith.constant dense<0.000000e+00> : vector<2x256xf32>
    %48 = tpu.matmul %42, %47, %cst_24 {dimension_numbers = #tpu.dot_dimension_numbers<[1], [0], [0], [1], [0, 0, 1, 1], [], []>} : vector<2x2xf32>, vector<2x256xf32>, vector<2x256xf32> -> vector<2x256xf32>
    %49 = arith.addf %40, %48 : vector<2x256xf32>
    %c3 = arith.constant 3 : index
    %c0_25 = arith.constant 0 : index
    %c0_26 = arith.constant 0 : index
    %50 = vector.load %arg3[%c3, %c0_25, %c0_26] : memref<9x2x2xf32, #tpu.memory_space<vmem>>, vector<1x2x2xf32>
    %51 = vector.shape_cast %50 : vector<1x2x2xf32> to vector<2x2xf32>
    %c0_27 = arith.constant 0 : index
    %c127 = arith.constant 127 : index
    %52 = vector.load %arg20[%c0_27, %c127] : memref<16x512xf32, #tpu.memory_space<vmem>>, vector<2x256xf32>
    %cst_28 = arith.constant 0.000000e+00 : f32
    %53 = vector.shape_cast %20 : vector<1x256xi1> to vector<1x256xi1>
    %54 = vector.broadcast %53 : vector<1x256xi1> to vector<2x256xi1>
    %55 = vector.broadcast %cst_28 : f32 to vector<2x256xf32>
    %56 = arith.select %54, %52, %55 : vector<2x256xi1>, vector<2x256xf32>
    %cst_29 = arith.constant dense<0.000000e+00> : vector<2x256xf32>
    %57 = tpu.matmul %51, %56, %cst_29 {dimension_numbers = #tpu.dot_dimension_numbers<[1], [0], [0], [1], [0, 0, 1, 1], [], []>} : vector<2x2xf32>, vector<2x256xf32>, vector<2x256xf32> -> vector<2x256xf32>
    %58 = arith.addf %49, %57 : vector<2x256xf32>
    %c4 = arith.constant 4 : index
    %c0_30 = arith.constant 0 : index
    %c0_31 = arith.constant 0 : index
    %59 = vector.load %arg3[%c4, %c0_30, %c0_31] : memref<9x2x2xf32, #tpu.memory_space<vmem>>, vector<1x2x2xf32>
    %60 = vector.shape_cast %59 : vector<1x2x2xf32> to vector<2x2xf32>
    %c0_32 = arith.constant 0 : index
    %c128_33 = arith.constant 128 : index
    %61 = vector.load %arg20[%c0_32, %c128_33] : memref<16x512xf32, #tpu.memory_space<vmem>>, vector<2x256xf32>
    %cst_34 = arith.constant dense<0.000000e+00> : vector<2x256xf32>
    %62 = tpu.matmul %60, %61, %cst_34 {dimension_numbers = #tpu.dot_dimension_numbers<[1], [0], [0], [1], [0, 0, 1, 1], [], []>} : vector<2x2xf32>, vector<2x256xf32>, vector<2x256xf32> -> vector<2x256xf32>
    %63 = arith.addf %58, %62 : vector<2x256xf32>
    %c5 = arith.constant 5 : index
    %c0_35 = arith.constant 0 : index
    %c0_36 = arith.constant 0 : index
    %64 = vector.load %arg3[%c5, %c0_35, %c0_36] : memref<9x2x2xf32, #tpu.memory_space<vmem>>, vector<1x2x2xf32>
    %65 = vector.shape_cast %64 : vector<1x2x2xf32> to vector<2x2xf32>
    %c0_37 = arith.constant 0 : index
    %c129 = arith.constant 129 : index
    %66 = vector.load %arg20[%c0_37, %c129] : memref<16x512xf32, #tpu.memory_space<vmem>>, vector<2x256xf32>
    %cst_38 = arith.constant 0.000000e+00 : f32
    %67 = vector.shape_cast %22 : vector<1x256xi1> to vector<1x256xi1>
    %68 = vector.broadcast %67 : vector<1x256xi1> to vector<2x256xi1>
    %69 = vector.broadcast %cst_38 : f32 to vector<2x256xf32>
    %70 = arith.select %68, %66, %69 : vector<2x256xi1>, vector<2x256xf32>
    %cst_39 = arith.constant dense<0.000000e+00> : vector<2x256xf32>
    %71 = tpu.matmul %65, %70, %cst_39 {dimension_numbers = #tpu.dot_dimension_numbers<[1], [0], [0], [1], [0, 0, 1, 1], [], []>} : vector<2x2xf32>, vector<2x256xf32>, vector<2x256xf32> -> vector<2x256xf32>
    %72 = arith.addf %63, %71 : vector<2x256xf32>
    %c6 = arith.constant 6 : index
    %c0_40 = arith.constant 0 : index
    %c0_41 = arith.constant 0 : index
    %73 = vector.load %arg3[%c6, %c0_40, %c0_41] : memref<9x2x2xf32, #tpu.memory_space<vmem>>, vector<1x2x2xf32>
    %74 = vector.shape_cast %73 : vector<1x2x2xf32> to vector<2x2xf32>
    %c0_42 = arith.constant 0 : index
    %c143 = arith.constant 143 : index
    %75 = vector.load %arg20[%c0_42, %c143] : memref<16x512xf32, #tpu.memory_space<vmem>>, vector<2x256xf32>
    %cst_43 = arith.constant 0.000000e+00 : f32
    %76 = vector.shape_cast %20 : vector<1x256xi1> to vector<1x256xi1>
    %77 = vector.broadcast %76 : vector<1x256xi1> to vector<2x256xi1>
    %78 = vector.broadcast %cst_43 : f32 to vector<2x256xf32>
    %79 = arith.select %77, %75, %78 : vector<2x256xi1>, vector<2x256xf32>
    %cst_44 = arith.constant dense<0.000000e+00> : vector<2x256xf32>
    %80 = tpu.matmul %74, %79, %cst_44 {dimension_numbers = #tpu.dot_dimension_numbers<[1], [0], [0], [1], [0, 0, 1, 1], [], []>} : vector<2x2xf32>, vector<2x256xf32>, vector<2x256xf32> -> vector<2x256xf32>
    %81 = arith.addf %72, %80 : vector<2x256xf32>
    %c7 = arith.constant 7 : index
    %c0_45 = arith.constant 0 : index
    %c0_46 = arith.constant 0 : index
    %82 = vector.load %arg3[%c7, %c0_45, %c0_46] : memref<9x2x2xf32, #tpu.memory_space<vmem>>, vector<1x2x2xf32>
    %83 = vector.shape_cast %82 : vector<1x2x2xf32> to vector<2x2xf32>
    %c0_47 = arith.constant 0 : index
    %c144 = arith.constant 144 : index
    %84 = vector.load %arg20[%c0_47, %c144] : memref<16x512xf32, #tpu.memory_space<vmem>>, vector<2x256xf32>
    %cst_48 = arith.constant dense<0.000000e+00> : vector<2x256xf32>
    %85 = tpu.matmul %83, %84, %cst_48 {dimension_numbers = #tpu.dot_dimension_numbers<[1], [0], [0], [1], [0, 0, 1, 1], [], []>} : vector<2x2xf32>, vector<2x256xf32>, vector<2x256xf32> -> vector<2x256xf32>
    %86 = arith.addf %81, %85 : vector<2x256xf32>
    %c8 = arith.constant 8 : index
    %c0_49 = arith.constant 0 : index
    %c0_50 = arith.constant 0 : index
    %87 = vector.load %arg3[%c8, %c0_49, %c0_50] : memref<9x2x2xf32, #tpu.memory_space<vmem>>, vector<1x2x2xf32>
    %88 = vector.shape_cast %87 : vector<1x2x2xf32> to vector<2x2xf32>
    %c0_51 = arith.constant 0 : index
    %c145 = arith.constant 145 : index
    %89 = vector.load %arg20[%c0_51, %c145] : memref<16x512xf32, #tpu.memory_space<vmem>>, vector<2x256xf32>
    %cst_52 = arith.constant 0.000000e+00 : f32
    %90 = vector.shape_cast %22 : vector<1x256xi1> to vector<1x256xi1>
    %91 = vector.broadcast %90 : vector<1x256xi1> to vector<2x256xi1>
    %92 = vector.broadcast %cst_52 : f32 to vector<2x256xf32>
    %93 = arith.select %91, %89, %92 : vector<2x256xi1>, vector<2x256xf32>
    %cst_53 = arith.constant dense<0.000000e+00> : vector<2x256xf32>
    %94 = tpu.matmul %88, %93, %cst_53 {dimension_numbers = #tpu.dot_dimension_numbers<[1], [0], [0], [1], [0, 0, 1, 1], [], []>} : vector<2x2xf32>, vector<2x256xf32>, vector<2x256xf32> -> vector<2x256xf32>
    %95 = arith.addf %86, %94 : vector<2x256xf32>
    %c0_54 = arith.constant 0 : index
    %c0_55 = arith.constant 0 : index
    %96 = vector.load %arg4[%c0_54, %c0_55] : memref<2x1xf32, #tpu.memory_space<vmem>>, vector<2x1xf32>
    %97 = vector.broadcast %96 : vector<2x1xf32> to vector<2x256xf32>
    %98 = arith.addf %95, %97 : vector<2x256xf32>
    %cst_56 = arith.constant 0.000000e+00 : f32
    %99 = vector.broadcast %cst_56 : f32 to vector<2x256xf32>
    %100 = arith.maximumf %98, %99 : vector<2x256xf32>
    %c0_57 = arith.constant 0 : index
    %c128_58 = arith.constant 128 : index
    %101 = vector.load %arg20[%c0_57, %c128_58] : memref<16x512xf32, #tpu.memory_space<vmem>>, vector<2x256xf32>
    tpu.vector_store %arg20[%c0_57, %c128_58], %100 {strides = array<i32>} : memref<16x512xf32, #tpu.memory_space<vmem>>, vector<2x256xf32>,
    %cst_59 = arith.constant 0.000000e+00 : f32
    %102 = vector.broadcast %cst_59 : f32 to vector<2x256xf32>
    %c0_60 = arith.constant 0 : index
    %c0_61 = arith.constant 0 : index
    %c0_62 = arith.constant 0 : index
    %103 = vector.load %arg5[%c0_60, %c0_61, %c0_62] : memref<9x2x2xf32, #tpu.memory_space<vmem>>, vector<1x2x2xf32>
    %104 = vector.shape_cast %103 : vector<1x2x2xf32> to vector<2x2xf32>
    %c0_63 = arith.constant 0 : index
    %c111_64 = arith.constant 111 : index
    %105 = vector.load %arg20[%c0_63, %c111_64] : memref<16x512xf32, #tpu.memory_space<vmem>>, vector<2x256xf32>
    %cst_65 = arith.constant 0.000000e+00 : f32
    %106 = vector.shape_cast %20 : vector<1x256xi1> to vector<1x256xi1>
    %107 = vector.broadcast %106 : vector<1x256xi1> to vector<2x256xi1>
    %108 = vector.broadcast %cst_65 : f32 to vector<2x256xf32>
    %109 = arith.select %107, %105, %108 : vector<2x256xi1>, vector<2x256xf32>
    %cst_66 = arith.constant dense<0.000000e+00> : vector<2x256xf32>
    %110 = tpu.matmul %104, %109, %cst_66 {dimension_numbers = #tpu.dot_dimension_numbers<[1], [0], [0], [1], [0, 0, 1, 1], [], []>} : vector<2x2xf32>, vector<2x256xf32>, vector<2x256xf32> -> vector<2x256xf32>
    %111 = arith.addf %102, %110 : vector<2x256xf32>
    %c1_67 = arith.constant 1 : index
    %c0_68 = arith.constant 0 : index
    %c0_69 = arith.constant 0 : index
    %112 = vector.load %arg5[%c1_67, %c0_68, %c0_69] : memref<9x2x2xf32, #tpu.memory_space<vmem>>, vector<1x2x2xf32>
    %113 = vector.shape_cast %112 : vector<1x2x2xf32> to vector<2x2xf32>
    %c0_70 = arith.constant 0 : index
    %c112_71 = arith.constant 112 : index
    %114 = vector.load %arg20[%c0_70, %c112_71] : memref<16x512xf32, #tpu.memory_space<vmem>>, vector<2x256xf32>
    %cst_72 = arith.constant dense<0.000000e+00> : vector<2x256xf32>
    %115 = tpu.matmul %113, %114, %cst_72 {dimension_numbers = #tpu.dot_dimension_numbers<[1], [0], [0], [1], [0, 0, 1, 1], [], []>} : vector<2x2xf32>, vector<2x256xf32>, vector<2x256xf32> -> vector<2x256xf32>
    %116 = arith.addf %111, %115 : vector<2x256xf32>
    %c2_73 = arith.constant 2 : index
    %c0_74 = arith.constant 0 : index
    %c0_75 = arith.constant 0 : index
    %117 = vector.load %arg5[%c2_73, %c0_74, %c0_75] : memref<9x2x2xf32, #tpu.memory_space<vmem>>, vector<1x2x2xf32>
    %118 = vector.shape_cast %117 : vector<1x2x2xf32> to vector<2x2xf32>
    %c0_76 = arith.constant 0 : index
    %c113_77 = arith.constant 113 : index
    %119 = vector.load %arg20[%c0_76, %c113_77] : memref<16x512xf32, #tpu.memory_space<vmem>>, vector<2x256xf32>
    %cst_78 = arith.constant 0.000000e+00 : f32
    %120 = vector.shape_cast %22 : vector<1x256xi1> to vector<1x256xi1>
    %121 = vector.broadcast %120 : vector<1x256xi1> to vector<2x256xi1>
    %122 = vector.broadcast %cst_78 : f32 to vector<2x256xf32>
    %123 = arith.select %121, %119, %122 : vector<2x256xi1>, vector<2x256xf32>
    %cst_79 = arith.constant dense<0.000000e+00> : vector<2x256xf32>
    %124 = tpu.matmul %118, %123, %cst_79 {dimension_numbers = #tpu.dot_dimension_numbers<[1], [0], [0], [1], [0, 0, 1, 1], [], []>} : vector<2x2xf32>, vector<2x256xf32>, vector<2x256xf32> -> vector<2x256xf32>
    %125 = arith.addf %116, %124 : vector<2x256xf32>
    %c3_80 = arith.constant 3 : index
    %c0_81 = arith.constant 0 : index
    %c0_82 = arith.constant 0 : index
    %126 = vector.load %arg5[%c3_80, %c0_81, %c0_82] : memref<9x2x2xf32, #tpu.memory_space<vmem>>, vector<1x2x2xf32>
    %127 = vector.shape_cast %126 : vector<1x2x2xf32> to vector<2x2xf32>
    %c0_83 = arith.constant 0 : index
    %c127_84 = arith.constant 127 : index
    %128 = vector.load %arg20[%c0_83, %c127_84] : memref<16x512xf32, #tpu.memory_space<vmem>>, vector<2x256xf32>
    %cst_85 = arith.constant 0.000000e+00 : f32
    %129 = vector.shape_cast %20 : vector<1x256xi1> to vector<1x256xi1>
    %130 = vector.broadcast %129 : vector<1x256xi1> to vector<2x256xi1>
    %131 = vector.broadcast %cst_85 : f32 to vector<2x256xf32>
    %132 = arith.select %130, %128, %131 : vector<2x256xi1>, vector<2x256xf32>
    %cst_86 = arith.constant dense<0.000000e+00> : vector<2x256xf32>
    %133 = tpu.matmul %127, %132, %cst_86 {dimension_numbers = #tpu.dot_dimension_numbers<[1], [0], [0], [1], [0, 0, 1, 1], [], []>} : vector<2x2xf32>, vector<2x256xf32>, vector<2x256xf32> -> vector<2x256xf32>
    %134 = arith.addf %125, %133 : vector<2x256xf32>
    %c4_87 = arith.constant 4 : index
    %c0_88 = arith.constant 0 : index
    %c0_89 = arith.constant 0 : index
    %135 = vector.load %arg5[%c4_87, %c0_88, %c0_89] : memref<9x2x2xf32, #tpu.memory_space<vmem>>, vector<1x2x2xf32>
    %136 = vector.shape_cast %135 : vector<1x2x2xf32> to vector<2x2xf32>
    %c0_90 = arith.constant 0 : index
    %c128_91 = arith.constant 128 : index
    %137 = vector.load %arg20[%c0_90, %c128_91] : memref<16x512xf32, #tpu.memory_space<vmem>>, vector<2x256xf32>
    %cst_92 = arith.constant dense<0.000000e+00> : vector<2x256xf32>
    %138 = tpu.matmul %136, %137, %cst_92 {dimension_numbers = #tpu.dot_dimension_numbers<[1], [0], [0], [1], [0, 0, 1, 1], [], []>} : vector<2x2xf32>, vector<2x256xf32>, vector<2x256xf32> -> vector<2x256xf32>
    %139 = arith.addf %134, %138 : vector<2x256xf32>
    %c5_93 = arith.constant 5 : index
    %c0_94 = arith.constant 0 : index
    %c0_95 = arith.constant 0 : index
    %140 = vector.load %arg5[%c5_93, %c0_94, %c0_95] : memref<9x2x2xf32, #tpu.memory_space<vmem>>, vector<1x2x2xf32>
    %141 = vector.shape_cast %140 : vector<1x2x2xf32> to vector<2x2xf32>
    %c0_96 = arith.constant 0 : index
    %c129_97 = arith.constant 129 : index
    %142 = vector.load %arg20[%c0_96, %c129_97] : memref<16x512xf32, #tpu.memory_space<vmem>>, vector<2x256xf32>
    %cst_98 = arith.constant 0.000000e+00 : f32
    %143 = vector.shape_cast %22 : vector<1x256xi1> to vector<1x256xi1>
    %144 = vector.broadcast %143 : vector<1x256xi1> to vector<2x256xi1>
    %145 = vector.broadcast %cst_98 : f32 to vector<2x256xf32>
    %146 = arith.select %144, %142, %145 : vector<2x256xi1>, vector<2x256xf32>
    %cst_99 = arith.constant dense<0.000000e+00> : vector<2x256xf32>
    %147 = tpu.matmul %141, %146, %cst_99 {dimension_numbers = #tpu.dot_dimension_numbers<[1], [0], [0], [1], [0, 0, 1, 1], [], []>} : vector<2x2xf32>, vector<2x256xf32>, vector<2x256xf32> -> vector<2x256xf32>
    %148 = arith.addf %139, %147 : vector<2x256xf32>
    %c6_100 = arith.constant 6 : index
    %c0_101 = arith.constant 0 : index
    %c0_102 = arith.constant 0 : index
    %149 = vector.load %arg5[%c6_100, %c0_101, %c0_102] : memref<9x2x2xf32, #tpu.memory_space<vmem>>, vector<1x2x2xf32>
    %150 = vector.shape_cast %149 : vector<1x2x2xf32> to vector<2x2xf32>
    %c0_103 = arith.constant 0 : index
    %c143_104 = arith.constant 143 : index
    %151 = vector.load %arg20[%c0_103, %c143_104] : memref<16x512xf32, #tpu.memory_space<vmem>>, vector<2x256xf32>
    %cst_105 = arith.constant 0.000000e+00 : f32
    %152 = vector.shape_cast %20 : vector<1x256xi1> to vector<1x256xi1>
    %153 = vector.broadcast %152 : vector<1x256xi1> to vector<2x256xi1>
    %154 = vector.broadcast %cst_105 : f32 to vector<2x256xf32>
    %155 = arith.select %153, %151, %154 : vector<2x256xi1>, vector<2x256xf32>
    %cst_106 = arith.constant dense<0.000000e+00> : vector<2x256xf32>
    %156 = tpu.matmul %150, %155, %cst_106 {dimension_numbers = #tpu.dot_dimension_numbers<[1], [0], [0], [1], [0, 0, 1, 1], [], []>} : vector<2x2xf32>, vector<2x256xf32>, vector<2x256xf32> -> vector<2x256xf32>
    %157 = arith.addf %148, %156 : vector<2x256xf32>
    %c7_107 = arith.constant 7 : index
    %c0_108 = arith.constant 0 : index
    %c0_109 = arith.constant 0 : index
    %158 = vector.load %arg5[%c7_107, %c0_108, %c0_109] : memref<9x2x2xf32, #tpu.memory_space<vmem>>, vector<1x2x2xf32>
    %159 = vector.shape_cast %158 : vector<1x2x2xf32> to vector<2x2xf32>
    %c0_110 = arith.constant 0 : index
    %c144_111 = arith.constant 144 : index
    %160 = vector.load %arg20[%c0_110, %c144_111] : memref<16x512xf32, #tpu.memory_space<vmem>>, vector<2x256xf32>
    %cst_112 = arith.constant dense<0.000000e+00> : vector<2x256xf32>
    %161 = tpu.matmul %159, %160, %cst_112 {dimension_numbers = #tpu.dot_dimension_numbers<[1], [0], [0], [1], [0, 0, 1, 1], [], []>} : vector<2x2xf32>, vector<2x256xf32>, vector<2x256xf32> -> vector<2x256xf32>
    %162 = arith.addf %157, %161 : vector<2x256xf32>
    %c8_113 = arith.constant 8 : index
    %c0_114 = arith.constant 0 : index
    %c0_115 = arith.constant 0 : index
    %163 = vector.load %arg5[%c8_113, %c0_114, %c0_115] : memref<9x2x2xf32, #tpu.memory_space<vmem>>, vector<1x2x2xf32>
    %164 = vector.shape_cast %163 : vector<1x2x2xf32> to vector<2x2xf32>
    %c0_116 = arith.constant 0 : index
    %c145_117 = arith.constant 145 : index
    %165 = vector.load %arg20[%c0_116, %c145_117] : memref<16x512xf32, #tpu.memory_space<vmem>>, vector<2x256xf32>
    %cst_118 = arith.constant 0.000000e+00 : f32
    %166 = vector.shape_cast %22 : vector<1x256xi1> to vector<1x256xi1>
    %167 = vector.broadcast %166 : vector<1x256xi1> to vector<2x256xi1>
    %168 = vector.broadcast %cst_118 : f32 to vector<2x256xf32>
    %169 = arith.select %167, %165, %168 : vector<2x256xi1>, vector<2x256xf32>
    %cst_119 = arith.constant dense<0.000000e+00> : vector<2x256xf32>
    %170 = tpu.matmul %164, %169, %cst_119 {dimension_numbers = #tpu.dot_dimension_numbers<[1], [0], [0], [1], [0, 0, 1, 1], [], []>} : vector<2x2xf32>, vector<2x256xf32>, vector<2x256xf32> -> vector<2x256xf32>
    %171 = arith.addf %162, %170 : vector<2x256xf32>
    %c0_120 = arith.constant 0 : index
    %c0_121 = arith.constant 0 : index
    %172 = vector.load %arg6[%c0_120, %c0_121] : memref<2x1xf32, #tpu.memory_space<vmem>>, vector<2x1xf32>
    %173 = vector.broadcast %172 : vector<2x1xf32> to vector<2x256xf32>
    %174 = arith.addf %171, %173 : vector<2x256xf32>
    %cst_122 = arith.constant 0.000000e+00 : f32
    %175 = vector.broadcast %cst_122 : f32 to vector<2x256xf32>
    %176 = arith.maximumf %174, %175 : vector<2x256xf32>
    %c0_123 = arith.constant 0 : index
    %c0_124 = arith.constant 0 : index
    %177 = vector.load %arg7[%c0_123, %c0_124] : memref<1x2xf32, #tpu.memory_space<vmem>>, vector<1x2xf32>
    %cst_125 = arith.constant dense<0.000000e+00> : vector<1x256xf32>
    %178 = tpu.matmul %177, %176, %cst_125 {dimension_numbers = #tpu.dot_dimension_numbers<[1], [0], [0], [1], [0, 0, 1, 1], [], []>} : vector<1x2xf32>, vector<2x256xf32>, vector<1x256xf32> -> vector<1x256xf32>
    %c0_126 = arith.constant 0 : index
    %c0_127 = arith.constant 0 : index
    %179 = vector.load %arg8[%c0_126, %c0_127] : memref<1x1xf32, #tpu.memory_space<vmem>>, vector<1x1xf32>
    %180 = vector.broadcast %179 : vector<1x1xf32> to vector<1x256xf32>
    %181 = arith.addf %178, %180 : vector<1x256xf32>
    %cst_128 = arith.constant 0.000000e+00 : f32
    %182 = vector.broadcast %cst_128 : f32 to vector<1x256xf32>
    %183 = arith.subf %182, %181 : vector<1x256xf32>
    %184 = math.exp %183 : vector<1x256xf32>
    %cst_129 = arith.constant 1.000000e+00 : f32
    %185 = vector.broadcast %cst_129 : f32 to vector<1x256xf32>
    %186 = arith.addf %185, %184 : vector<1x256xf32>
    %cst_130 = arith.constant 1.000000e+00 : f32
    %187 = vector.broadcast %cst_130 : f32 to vector<1x256xf32>
    %188 = arith.divf %187, %186 : vector<1x256xf32>
    %c0_131 = arith.constant 0 : index
    %c0_132 = arith.constant 0 : index
    %c0_133 = arith.constant 0 : index
    %189 = vector.load %arg1[%c0_131, %c0_132, %c0_133] : memref<1x3x256xf32, #tpu.memory_space<vmem>>, vector<1x3x256xf32>
    %190 = vector.shape_cast %189 : vector<1x3x256xf32> to vector<3x256xf32>
    %c0_134 = arith.constant 0 : index
    %c128_135 = arith.constant 128 : index
    %191 = vector.load %arg20[%c0_134, %c128_135] : memref<16x512xf32, #tpu.memory_space<vmem>>, vector<3x256xf32>
    tpu.vector_store %arg20[%c0_134, %c128_135], %190 {strides = array<i32>} : memref<16x512xf32, #tpu.memory_space<vmem>>, vector<3x256xf32>,
    %c3_136 = arith.constant 3 : index
    %c128_137 = arith.constant 128 : index
    %192 = vector.load %arg20[%c3_136, %c128_137] : memref<16x512xf32, #tpu.memory_space<vmem>>, vector<1x256xf32>
    tpu.vector_store %arg20[%c3_136, %c128_137], %188 {strides = array<i32>} : memref<16x512xf32, #tpu.memory_space<vmem>>, vector<1x256xf32>,
    %cst_138 = arith.constant 0.000000e+00 : f32
    %193 = vector.broadcast %cst_138 : f32 to vector<16x256xf32>
    %c0_139 = arith.constant 0 : index
    %c0_140 = arith.constant 0 : index
    %c0_141 = arith.constant 0 : index
    %194 = vector.load %arg9[%c0_139, %c0_140, %c0_141] : memref<9x16x4xf32, #tpu.memory_space<vmem>>, vector<1x16x4xf32>
    %195 = vector.shape_cast %194 : vector<1x16x4xf32> to vector<16x4xf32>
    %c0_142 = arith.constant 0 : index
    %c111_143 = arith.constant 111 : index
    %196 = vector.load %arg20[%c0_142, %c111_143] : memref<16x512xf32, #tpu.memory_space<vmem>>, vector<4x256xf32>
    %cst_144 = arith.constant 0.000000e+00 : f32
    %197 = vector.shape_cast %20 : vector<1x256xi1> to vector<1x256xi1>
    %198 = vector.broadcast %197 : vector<1x256xi1> to vector<4x256xi1>
    %199 = vector.broadcast %cst_144 : f32 to vector<4x256xf32>
    %200 = arith.select %198, %196, %199 : vector<4x256xi1>, vector<4x256xf32>
    %cst_145 = arith.constant dense<0.000000e+00> : vector<16x256xf32>
    %201 = tpu.matmul %195, %200, %cst_145 {dimension_numbers = #tpu.dot_dimension_numbers<[1], [0], [0], [1], [0, 0, 1, 1], [], []>} : vector<16x4xf32>, vector<4x256xf32>, vector<16x256xf32> -> vector<16x256xf32>
    %202 = arith.addf %193, %201 : vector<16x256xf32>
    %c1_146 = arith.constant 1 : index
    %c0_147 = arith.constant 0 : index
    %c0_148 = arith.constant 0 : index
    %203 = vector.load %arg9[%c1_146, %c0_147, %c0_148] : memref<9x16x4xf32, #tpu.memory_space<vmem>>, vector<1x16x4xf32>
    %204 = vector.shape_cast %203 : vector<1x16x4xf32> to vector<16x4xf32>
    %c0_149 = arith.constant 0 : index
    %c112_150 = arith.constant 112 : index
    %205 = vector.load %arg20[%c0_149, %c112_150] : memref<16x512xf32, #tpu.memory_space<vmem>>, vector<4x256xf32>
    %cst_151 = arith.constant dense<0.000000e+00> : vector<16x256xf32>
    %206 = tpu.matmul %204, %205, %cst_151 {dimension_numbers = #tpu.dot_dimension_numbers<[1], [0], [0], [1], [0, 0, 1, 1], [], []>} : vector<16x4xf32>, vector<4x256xf32>, vector<16x256xf32> -> vector<16x256xf32>
    %207 = arith.addf %202, %206 : vector<16x256xf32>
    %c2_152 = arith.constant 2 : index
    %c0_153 = arith.constant 0 : index
    %c0_154 = arith.constant 0 : index
    %208 = vector.load %arg9[%c2_152, %c0_153, %c0_154] : memref<9x16x4xf32, #tpu.memory_space<vmem>>, vector<1x16x4xf32>
    %209 = vector.shape_cast %208 : vector<1x16x4xf32> to vector<16x4xf32>
    %c0_155 = arith.constant 0 : index
    %c113_156 = arith.constant 113 : index
    %210 = vector.load %arg20[%c0_155, %c113_156] : memref<16x512xf32, #tpu.memory_space<vmem>>, vector<4x256xf32>
    %cst_157 = arith.constant 0.000000e+00 : f32
    %211 = vector.shape_cast %22 : vector<1x256xi1> to vector<1x256xi1>
    %212 = vector.broadcast %211 : vector<1x256xi1> to vector<4x256xi1>
    %213 = vector.broadcast %cst_157 : f32 to vector<4x256xf32>
    %214 = arith.select %212, %210, %213 : vector<4x256xi1>, vector<4x256xf32>
    %cst_158 = arith.constant dense<0.000000e+00> : vector<16x256xf32>
    %215 = tpu.matmul %209, %214, %cst_158 {dimension_numbers = #tpu.dot_dimension_numbers<[1], [0], [0], [1], [0, 0, 1, 1], [], []>} : vector<16x4xf32>, vector<4x256xf32>, vector<16x256xf32> -> vector<16x256xf32>
    %216 = arith.addf %207, %215 : vector<16x256xf32>
    %c3_159 = arith.constant 3 : index
    %c0_160 = arith.constant 0 : index
    %c0_161 = arith.constant 0 : index
    %217 = vector.load %arg9[%c3_159, %c0_160, %c0_161] : memref<9x16x4xf32, #tpu.memory_space<vmem>>, vector<1x16x4xf32>
    %218 = vector.shape_cast %217 : vector<1x16x4xf32> to vector<16x4xf32>
    %c0_162 = arith.constant 0 : index
    %c127_163 = arith.constant 127 : index
    %219 = vector.load %arg20[%c0_162, %c127_163] : memref<16x512xf32, #tpu.memory_space<vmem>>, vector<4x256xf32>
    %cst_164 = arith.constant 0.000000e+00 : f32
    %220 = vector.shape_cast %20 : vector<1x256xi1> to vector<1x256xi1>
    %221 = vector.broadcast %220 : vector<1x256xi1> to vector<4x256xi1>
    %222 = vector.broadcast %cst_164 : f32 to vector<4x256xf32>
    %223 = arith.select %221, %219, %222 : vector<4x256xi1>, vector<4x256xf32>
    %cst_165 = arith.constant dense<0.000000e+00> : vector<16x256xf32>
    %224 = tpu.matmul %218, %223, %cst_165 {dimension_numbers = #tpu.dot_dimension_numbers<[1], [0], [0], [1], [0, 0, 1, 1], [], []>} : vector<16x4xf32>, vector<4x256xf32>, vector<16x256xf32> -> vector<16x256xf32>
    %225 = arith.addf %216, %224 : vector<16x256xf32>
    %c4_166 = arith.constant 4 : index
    %c0_167 = arith.constant 0 : index
    %c0_168 = arith.constant 0 : index
    %226 = vector.load %arg9[%c4_166, %c0_167, %c0_168] : memref<9x16x4xf32, #tpu.memory_space<vmem>>, vector<1x16x4xf32>
    %227 = vector.shape_cast %226 : vector<1x16x4xf32> to vector<16x4xf32>
    %c0_169 = arith.constant 0 : index
    %c128_170 = arith.constant 128 : index
    %228 = vector.load %arg20[%c0_169, %c128_170] : memref<16x512xf32, #tpu.memory_space<vmem>>, vector<4x256xf32>
    %cst_171 = arith.constant dense<0.000000e+00> : vector<16x256xf32>
    %229 = tpu.matmul %227, %228, %cst_171 {dimension_numbers = #tpu.dot_dimension_numbers<[1], [0], [0], [1], [0, 0, 1, 1], [], []>} : vector<16x4xf32>, vector<4x256xf32>, vector<16x256xf32> -> vector<16x256xf32>
    %230 = arith.addf %225, %229 : vector<16x256xf32>
    %c5_172 = arith.constant 5 : index
    %c0_173 = arith.constant 0 : index
    %c0_174 = arith.constant 0 : index
    %231 = vector.load %arg9[%c5_172, %c0_173, %c0_174] : memref<9x16x4xf32, #tpu.memory_space<vmem>>, vector<1x16x4xf32>
    %232 = vector.shape_cast %231 : vector<1x16x4xf32> to vector<16x4xf32>
    %c0_175 = arith.constant 0 : index
    %c129_176 = arith.constant 129 : index
    %233 = vector.load %arg20[%c0_175, %c129_176] : memref<16x512xf32, #tpu.memory_space<vmem>>, vector<4x256xf32>
    %cst_177 = arith.constant 0.000000e+00 : f32
    %234 = vector.shape_cast %22 : vector<1x256xi1> to vector<1x256xi1>
    %235 = vector.broadcast %234 : vector<1x256xi1> to vector<4x256xi1>
    %236 = vector.broadcast %cst_177 : f32 to vector<4x256xf32>
    %237 = arith.select %235, %233, %236 : vector<4x256xi1>, vector<4x256xf32>
    %cst_178 = arith.constant dense<0.000000e+00> : vector<16x256xf32>
    %238 = tpu.matmul %232, %237, %cst_178 {dimension_numbers = #tpu.dot_dimension_numbers<[1], [0], [0], [1], [0, 0, 1, 1], [], []>} : vector<16x4xf32>, vector<4x256xf32>, vector<16x256xf32> -> vector<16x256xf32>
    %239 = arith.addf %230, %238 : vector<16x256xf32>
    %c6_179 = arith.constant 6 : index
    %c0_180 = arith.constant 0 : index
    %c0_181 = arith.constant 0 : index
    %240 = vector.load %arg9[%c6_179, %c0_180, %c0_181] : memref<9x16x4xf32, #tpu.memory_space<vmem>>, vector<1x16x4xf32>
    %241 = vector.shape_cast %240 : vector<1x16x4xf32> to vector<16x4xf32>
    %c0_182 = arith.constant 0 : index
    %c143_183 = arith.constant 143 : index
    %242 = vector.load %arg20[%c0_182, %c143_183] : memref<16x512xf32, #tpu.memory_space<vmem>>, vector<4x256xf32>
    %cst_184 = arith.constant 0.000000e+00 : f32
    %243 = vector.shape_cast %20 : vector<1x256xi1> to vector<1x256xi1>
    %244 = vector.broadcast %243 : vector<1x256xi1> to vector<4x256xi1>
    %245 = vector.broadcast %cst_184 : f32 to vector<4x256xf32>
    %246 = arith.select %244, %242, %245 : vector<4x256xi1>, vector<4x256xf32>
    %cst_185 = arith.constant dense<0.000000e+00> : vector<16x256xf32>
    %247 = tpu.matmul %241, %246, %cst_185 {dimension_numbers = #tpu.dot_dimension_numbers<[1], [0], [0], [1], [0, 0, 1, 1], [], []>} : vector<16x4xf32>, vector<4x256xf32>, vector<16x256xf32> -> vector<16x256xf32>
    %248 = arith.addf %239, %247 : vector<16x256xf32>
    %c7_186 = arith.constant 7 : index
    %c0_187 = arith.constant 0 : index
    %c0_188 = arith.constant 0 : index
    %249 = vector.load %arg9[%c7_186, %c0_187, %c0_188] : memref<9x16x4xf32, #tpu.memory_space<vmem>>, vector<1x16x4xf32>
    %250 = vector.shape_cast %249 : vector<1x16x4xf32> to vector<16x4xf32>
    %c0_189 = arith.constant 0 : index
    %c144_190 = arith.constant 144 : index
    %251 = vector.load %arg20[%c0_189, %c144_190] : memref<16x512xf32, #tpu.memory_space<vmem>>, vector<4x256xf32>
    %cst_191 = arith.constant dense<0.000000e+00> : vector<16x256xf32>
    %252 = tpu.matmul %250, %251, %cst_191 {dimension_numbers = #tpu.dot_dimension_numbers<[1], [0], [0], [1], [0, 0, 1, 1], [], []>} : vector<16x4xf32>, vector<4x256xf32>, vector<16x256xf32> -> vector<16x256xf32>
    %253 = arith.addf %248, %252 : vector<16x256xf32>
    %c8_192 = arith.constant 8 : index
    %c0_193 = arith.constant 0 : index
    %c0_194 = arith.constant 0 : index
    %254 = vector.load %arg9[%c8_192, %c0_193, %c0_194] : memref<9x16x4xf32, #tpu.memory_space<vmem>>, vector<1x16x4xf32>
    %255 = vector.shape_cast %254 : vector<1x16x4xf32> to vector<16x4xf32>
    %c0_195 = arith.constant 0 : index
    %c145_196 = arith.constant 145 : index
    %256 = vector.load %arg20[%c0_195, %c145_196] : memref<16x512xf32, #tpu.memory_space<vmem>>, vector<4x256xf32>
    %cst_197 = arith.constant 0.000000e+00 : f32
    %257 = vector.shape_cast %22 : vector<1x256xi1> to vector<1x256xi1>
    %258 = vector.broadcast %257 : vector<1x256xi1> to vector<4x256xi1>
    %259 = vector.broadcast %cst_197 : f32 to vector<4x256xf32>
    %260 = arith.select %258, %256, %259 : vector<4x256xi1>, vector<4x256xf32>
    %cst_198 = arith.constant dense<0.000000e+00> : vector<16x256xf32>
    %261 = tpu.matmul %255, %260, %cst_198 {dimension_numbers = #tpu.dot_dimension_numbers<[1], [0], [0], [1], [0, 0, 1, 1], [], []>} : vector<16x4xf32>, vector<4x256xf32>, vector<16x256xf32> -> vector<16x256xf32>
    %262 = arith.addf %253, %261 : vector<16x256xf32>
    %c0_199 = arith.constant 0 : index
    %c0_200 = arith.constant 0 : index
    %263 = vector.load %arg10[%c0_199, %c0_200] : memref<16x1xf32, #tpu.memory_space<vmem>>, vector<16x1xf32>
    %264 = vector.broadcast %263 : vector<16x1xf32> to vector<16x256xf32>
    %265 = arith.addf %262, %264 : vector<16x256xf32>
    %cst_201 = arith.constant 0.000000e+00 : f32
    %266 = vector.broadcast %cst_201 : f32 to vector<16x256xf32>
    %267 = arith.maximumf %265, %266 : vector<16x256xf32>
    %c0_202 = arith.constant 0 : index
    %c128_203 = arith.constant 128 : index
    %268 = vector.load %arg20[%c0_202, %c128_203] : memref<16x512xf32, #tpu.memory_space<vmem>>, vector<16x256xf32>
    tpu.vector_store %arg20[%c0_202, %c128_203], %267 {strides = array<i32>} : memref<16x512xf32, #tpu.memory_space<vmem>>, vector<16x256xf32>,
    %cst_204 = arith.constant 0.000000e+00 : f32
    %269 = vector.broadcast %cst_204 : f32 to vector<16x256xf32>
    %c0_205 = arith.constant 0 : index
    %c0_206 = arith.constant 0 : index
    %c0_207 = arith.constant 0 : index
    %270 = vector.load %arg11[%c0_205, %c0_206, %c0_207] : memref<9x16x16xf32, #tpu.memory_space<vmem>>, vector<1x16x16xf32>
    %271 = vector.shape_cast %270 : vector<1x16x16xf32> to vector<16x16xf32>
    %c0_208 = arith.constant 0 : index
    %c111_209 = arith.constant 111 : index
    %272 = vector.load %arg20[%c0_208, %c111_209] : memref<16x512xf32, #tpu.memory_space<vmem>>, vector<16x256xf32>
    %cst_210 = arith.constant 0.000000e+00 : f32
    %273 = vector.shape_cast %20 : vector<1x256xi1> to vector<1x256xi1>
    %274 = vector.broadcast %273 : vector<1x256xi1> to vector<16x256xi1>
    %275 = vector.broadcast %cst_210 : f32 to vector<16x256xf32>
    %276 = arith.select %274, %272, %275 : vector<16x256xi1>, vector<16x256xf32>
    %cst_211 = arith.constant dense<0.000000e+00> : vector<16x256xf32>
    %277 = tpu.matmul %271, %276, %cst_211 {dimension_numbers = #tpu.dot_dimension_numbers<[1], [0], [0], [1], [0, 0, 1, 1], [], []>} : vector<16x16xf32>, vector<16x256xf32>, vector<16x256xf32> -> vector<16x256xf32>
    %278 = arith.addf %269, %277 : vector<16x256xf32>
    %c1_212 = arith.constant 1 : index
    %c0_213 = arith.constant 0 : index
    %c0_214 = arith.constant 0 : index
    %279 = vector.load %arg11[%c1_212, %c0_213, %c0_214] : memref<9x16x16xf32, #tpu.memory_space<vmem>>, vector<1x16x16xf32>
    %280 = vector.shape_cast %279 : vector<1x16x16xf32> to vector<16x16xf32>
    %c0_215 = arith.constant 0 : index
    %c112_216 = arith.constant 112 : index
    %281 = vector.load %arg20[%c0_215, %c112_216] : memref<16x512xf32, #tpu.memory_space<vmem>>, vector<16x256xf32>
    %cst_217 = arith.constant dense<0.000000e+00> : vector<16x256xf32>
    %282 = tpu.matmul %280, %281, %cst_217 {dimension_numbers = #tpu.dot_dimension_numbers<[1], [0], [0], [1], [0, 0, 1, 1], [], []>} : vector<16x16xf32>, vector<16x256xf32>, vector<16x256xf32> -> vector<16x256xf32>
    %283 = arith.addf %278, %282 : vector<16x256xf32>
    %c2_218 = arith.constant 2 : index
    %c0_219 = arith.constant 0 : index
    %c0_220 = arith.constant 0 : index
    %284 = vector.load %arg11[%c2_218, %c0_219, %c0_220] : memref<9x16x16xf32, #tpu.memory_space<vmem>>, vector<1x16x16xf32>
    %285 = vector.shape_cast %284 : vector<1x16x16xf32> to vector<16x16xf32>
    %c0_221 = arith.constant 0 : index
    %c113_222 = arith.constant 113 : index
    %286 = vector.load %arg20[%c0_221, %c113_222] : memref<16x512xf32, #tpu.memory_space<vmem>>, vector<16x256xf32>
    %cst_223 = arith.constant 0.000000e+00 : f32
    %287 = vector.shape_cast %22 : vector<1x256xi1> to vector<1x256xi1>
    %288 = vector.broadcast %287 : vector<1x256xi1> to vector<16x256xi1>
    %289 = vector.broadcast %cst_223 : f32 to vector<16x256xf32>
    %290 = arith.select %288, %286, %289 : vector<16x256xi1>, vector<16x256xf32>
    %cst_224 = arith.constant dense<0.000000e+00> : vector<16x256xf32>
    %291 = tpu.matmul %285, %290, %cst_224 {dimension_numbers = #tpu.dot_dimension_numbers<[1], [0], [0], [1], [0, 0, 1, 1], [], []>} : vector<16x16xf32>, vector<16x256xf32>, vector<16x256xf32> -> vector<16x256xf32>
    %292 = arith.addf %283, %291 : vector<16x256xf32>
    %c3_225 = arith.constant 3 : index
    %c0_226 = arith.constant 0 : index
    %c0_227 = arith.constant 0 : index
    %293 = vector.load %arg11[%c3_225, %c0_226, %c0_227] : memref<9x16x16xf32, #tpu.memory_space<vmem>>, vector<1x16x16xf32>
    %294 = vector.shape_cast %293 : vector<1x16x16xf32> to vector<16x16xf32>
    %c0_228 = arith.constant 0 : index
    %c127_229 = arith.constant 127 : index
    %295 = vector.load %arg20[%c0_228, %c127_229] : memref<16x512xf32, #tpu.memory_space<vmem>>, vector<16x256xf32>
    %cst_230 = arith.constant 0.000000e+00 : f32
    %296 = vector.shape_cast %20 : vector<1x256xi1> to vector<1x256xi1>
    %297 = vector.broadcast %296 : vector<1x256xi1> to vector<16x256xi1>
    %298 = vector.broadcast %cst_230 : f32 to vector<16x256xf32>
    %299 = arith.select %297, %295, %298 : vector<16x256xi1>, vector<16x256xf32>
    %cst_231 = arith.constant dense<0.000000e+00> : vector<16x256xf32>
    %300 = tpu.matmul %294, %299, %cst_231 {dimension_numbers = #tpu.dot_dimension_numbers<[1], [0], [0], [1], [0, 0, 1, 1], [], []>} : vector<16x16xf32>, vector<16x256xf32>, vector<16x256xf32> -> vector<16x256xf32>
    %301 = arith.addf %292, %300 : vector<16x256xf32>
    %c4_232 = arith.constant 4 : index
    %c0_233 = arith.constant 0 : index
    %c0_234 = arith.constant 0 : index
    %302 = vector.load %arg11[%c4_232, %c0_233, %c0_234] : memref<9x16x16xf32, #tpu.memory_space<vmem>>, vector<1x16x16xf32>
    %303 = vector.shape_cast %302 : vector<1x16x16xf32> to vector<16x16xf32>
    %c0_235 = arith.constant 0 : index
    %c128_236 = arith.constant 128 : index
    %304 = vector.load %arg20[%c0_235, %c128_236] : memref<16x512xf32, #tpu.memory_space<vmem>>, vector<16x256xf32>
    %cst_237 = arith.constant dense<0.000000e+00> : vector<16x256xf32>
    %305 = tpu.matmul %303, %304, %cst_237 {dimension_numbers = #tpu.dot_dimension_numbers<[1], [0], [0], [1], [0, 0, 1, 1], [], []>} : vector<16x16xf32>, vector<16x256xf32>, vector<16x256xf32> -> vector<16x256xf32>
    %306 = arith.addf %301, %305 : vector<16x256xf32>
    %c5_238 = arith.constant 5 : index
    %c0_239 = arith.constant 0 : index
    %c0_240 = arith.constant 0 : index
    %307 = vector.load %arg11[%c5_238, %c0_239, %c0_240] : memref<9x16x16xf32, #tpu.memory_space<vmem>>, vector<1x16x16xf32>
    %308 = vector.shape_cast %307 : vector<1x16x16xf32> to vector<16x16xf32>
    %c0_241 = arith.constant 0 : index
    %c129_242 = arith.constant 129 : index
    %309 = vector.load %arg20[%c0_241, %c129_242] : memref<16x512xf32, #tpu.memory_space<vmem>>, vector<16x256xf32>
    %cst_243 = arith.constant 0.000000e+00 : f32
    %310 = vector.shape_cast %22 : vector<1x256xi1> to vector<1x256xi1>
    %311 = vector.broadcast %310 : vector<1x256xi1> to vector<16x256xi1>
    %312 = vector.broadcast %cst_243 : f32 to vector<16x256xf32>
    %313 = arith.select %311, %309, %312 : vector<16x256xi1>, vector<16x256xf32>
    %cst_244 = arith.constant dense<0.000000e+00> : vector<16x256xf32>
    %314 = tpu.matmul %308, %313, %cst_244 {dimension_numbers = #tpu.dot_dimension_numbers<[1], [0], [0], [1], [0, 0, 1, 1], [], []>} : vector<16x16xf32>, vector<16x256xf32>, vector<16x256xf32> -> vector<16x256xf32>
    %315 = arith.addf %306, %314 : vector<16x256xf32>
    %c6_245 = arith.constant 6 : index
    %c0_246 = arith.constant 0 : index
    %c0_247 = arith.constant 0 : index
    %316 = vector.load %arg11[%c6_245, %c0_246, %c0_247] : memref<9x16x16xf32, #tpu.memory_space<vmem>>, vector<1x16x16xf32>
    %317 = vector.shape_cast %316 : vector<1x16x16xf32> to vector<16x16xf32>
    %c0_248 = arith.constant 0 : index
    %c143_249 = arith.constant 143 : index
    %318 = vector.load %arg20[%c0_248, %c143_249] : memref<16x512xf32, #tpu.memory_space<vmem>>, vector<16x256xf32>
    %cst_250 = arith.constant 0.000000e+00 : f32
    %319 = vector.shape_cast %20 : vector<1x256xi1> to vector<1x256xi1>
    %320 = vector.broadcast %319 : vector<1x256xi1> to vector<16x256xi1>
    %321 = vector.broadcast %cst_250 : f32 to vector<16x256xf32>
    %322 = arith.select %320, %318, %321 : vector<16x256xi1>, vector<16x256xf32>
    %cst_251 = arith.constant dense<0.000000e+00> : vector<16x256xf32>
    %323 = tpu.matmul %317, %322, %cst_251 {dimension_numbers = #tpu.dot_dimension_numbers<[1], [0], [0], [1], [0, 0, 1, 1], [], []>} : vector<16x16xf32>, vector<16x256xf32>, vector<16x256xf32> -> vector<16x256xf32>
    %324 = arith.addf %315, %323 : vector<16x256xf32>
    %c7_252 = arith.constant 7 : index
    %c0_253 = arith.constant 0 : index
    %c0_254 = arith.constant 0 : index
    %325 = vector.load %arg11[%c7_252, %c0_253, %c0_254] : memref<9x16x16xf32, #tpu.memory_space<vmem>>, vector<1x16x16xf32>
    %326 = vector.shape_cast %325 : vector<1x16x16xf32> to vector<16x16xf32>
    %c0_255 = arith.constant 0 : index
    %c144_256 = arith.constant 144 : index
    %327 = vector.load %arg20[%c0_255, %c144_256] : memref<16x512xf32, #tpu.memory_space<vmem>>, vector<16x256xf32>
    %cst_257 = arith.constant dense<0.000000e+00> : vector<16x256xf32>
    %328 = tpu.matmul %326, %327, %cst_257 {dimension_numbers = #tpu.dot_dimension_numbers<[1], [0], [0], [1], [0, 0, 1, 1], [], []>} : vector<16x16xf32>, vector<16x256xf32>, vector<16x256xf32> -> vector<16x256xf32>
    %329 = arith.addf %324, %328 : vector<16x256xf32>
    %c8_258 = arith.constant 8 : index
    %c0_259 = arith.constant 0 : index
    %c0_260 = arith.constant 0 : index
    %330 = vector.load %arg11[%c8_258, %c0_259, %c0_260] : memref<9x16x16xf32, #tpu.memory_space<vmem>>, vector<1x16x16xf32>
    %331 = vector.shape_cast %330 : vector<1x16x16xf32> to vector<16x16xf32>
    %c0_261 = arith.constant 0 : index
    %c145_262 = arith.constant 145 : index
    %332 = vector.load %arg20[%c0_261, %c145_262] : memref<16x512xf32, #tpu.memory_space<vmem>>, vector<16x256xf32>
    %cst_263 = arith.constant 0.000000e+00 : f32
    %333 = vector.shape_cast %22 : vector<1x256xi1> to vector<1x256xi1>
    %334 = vector.broadcast %333 : vector<1x256xi1> to vector<16x256xi1>
    %335 = vector.broadcast %cst_263 : f32 to vector<16x256xf32>
    %336 = arith.select %334, %332, %335 : vector<16x256xi1>, vector<16x256xf32>
    %cst_264 = arith.constant dense<0.000000e+00> : vector<16x256xf32>
    %337 = tpu.matmul %331, %336, %cst_264 {dimension_numbers = #tpu.dot_dimension_numbers<[1], [0], [0], [1], [0, 0, 1, 1], [], []>} : vector<16x16xf32>, vector<16x256xf32>, vector<16x256xf32> -> vector<16x256xf32>
    %338 = arith.addf %329, %337 : vector<16x256xf32>
    %c0_265 = arith.constant 0 : index
    %c0_266 = arith.constant 0 : index
    %339 = vector.load %arg12[%c0_265, %c0_266] : memref<16x1xf32, #tpu.memory_space<vmem>>, vector<16x1xf32>
    %340 = vector.broadcast %339 : vector<16x1xf32> to vector<16x256xf32>
    %341 = arith.addf %338, %340 : vector<16x256xf32>
    %cst_267 = arith.constant 0.000000e+00 : f32
    %342 = vector.broadcast %cst_267 : f32 to vector<16x256xf32>
    %343 = arith.maximumf %341, %342 : vector<16x256xf32>
    %cst_268 = arith.constant 1.000000e+00 : f32
    %344 = vector.broadcast %cst_268 : f32 to vector<1x256xf32>
    %345 = arith.mulf %188, %344 : vector<1x256xf32>
    %346 = vector.broadcast %345 : vector<1x256xf32> to vector<16x256xf32>
    %347 = arith.mulf %343, %346 : vector<16x256xf32>
    %c0_269 = arith.constant 0 : index
    %c0_270 = arith.constant 0 : index
    %348 = vector.load %arg13[%c0_269, %c0_270] : memref<3x16xf32, #tpu.memory_space<vmem>>, vector<3x16xf32>
    %cst_271 = arith.constant dense<0.000000e+00> : vector<3x256xf32>
    %349 = tpu.matmul %348, %347, %cst_271 {dimension_numbers = #tpu.dot_dimension_numbers<[1], [0], [0], [1], [0, 0, 1, 1], [], []>} : vector<3x16xf32>, vector<16x256xf32>, vector<3x256xf32> -> vector<3x256xf32>
    %c0_272 = arith.constant 0 : index
    %c0_273 = arith.constant 0 : index
    %350 = vector.load %arg14[%c0_272, %c0_273] : memref<3x1xf32, #tpu.memory_space<vmem>>, vector<3x1xf32>
    %351 = vector.broadcast %350 : vector<3x1xf32> to vector<3x256xf32>
    %352 = arith.addf %349, %351 : vector<3x256xf32>
    %cst_274 = arith.constant dense<0xFF800000> : vector<256xf32>
    %353 = vector.multi_reduction <maximumf>, %352, %cst_274 [0] : vector<3x256xf32> to vector<256xf32>
    %354 = vector.shape_cast %353 : vector<256xf32> to vector<1x256xf32>
    %355 = vector.broadcast %354 : vector<1x256xf32> to vector<3x256xf32>
    %356 = arith.subf %352, %355 : vector<3x256xf32>
    %357 = math.exp %356 : vector<3x256xf32>
    %cst_275 = arith.constant dense<0.000000e+00> : vector<256xf32>
    %358 = vector.multi_reduction <add>, %357, %cst_275 [0] : vector<3x256xf32> to vector<256xf32>
    %359 = vector.shape_cast %358 : vector<256xf32> to vector<1x256xf32>
    %360 = tpu.reciprocal %359 {approx = true} : vector<1x256xf32> -> vector<1x256xf32>
    %361 = vector.broadcast %360 : vector<1x256xf32> to vector<3x256xf32>
    %362 = arith.mulf %357, %361 : vector<3x256xf32>
    %c0_276 = arith.constant 0 : index
    %c0_277 = arith.constant 0 : index
    %c0_278 = arith.constant 0 : index
    %363 = vector.load %arg15[%c0_276, %c0_277, %c0_278] : memref<1x2x256xf32, #tpu.memory_space<vmem>>, vector<1x2x256xf32>
    %364 = vector.shape_cast %363 : vector<1x2x256xf32> to vector<2x256xf32>
    %365 = vector.shape_cast %100 : vector<2x256xf32> to vector<1x2x256xf32>
    tpu.vector_store %arg15[%c0_276, %c0_277, %c0_278], %365 {strides = array<i32>} : memref<1x2x256xf32, #tpu.memory_space<vmem>>, vector<1x2x256xf32>,
    %c0_279 = arith.constant 0 : index
    %c0_280 = arith.constant 0 : index
    %c0_281 = arith.constant 0 : index
    %366 = vector.load %arg16[%c0_279, %c0_280, %c0_281] : memref<1x2x256xf32, #tpu.memory_space<vmem>>, vector<1x2x256xf32>
    %367 = vector.shape_cast %366 : vector<1x2x256xf32> to vector<2x256xf32>
    %368 = vector.shape_cast %176 : vector<2x256xf32> to vector<1x2x256xf32>
    tpu.vector_store %arg16[%c0_279, %c0_280, %c0_281], %368 {strides = array<i32>} : memref<1x2x256xf32, #tpu.memory_space<vmem>>, vector<1x2x256xf32>,
    %c0_282 = arith.constant 0 : index
    %c0_283 = arith.constant 0 : index
    %c0_284 = arith.constant 0 : index
    %369 = vector.load %arg17[%c0_282, %c0_283, %c0_284] : memref<1x1x256xf32, #tpu.memory_space<vmem>>, vector<1x1x256xf32>
    %370 = vector.shape_cast %369 : vector<1x1x256xf32> to vector<1x256xf32>
    %371 = vector.shape_cast %345 : vector<1x256xf32> to vector<1x1x256xf32>
    tpu.vector_store %arg17[%c0_282, %c0_283, %c0_284], %371 {strides = array<i32>} : memref<1x1x256xf32, #tpu.memory_space<vmem>>, vector<1x1x256xf32>,
    %c0_285 = arith.constant 0 : index
    %c0_286 = arith.constant 0 : index
    %c0_287 = arith.constant 0 : index
    %372 = vector.load %arg18[%c0_285, %c0_286, %c0_287] : memref<1x16x256xf32, #tpu.memory_space<vmem>>, vector<1x16x256xf32>
    %373 = vector.shape_cast %372 : vector<1x16x256xf32> to vector<16x256xf32>
    %374 = vector.shape_cast %267 : vector<16x256xf32> to vector<1x16x256xf32>
    tpu.vector_store %arg18[%c0_285, %c0_286, %c0_287], %374 {strides = array<i32>} : memref<1x16x256xf32, #tpu.memory_space<vmem>>, vector<1x16x256xf32>,
    %c0_288 = arith.constant 0 : index
    %c0_289 = arith.constant 0 : index
    %c0_290 = arith.constant 0 : index
    %375 = vector.load %arg19[%c0_288, %c0_289, %c0_290] : memref<1x3x256xf32, #tpu.memory_space<vmem>>, vector<1x3x256xf32>
    %376 = vector.shape_cast %375 : vector<1x3x256xf32> to vector<3x256xf32>
    %377 = vector.shape_cast %362 : vector<3x256xf32> to vector<1x3x256xf32>
    tpu.vector_store %arg19[%c0_288, %c0_289, %c0_290], %377 {strides = array<i32>} : memref<1x3x256xf32, #tpu.memory_space<vmem>>, vector<1x3x256xf32>,
    return
  }
  func.func @transform_0(%arg0: i32) -> (i32, i32, i32) {
    %c0_i32 = arith.constant 0 : i32
    %c0_i32_0 = arith.constant 0 : i32
    %c0_i32_1 = arith.constant 0 : i32
    return %arg0, %c0_i32, %c0_i32_0 : i32, i32, i32
  }
  func.func @transform_1(%arg0: i32) -> (i32, i32, i32) {
    %c0_i32 = arith.constant 0 : i32
    %c0_i32_0 = arith.constant 0 : i32
    %c0_i32_1 = arith.constant 0 : i32
    return %arg0, %c0_i32, %c0_i32_0 : i32, i32, i32
  }
  func.func @transform_2(%arg0: i32) -> (i32, i32, i32) {
    %c0_i32 = arith.constant 0 : i32
    %c0_i32_0 = arith.constant 0 : i32
    %c0_i32_1 = arith.constant 0 : i32
    %c0_i32_2 = arith.constant 0 : i32
    return %c0_i32, %c0_i32_0, %c0_i32_1 : i32, i32, i32
  }
  func.func @transform_3(%arg0: i32) -> (i32, i32) {
    %c0_i32 = arith.constant 0 : i32
    %c0_i32_0 = arith.constant 0 : i32
    %c0_i32_1 = arith.constant 0 : i32
    return %c0_i32, %c0_i32_0 : i32, i32
  }
  func.func @transform_4(%arg0: i32) -> (i32, i32, i32) {
    %c0_i32 = arith.constant 0 : i32
    %c0_i32_0 = arith.constant 0 : i32
    %c0_i32_1 = arith.constant 0 : i32
    %c0_i32_2 = arith.constant 0 : i32
    return %c0_i32, %c0_i32_0, %c0_i32_1 : i32, i32, i32
  }
  func.func @transform_5(%arg0: i32) -> (i32, i32) {
    %c0_i32 = arith.constant 0 : i32
    %c0_i32_0 = arith.constant 0 : i32
    %c0_i32_1 = arith.constant 0 : i32
    return %c0_i32, %c0_i32_0 : i32, i32
  }
  func.func @transform_6(%arg0: i32) -> (i32, i32) {
    %c0_i32 = arith.constant 0 : i32
    %c0_i32_0 = arith.constant 0 : i32
    %c0_i32_1 = arith.constant 0 : i32
    return %c0_i32, %c0_i32_0 : i32, i32
  }
  func.func @transform_7(%arg0: i32) -> (i32, i32) {
    %c0_i32 = arith.constant 0 : i32
    %c0_i32_0 = arith.constant 0 : i32
    %c0_i32_1 = arith.constant 0 : i32
    return %c0_i32, %c0_i32_0 : i32, i32
  }
  func.func @transform_8(%arg0: i32) -> (i32, i32, i32) {
    %c0_i32 = arith.constant 0 : i32
    %c0_i32_0 = arith.constant 0 : i32
    %c0_i32_1 = arith.constant 0 : i32
    %c0_i32_2 = arith.constant 0 : i32
    return %c0_i32, %c0_i32_0, %c0_i32_1 : i32, i32, i32
  }
  func.func @transform_9(%arg0: i32) -> (i32, i32) {
    %c0_i32 = arith.constant 0 : i32
    %c0_i32_0 = arith.constant 0 : i32
    %c0_i32_1 = arith.constant 0 : i32
    return %c0_i32, %c0_i32_0 : i32, i32
  }
  func.func @transform_10(%arg0: i32) -> (i32, i32, i32) {
    %c0_i32 = arith.constant 0 : i32
    %c0_i32_0 = arith.constant 0 : i32
    %c0_i32_1 = arith.constant 0 : i32
    %c0_i32_2 = arith.constant 0 : i32
    return %c0_i32, %c0_i32_0, %c0_i32_1 : i32, i32, i32
  }
  func.func @transform_11(%arg0: i32) -> (i32, i32) {
    %c0_i32 = arith.constant 0 : i32
    %c0_i32_0 = arith.constant 0 : i32
    %c0_i32_1 = arith.constant 0 : i32
    return %c0_i32, %c0_i32_0 : i32, i32
  }
  func.func @transform_12(%arg0: i32) -> (i32, i32) {
    %c0_i32 = arith.constant 0 : i32
    %c0_i32_0 = arith.constant 0 : i32
    %c0_i32_1 = arith.constant 0 : i32
    return %c0_i32, %c0_i32_0 : i32, i32
  }
  func.func @transform_13(%arg0: i32) -> (i32, i32) {
    %c0_i32 = arith.constant 0 : i32
    %c0_i32_0 = arith.constant 0 : i32
    %c0_i32_1 = arith.constant 0 : i32
    return %c0_i32, %c0_i32_0 : i32, i32
  }
  func.func @transform_14(%arg0: i32) -> (i32, i32, i32) {
    %c0_i32 = arith.constant 0 : i32
    %c0_i32_0 = arith.constant 0 : i32
    %c0_i32_1 = arith.constant 0 : i32
    return %arg0, %c0_i32, %c0_i32_0 : i32, i32, i32
  }
  func.func @transform_15(%arg0: i32) -> (i32, i32, i32) {
    %c0_i32 = arith.constant 0 : i32
    %c0_i32_0 = arith.constant 0 : i32
    %c0_i32_1 = arith.constant 0 : i32
    return %arg0, %c0_i32, %c0_i32_0 : i32, i32, i32
  }
  func.func @transform_16(%arg0: i32) -> (i32, i32, i32) {
    %c0_i32 = arith.constant 0 : i32
    %c0_i32_0 = arith.constant 0 : i32
    %c0_i32_1 = arith.constant 0 : i32
    return %arg0, %c0_i32, %c0_i32_0 : i32, i32, i32
  }
  func.func @transform_17(%arg0: i32) -> (i32, i32, i32) {
    %c0_i32 = arith.constant 0 : i32
    %c0_i32_0 = arith.constant 0 : i32
    %c0_i32_1 = arith.constant 0 : i32
    return %arg0, %c0_i32, %c0_i32_0 : i32, i32, i32
  }
  func.func @transform_18(%arg0: i32) -> (i32, i32, i32) {
    %c0_i32 = arith.constant 0 : i32
    %c0_i32_0 = arith.constant 0 : i32
    %c0_i32_1 = arith.constant 0 : i32
    return %arg0, %c0_i32, %c0_i32_0 : i32, i32, i32
  }
}

</mosaic_0001>

<llo_original>
// kernel: vonet_forward.1
$region0: #{vonet_forward.1}
  #allocation0 [shape = 'u32[]', space=smem, size = 0x4, offset = 0x4, fixed_abs, tag = 'smem constant byte address 0x4 - core index']
  #allocation1 [shape = 'u32[144,128]{1,0:T(1,128)}', space=vmem, size = 0x12000, scoped, tag = 'internal scratch']
  #allocation2 [shape = 'f32[16,512]{1,0:T(8,128)}', space=vmem, size = 0x8000, scoped, tag = 'scratch operand']
  #allocation3 [shape = 'f32[1,1]{1,0:T(1,128)S(1)}', space=vmem, size = 0x200, scoped, tag = 'scoped memory for vonet_forward.1']
  %s0 = inlined_call_operand.vmem [shape: f32[2,3,256], index: 0, kind: input, shape index: {}]
  %s1 = inlined_call_operand.vmem [shape: f32[2,2,256], index: 1, kind: input, shape index: {}]
  %s2 = inlined_call_operand.vmem [shape: f32[9,2,2], index: 2, kind: input, shape index: {}]
  %s3 = inlined_call_operand.vmem [shape: f32[2,1], index: 3, kind: input, shape index: {}]
  %s4 = inlined_call_operand.vmem [shape: f32[9,2,2], index: 4, kind: input, shape index: {}]
  %s5 = inlined_call_operand.vmem [shape: f32[2,1], index: 5, kind: input, shape index: {}]
  %s6 = inlined_call_operand.vmem [shape: f32[1,2], index: 6, kind: input, shape index: {}]
  %s7 = inlined_call_operand.<no memory space> [shape: f32[1,1], index: 7, kind: input, shape index: {}]
  %s8 = inlined_call_operand.vmem [shape: f32[9,16,4], index: 8, kind: input, shape index: {}]
  %s9 = inlined_call_operand.vmem [shape: f32[16,1], index: 9, kind: input, shape index: {}]
  %s10 = inlined_call_operand.vmem [shape: f32[9,16,16], index: 10, kind: input, shape index: {}]
  %s11 = inlined_call_operand.vmem [shape: f32[16,1], index: 11, kind: input, shape index: {}]
  %s12 = inlined_call_operand.vmem [shape: f32[3,16], index: 12, kind: input, shape index: {}]
  %s13 = inlined_call_operand.vmem [shape: f32[3,1], index: 13, kind: input, shape index: {}]
  %s14 = inlined_call_operand.vmem [shape: f32[2,2,256], index: 14, kind: output, shape index: {0}]
  %s15 = inlined_call_operand.vmem [shape: f32[2,2,256], index: 15, kind: output, shape index: {1}]
  %s16 = inlined_call_operand.vmem [shape: f32[2,1,256], index: 16, kind: output, shape index: {2}]
  %s17 = inlined_call_operand.vmem [shape: f32[2,16,256], index: 17, kind: output, shape index: {3}]
  %s18 = inlined_call_operand.vmem [shape: f32[2,3,256], index: 18, kind: output, shape index: {4}]
  %19 = xla_tuple %s14, %s15, %s16, %s17, %s18
  %s20 = sld [smem:[#allocation0]]
  $region121: #{vonet_forward.1} parent=0
    _
  %s22 = ssub.s32 1, %s20
  %s23 = scalar_select 0, %s22, %s20
  %v24 = vstv %s7
  %25 = vst [vmem:[#allocation3] sm:$0x1] %v24
  loop: start=0, step=1, limit=4
  $region2: #{vonet_forward.1} parent=0 // loop_pre_header
    _
  $region3: #{vonet_forward.1} parent=0 // loop_header
    %s27 = sphi 0, %s31
    %p28 = scmp.ge.s32.totalorder %s27, 4
    %s37 = sphi 0, %s39
    %s40 = sphi 0, %s37
    %s41 = sphi 0, %s40
    %s57 = sphi 0, %s41
    %s63 = sphi 0, %s65
    %s66 = sphi 0, %s63
    %s67 = sphi 0, %s66
    %s83 = sphi 0, %s67
    %s87 = sphi 0, %s87
    %s89 = sphi 0, %s87
    %s90 = sphi 0, %s89
    %s104 = sphi 0, %s90
    %s108 = sphi 0, %s108
    %s110 = sphi 0, %s108
    %s111 = sphi 0, %s110
    %s125 = sphi 0, %s111
    %s129 = sphi 0, %s129
    %s131 = sphi 0, %s129
    %s132 = sphi 0, %s131
    %s146 = sphi 0, %s132
    %s150 = sphi 0, %s150
    %s152 = sphi 0, %s150
    %s153 = sphi 0, %s152
    %s167 = sphi 0, %s153
    %s171 = sphi 0, %s171
    %s173 = sphi 0, %s171
    %s174 = sphi 0, %s173
    %s188 = sphi 0, %s174
    %s192 = sphi 0, %s192
    %s194 = sphi 0, %s192
    %s195 = sphi 0, %s194
    %s209 = sphi 0, %s195
    %s213 = sphi 0, %s213
    %s215 = sphi 0, %s213
    %s216 = sphi 0, %s215
    %s230 = sphi 0, %s216
    %s234 = sphi 0, %s234
    %s236 = sphi 0, %s234
    %s237 = sphi 0, %s236
    %s251 = sphi 0, %s237
    %s255 = sphi 0, %s255
    %s257 = sphi 0, %s255
    %s258 = sphi 0, %s257
    %s272 = sphi 0, %s258
    %s276 = sphi 0, %s276
    %s278 = sphi 0, %s276
    %s279 = sphi 0, %s278
    %s293 = sphi 0, %s279
    %s297 = sphi 0, %s297
    %s299 = sphi 0, %s297
    %s300 = sphi 0, %s299
    %s314 = sphi 0, %s300
    %s318 = sphi 0, %s318
    %s320 = sphi 0, %s318
    %s321 = sphi 0, %s320
    %s335 = sphi 0, %s321
    %s341 = sphi 0, %s343
    %s344 = sphi 0, %s341
    %s345 = sphi 0, %s344
    %s361 = sphi 0, %s345
    %s367 = sphi 0, %s369
    %s370 = sphi 0, %s367
    %s371 = sphi 0, %s370
    %s387 = sphi 0, %s371
    %s393 = sphi 0, %s395
    %s396 = sphi 0, %s393
    %s397 = sphi 0, %s396
    %s413 = sphi 0, %s397
    %s419 = sphi 0, %s421
    %s422 = sphi 0, %s419
    %s423 = sphi 0, %s422
    %s439 = sphi 0, %s423
    %s445 = sphi 0, %s447
    %s448 = sphi 0, %s445
    %s449 = sphi 0, %s448
    %s465 = sphi 0, %s449
  $region4: #{vonet_forward.1} parent=0 // loop_header_branch
    %30 = sbr.rel (%p28) target = $region8
  $region5: #{vonet_forward.1} parent=0 // loop_body
    %s32 = ssub.s32 %s27, 1
    %s33 = ssub.s32 %s27, 2
    %s34 = sadd.s32 %s27, 1
    %s35 = ssub.s32 %s27, %s34
    %p36 = scmp.eq.s32.totalorder %s35, 0
    %s38 = sadd.s32 %s37, 1
    %s39 = scalar_select %p36, %s37, %s38
    %p42 = pneg %p36
    %p43 = scmp.eq.s32.totalorder %s27, 1
    %p44 = por %p42, %p43
    %p45 = scmp.ne.s32.totalorder %s37, %s40
    %p46 = scmp.eq.s32.totalorder %s27, 0
    %p47 = por %p45, %p46
    %p48 = scmp.ne.s32.totalorder %s37, %s40
    %p49 = scmp.eq.s32.totalorder %s32, 1
    %p50 = por %p48, %p49
    %p51 = scmp.ne.s32.totalorder %s40, %s41
    %p52 = scmp.eq.s32.totalorder %s32, 0
    %p53 = por %p51, %p52
    %p54 = scmp.ne.s32.totalorder %s40, %s41
    %p55 = scmp.eq.s32.totalorder %s33, 1
    %p56 = por %p54, %p55
    %p58 = scmp.ne.s32.totalorder %s41, %s57
    %p59 = scmp.eq.s32.totalorder %s33, 0
    %p60 = por %p58, %p59
    %s61 = ssub.s32 %s27, %s34
    %p62 = scmp.eq.s32.totalorder %s61, 0
    %s64 = sadd.s32 %s63, 1
    %s65 = scalar_select %p62, %s63, %s64
    %p68 = pneg %p62
    %p69 = scmp.eq.s32.totalorder %s27, 1
    %p70 = por %p68, %p69
    %p71 = scmp.ne.s32.totalorder %s63, %s66
    %p72 = scmp.eq.s32.totalorder %s27, 0
    %p73 = por %p71, %p72
    %p74 = scmp.ne.s32.totalorder %s63, %s66
    %p75 = scmp.eq.s32.totalorder %s32, 1
    %p76 = por %p74, %p75
    %p77 = scmp.ne.s32.totalorder %s66, %s67
    %p78 = scmp.eq.s32.totalorder %s32, 0
    %p79 = por %p77, %p78
    %p80 = scmp.ne.s32.totalorder %s66, %s67
    %p81 = scmp.eq.s32.totalorder %s33, 1
    %p82 = por %p80, %p81
    %p84 = scmp.ne.s32.totalorder %s67, %s83
    %p85 = scmp.eq.s32.totalorder %s33, 0
    %p86 = por %p84, %p85
    %s88 = sadd.s32 %s87, 1
    %p91 = scmp.eq.s32.totalorder %s27, 1
    %p92 = scmp.ne.s32.totalorder %s87, %s89
    %p93 = scmp.eq.s32.totalorder %s27, 0
    %p94 = por %p92, %p93
    %p95 = scmp.ne.s32.totalorder %s87, %s89
    %p96 = scmp.eq.s32.totalorder %s32, 1
    %p97 = por %p95, %p96
    %p98 = scmp.ne.s32.totalorder %s89, %s90
    %p99 = scmp.eq.s32.totalorder %s32, 0
    %p100 = por %p98, %p99
    %p101 = scmp.ne.s32.totalorder %s89, %s90
    %p102 = scmp.eq.s32.totalorder %s33, 1
    %p103 = por %p101, %p102
    %p105 = scmp.ne.s32.totalorder %s90, %s104
    %p106 = scmp.eq.s32.totalorder %s33, 0
    %p107 = por %p105, %p106
    %s109 = sadd.s32 %s108, 1
    %p112 = scmp.eq.s32.totalorder %s27, 1
    %p113 = scmp.ne.s32.totalorder %s108, %s110
    %p114 = scmp.eq.s32.totalorder %s27, 0
    %p115 = por %p113, %p114
    %p116 = scmp.ne.s32.totalorder %s108, %s110
    %p117 = scmp.eq.s32.totalorder %s32, 1
    %p118 = por %p116, %p117
    %p119 = scmp.ne.s32.totalorder %s110, %s111
    %p120 = scmp.eq.s32.totalorder %s32, 0
    %p121 = por %p119, %p120
    %p122 = scmp.ne.s32.totalorder %s110, %s111
    %p123 = scmp.eq.s32.totalorder %s33, 1
    %p124 = por %p122, %p123
    %p126 = scmp.ne.s32.totalorder %s111, %s125
    %p127 = scmp.eq.s32.totalorder %s33, 0
    %p128 = por %p126, %p127
    %s130 = sadd.s32 %s129, 1
    %p133 = scmp.eq.s32.totalorder %s27, 1
    %p134 = scmp.ne.s32.totalorder %s129, %s131
    %p135 = scmp.eq.s32.totalorder %s27, 0
    %p136 = por %p134, %p135
    %p137 = scmp.ne.s32.totalorder %s129, %s131
    %p138 = scmp.eq.s32.totalorder %s32, 1
    %p139 = por %p137, %p138
    %p140 = scmp.ne.s32.totalorder %s131, %s132
    %p141 = scmp.eq.s32.totalorder %s32, 0
    %p142 = por %p140, %p141
    %p143 = scmp.ne.s32.totalorder %s131, %s132
    %p144 = scmp.eq.s32.totalorder %s33, 1
    %p145 = por %p143, %p144
    %p147 = scmp.ne.s32.totalorder %s132, %s146
    %p148 = scmp.eq.s32.totalorder %s33, 0
    %p149 = por %p147, %p148
    %s151 = sadd.s32 %s150, 1
    %p154 = scmp.eq.s32.totalorder %s27, 1
    %p155 = scmp.ne.s32.totalorder %s150, %s152
    %p156 = scmp.eq.s32.totalorder %s27, 0
    %p157 = por %p155, %p156
    %p158 = scmp.ne.s32.totalorder %s150, %s152
    %p159 = scmp.eq.s32.totalorder %s32, 1
    %p160 = por %p158, %p159
    %p161 = scmp.ne.s32.totalorder %s152, %s153
    %p162 = scmp.eq.s32.totalorder %s32, 0
    %p163 = por %p161, %p162
    %p164 = scmp.ne.s32.totalorder %s152, %s153
    %p165 = scmp.eq.s32.totalorder %s33, 1
    %p166 = por %p164, %p165
    %p168 = scmp.ne.s32.totalorder %s153, %s167
    %p169 = scmp.eq.s32.totalorder %s33, 0
    %p170 = por %p168, %p169
    %s172 = sadd.s32 %s171, 1
    %p175 = scmp.eq.s32.totalorder %s27, 1
    %p176 = scmp.ne.s32.totalorder %s171, %s173
    %p177 = scmp.eq.s32.totalorder %s27, 0
    %p178 = por %p176, %p177
    %p179 = scmp.ne.s32.totalorder %s171, %s173
    %p180 = scmp.eq.s32.totalorder %s32, 1
    %p181 = por %p179, %p180
    %p182 = scmp.ne.s32.totalorder %s173, %s174
    %p183 = scmp.eq.s32.totalorder %s32, 0
    %p184 = por %p182, %p183
    %p185 = scmp.ne.s32.totalorder %s173, %s174
    %p186 = scmp.eq.s32.totalorder %s33, 1
    %p187 = por %p185, %p186
    %p189 = scmp.ne.s32.totalorder %s174, %s188
    %p190 = scmp.eq.s32.totalorder %s33, 0
    %p191 = por %p189, %p190
    %s193 = sadd.s32 %s192, 1
    %p196 = scmp.eq.s32.totalorder %s27, 1
    %p197 = scmp.ne.s32.totalorder %s192, %s194
    %p198 = scmp.eq.s32.totalorder %s27, 0
    %p199 = por %p197, %p198
    %p200 = scmp.ne.s32.totalorder %s192, %s194
    %p201 = scmp.eq.s32.totalorder %s32, 1
    %p202 = por %p200, %p201
    %p203 = scmp.ne.s32.totalorder %s194, %s195
    %p204 = scmp.eq.s32.totalorder %s32, 0
    %p205 = por %p203, %p204
    %p206 = scmp.ne.s32.totalorder %s194, %s195
    %p207 = scmp.eq.s32.totalorder %s33, 1
    %p208 = por %p206, %p207
    %p210 = scmp.ne.s32.totalorder %s195, %s209
    %p211 = scmp.eq.s32.totalorder %s33, 0
    %p212 = por %p210, %p211
    %s214 = sadd.s32 %s213, 1
    %p217 = scmp.eq.s32.totalorder %s27, 1
    %p218 = scmp.ne.s32.totalorder %s213, %s215
    %p219 = scmp.eq.s32.totalorder %s27, 0
    %p220 = por %p218, %p219
    %p221 = scmp.ne.s32.totalorder %s213, %s215
    %p222 = scmp.eq.s32.totalorder %s32, 1
    %p223 = por %p221, %p222
    %p224 = scmp.ne.s32.totalorder %s215, %s216
    %p225 = scmp.eq.s32.totalorder %s32, 0
    %p226 = por %p224, %p225
    %p227 = scmp.ne.s32.totalorder %s215, %s216
    %p228 = scmp.eq.s32.totalorder %s33, 1
    %p229 = por %p227, %p228
    %p231 = scmp.ne.s32.totalorder %s216, %s230
    %p232 = scmp.eq.s32.totalorder %s33, 0
    %p233 = por %p231, %p232
    %s235 = sadd.s32 %s234, 1
    %p238 = scmp.eq.s32.totalorder %s27, 1
    %p239 = scmp.ne.s32.totalorder %s234, %s236
    %p240 = scmp.eq.s32.totalorder %s27, 0
    %p241 = por %p239, %p240
    %p242 = scmp.ne.s32.totalorder %s234, %s236
    %p243 = scmp.eq.s32.totalorder %s32, 1
    %p244 = por %p242, %p243
    %p245 = scmp.ne.s32.totalorder %s236, %s237
    %p246 = scmp.eq.s32.totalorder %s32, 0
    %p247 = por %p245, %p246
    %p248 = scmp.ne.s32.totalorder %s236, %s237
    %p249 = scmp.eq.s32.totalorder %s33, 1
    %p250 = por %p248, %p249
    %p252 = scmp.ne.s32.totalorder %s237, %s251
    %p253 = scmp.eq.s32.totalorder %s33, 0
    %p254 = por %p252, %p253
    %s256 = sadd.s32 %s255, 1
    %p259 = scmp.eq.s32.totalorder %s27, 1
    %p260 = scmp.ne.s32.totalorder %s255, %s257
    %p261 = scmp.eq.s32.totalorder %s27, 0
    %p262 = por %p260, %p261
    %p263 = scmp.ne.s32.totalorder %s255, %s257
    %p264 = scmp.eq.s32.totalorder %s32, 1
    %p265 = por %p263, %p264
    %p266 = scmp.ne.s32.totalorder %s257, %s258
    %p267 = scmp.eq.s32.totalorder %s32, 0
    %p268 = por %p266, %p267
    %p269 = scmp.ne.s32.totalorder %s257, %s258
    %p270 = scmp.eq.s32.totalorder %s33, 1
    %p271 = por %p269, %p270
    %p273 = scmp.ne.s32.totalorder %s258, %s272
    %p274 = scmp.eq.s32.totalorder %s33, 0
    %p275 = por %p273, %p274
    %s277 = sadd.s32 %s276, 1
    %p280 = scmp.eq.s32.totalorder %s27, 1
    %p281 = scmp.ne.s32.totalorder %s276, %s278
    %p282 = scmp.eq.s32.totalorder %s27, 0
    %p283 = por %p281, %p282
    %p284 = scmp.ne.s32.totalorder %s276, %s278
    %p285 = scmp.eq.s32.totalorder %s32, 1
    %p286 = por %p284, %p285
    %p287 = scmp.ne.s32.totalorder %s278, %s279
    %p288 = scmp.eq.s32.totalorder %s32, 0
    %p289 = por %p287, %p288
    %p290 = scmp.ne.s32.totalorder %s278, %s279
    %p291 = scmp.eq.s32.totalorder %s33, 1
    %p292 = por %p290, %p291
    %p294 = scmp.ne.s32.totalorder %s279, %s293
    %p295 = scmp.eq.s32.totalorder %s33, 0
    %p296 = por %p294, %p295
    %s298 = sadd.s32 %s297, 1
    %p301 = scmp.eq.s32.totalorder %s27, 1
    %p302 = scmp.ne.s32.totalorder %s297, %s299
    %p303 = scmp.eq.s32.totalorder %s27, 0
    %p304 = por %p302, %p303
    %p305 = scmp.ne.s32.totalorder %s297, %s299
    %p306 = scmp.eq.s32.totalorder %s32, 1
    %p307 = por %p305, %p306
    %p308 = scmp.ne.s32.totalorder %s299, %s300
    %p309 = scmp.eq.s32.totalorder %s32, 0
    %p310 = por %p308, %p309
    %p311 = scmp.ne.s32.totalorder %s299, %s300
    %p312 = scmp.eq.s32.totalorder %s33, 1
    %p313 = por %p311, %p312
    %p315 = scmp.ne.s32.totalorder %s300, %s314
    %p316 = scmp.eq.s32.totalorder %s33, 0
    %p317 = por %p315, %p316
    %s319 = sadd.s32 %s318, 1
    %p322 = scmp.eq.s32.totalorder %s27, 1
    %p323 = scmp.ne.s32.totalorder %s318, %s320
    %p324 = scmp.eq.s32.totalorder %s27, 0
    %p325 = por %p323, %p324
    %p326 = scmp.ne.s32.totalorder %s318, %s320
    %p327 = scmp.eq.s32.totalorder %s32, 1
    %p328 = por %p326, %p327
    %p329 = scmp.ne.s32.totalorder %s320, %s321
    %p330 = scmp.eq.s32.totalorder %s32, 0
    %p331 = por %p329, %p330
    %p332 = scmp.ne.s32.totalorder %s320, %s321
    %p333 = scmp.eq.s32.totalorder %s33, 1
    %p334 = por %p332, %p333
    %p336 = scmp.ne.s32.totalorder %s321, %s335
    %p337 = scmp.eq.s32.totalorder %s33, 0
    %p338 = por %p336, %p337
    %s339 = ssub.s32 %s27, %s34
    %p340 = scmp.eq.s32.totalorder %s339, 0
    %s342 = sadd.s32 %s341, 1
    %s343 = scalar_select %p340, %s341, %s342
    %p346 = pneg %p340
    %p347 = scmp.eq.s32.totalorder %s27, 1
    %p348 = por %p346, %p347
    %p349 = scmp.ne.s32.totalorder %s341, %s344
    %p350 = scmp.eq.s32.totalorder %s27, 0
    %p351 = por %p349, %p350
    %p352 = scmp.ne.s32.totalorder %s341, %s344
    %p353 = scmp.eq.s32.totalorder %s32, 1
    %p354 = por %p352, %p353
    %p355 = scmp.ne.s32.totalorder %s344, %s345
    %p356 = scmp.eq.s32.totalorder %s32, 0
    %p357 = por %p355, %p356
    %p358 = scmp.ne.s32.totalorder %s344, %s345
    %p359 = scmp.eq.s32.totalorder %s33, 1
    %p360 = por %p358, %p359
    %p362 = scmp.ne.s32.totalorder %s345, %s361
    %p363 = scmp.eq.s32.totalorder %s33, 0
    %p364 = por %p362, %p363
    %s365 = ssub.s32 %s27, %s34
    %p366 = scmp.eq.s32.totalorder %s365, 0
    %s368 = sadd.s32 %s367, 1
    %s369 = scalar_select %p366, %s367, %s368
    %p372 = pneg %p366
    %p373 = scmp.eq.s32.totalorder %s27, 1
    %p374 = por %p372, %p373
    %p375 = scmp.ne.s32.totalorder %s367, %s370
    %p376 = scmp.eq.s32.totalorder %s27, 0
    %p377 = por %p375, %p376
    %p378 = scmp.ne.s32.totalorder %s367, %s370
    %p379 = scmp.eq.s32.totalorder %s32, 1
    %p380 = por %p378, %p379
    %p381 = scmp.ne.s32.totalorder %s370, %s371
    %p382 = scmp.eq.s32.totalorder %s32, 0
    %p383 = por %p381, %p382
    %p384 = scmp.ne.s32.totalorder %s370, %s371
    %p385 = scmp.eq.s32.totalorder %s33, 1
    %p386 = por %p384, %p385
    %p388 = scmp.ne.s32.totalorder %s371, %s387
    %p389 = scmp.eq.s32.totalorder %s33, 0
    %p390 = por %p388, %p389
    %s391 = ssub.s32 %s27, %s34
    %p392 = scmp.eq.s32.totalorder %s391, 0
    %s394 = sadd.s32 %s393, 1
    %s395 = scalar_select %p392, %s393, %s394
    %p398 = pneg %p392
    %p399 = scmp.eq.s32.totalorder %s27, 1
    %p400 = por %p398, %p399
    %p401 = scmp.ne.s32.totalorder %s393, %s396
    %p402 = scmp.eq.s32.totalorder %s27, 0
    %p403 = por %p401, %p402
    %p404 = scmp.ne.s32.totalorder %s393, %s396
    %p405 = scmp.eq.s32.totalorder %s32, 1
    %p406 = por %p404, %p405
    %p407 = scmp.ne.s32.totalorder %s396, %s397
    %p408 = scmp.eq.s32.totalorder %s32, 0
    %p409 = por %p407, %p408
    %p410 = scmp.ne.s32.totalorder %s396, %s397
    %p411 = scmp.eq.s32.totalorder %s33, 1
    %p412 = por %p410, %p411
    %p414 = scmp.ne.s32.totalorder %s397, %s413
    %p415 = scmp.eq.s32.totalorder %s33, 0
    %p416 = por %p414, %p415
    %s417 = ssub.s32 %s27, %s34
    %p418 = scmp.eq.s32.totalorder %s417, 0
    %s420 = sadd.s32 %s419, 1
    %s421 = scalar_select %p418, %s419, %s420
    %p424 = pneg %p418
    %p425 = scmp.eq.s32.totalorder %s27, 1
    %p426 = por %p424, %p425
    %p427 = scmp.ne.s32.totalorder %s419, %s422
    %p428 = scmp.eq.s32.totalorder %s27, 0
    %p429 = por %p427, %p428
    %p430 = scmp.ne.s32.totalorder %s419, %s422
    %p431 = scmp.eq.s32.totalorder %s32, 1
    %p432 = por %p430, %p431
    %p433 = scmp.ne.s32.totalorder %s422, %s423
    %p434 = scmp.eq.s32.totalorder %s32, 0
    %p435 = por %p433, %p434
    %p436 = scmp.ne.s32.totalorder %s422, %s423
    %p437 = scmp.eq.s32.totalorder %s33, 1
    %p438 = por %p436, %p437
    %p440 = scmp.ne.s32.totalorder %s423, %s439
    %p441 = scmp.eq.s32.totalorder %s33, 0
    %p442 = por %p440, %p441
    %s443 = ssub.s32 %s27, %s34
    %p444 = scmp.eq.s32.totalorder %s443, 0
    %s446 = sadd.s32 %s445, 1
    %s447 = scalar_select %p444, %s445, %s446
    %p450 = pneg %p444
    %p451 = scmp.eq.s32.totalorder %s27, 1
    %p452 = por %p450, %p451
    %p453 = scmp.ne.s32.totalorder %s445, %s448
    %p454 = scmp.eq.s32.totalorder %s27, 0
    %p455 = por %p453, %p454
    %p456 = scmp.ne.s32.totalorder %s445, %s448
    %p457 = scmp.eq.s32.totalorder %s32, 1
    %p458 = por %p456, %p457
    %p459 = scmp.ne.s32.totalorder %s448, %s449
    %p460 = scmp.eq.s32.totalorder %s32, 0
    %p461 = por %p459, %p460
    %p462 = scmp.ne.s32.totalorder %s448, %s449
    %p463 = scmp.eq.s32.totalorder %s33, 1
    %p464 = por %p462, %p463
    %p466 = scmp.ne.s32.totalorder %s449, %s465
    %p467 = scmp.eq.s32.totalorder %s33, 0
    %p468 = por %p466, %p467
    %p469 = scmp.le.s32.totalorder 1, %s27
    %p470 = scmp.lt.s32.totalorder %s27, 3
    %p471 = pnand %p469, %p470
    %p472 = pneg %p471
    // Predicated region
    $region9: #{vonet_forward.1} parent=5 // pred_check
      _
    $region10: #{vonet_forward.1} parent=5 // pred_check_branch
      %474 = sbr.rel (%p471) target = $region12
    $region11: #{vonet_forward.1} parent=5 // pred_region
      %s475 = ssub.s32 %s27, 1
      // Predicated region
      $region13: #{vonet_forward.1} parent=11 // pred_check
        %p476 = pneg %p100
      $region14: #{vonet_forward.1} parent=11 // pred_check_branch
        %478 = sbr.rel (%p476) target = $region16
      $region15: #{vonet_forward.1} parent=11 // pred_region
        _
      $region16: #{vonet_forward.1} parent=11 // pred_fallthru
        _
      // Predicated region
      $region17: #{vonet_forward.1} parent=11 // pred_check
        %p479 = pneg %p121
      $region18: #{vonet_forward.1} parent=11 // pred_check_branch
        %481 = sbr.rel (%p479) target = $region20
      $region19: #{vonet_forward.1} parent=11 // pred_region
        _
      $region20: #{vonet_forward.1} parent=11 // pred_fallthru
        _
      // Predicated region
      $region21: #{vonet_forward.1} parent=11 // pred_check
        %p482 = pneg %p142
      $region22: #{vonet_forward.1} parent=11 // pred_check_branch
        %484 = sbr.rel (%p482) target = $region24
      $region23: #{vonet_forward.1} parent=11 // pred_region
        _
      $region24: #{vonet_forward.1} parent=11 // pred_fallthru
        _
      // Predicated region
      $region25: #{vonet_forward.1} parent=11 // pred_check
        %p485 = pneg %p163
      $region26: #{vonet_forward.1} parent=11 // pred_check_branch
        %487 = sbr.rel (%p485) target = $region28
      $region27: #{vonet_forward.1} parent=11 // pred_region
        _
      $region28: #{vonet_forward.1} parent=11 // pred_fallthru
        _
      // Predicated region
      $region29: #{vonet_forward.1} parent=11 // pred_check
        %p488 = pneg %p184
      $region30: #{vonet_forward.1} parent=11 // pred_check_branch
        %490 = sbr.rel (%p488) target = $region32
      $region31: #{vonet_forward.1} parent=11 // pred_region
        _
      $region32: #{vonet_forward.1} parent=11 // pred_fallthru
        _
      // Predicated region
      $region33: #{vonet_forward.1} parent=11 // pred_check
        %p491 = pneg %p205
      $region34: #{vonet_forward.1} parent=11 // pred_check_branch
        %493 = sbr.rel (%p491) target = $region36
      $region35: #{vonet_forward.1} parent=11 // pred_region
        _
      $region36: #{vonet_forward.1} parent=11 // pred_fallthru
        _
      // Predicated region
      $region37: #{vonet_forward.1} parent=11 // pred_check
        %p494 = pneg %p226
      $region38: #{vonet_forward.1} parent=11 // pred_check_branch
        %496 = sbr.rel (%p494) target = $region40
      $region39: #{vonet_forward.1} parent=11 // pred_region
        _
      $region40: #{vonet_forward.1} parent=11 // pred_fallthru
        _
      // Predicated region
      $region41: #{vonet_forward.1} parent=11 // pred_check
        %p497 = pneg %p247
      $region42: #{vonet_forward.1} parent=11 // pred_check_branch
        %499 = sbr.rel (%p497) target = $region44
      $region43: #{vonet_forward.1} parent=11 // pred_region
        _
      $region44: #{vonet_forward.1} parent=11 // pred_fallthru
        _
      // Predicated region
      $region45: #{vonet_forward.1} parent=11 // pred_check
        %p500 = pneg %p268
      $region46: #{vonet_forward.1} parent=11 // pred_check_branch
        %502 = sbr.rel (%p500) target = $region48
      $region47: #{vonet_forward.1} parent=11 // pred_region
        _
      $region48: #{vonet_forward.1} parent=11 // pred_fallthru
        _
      // Predicated region
      $region49: #{vonet_forward.1} parent=11 // pred_check
        %p503 = pneg %p289
      $region50: #{vonet_forward.1} parent=11 // pred_check_branch
        %505 = sbr.rel (%p503) target = $region52
      $region51: #{vonet_forward.1} parent=11 // pred_region
        _
      $region52: #{vonet_forward.1} parent=11 // pred_fallthru
        _
      // Predicated region
      $region53: #{vonet_forward.1} parent=11 // pred_check
        %p506 = pneg %p310
      $region54: #{vonet_forward.1} parent=11 // pred_check_branch
        %508 = sbr.rel (%p506) target = $region56
      $region55: #{vonet_forward.1} parent=11 // pred_region
        _
      $region56: #{vonet_forward.1} parent=11 // pred_fallthru
        _
      // Predicated region
      $region57: #{vonet_forward.1} parent=11 // pred_check
        %p509 = pneg %p331
      $region58: #{vonet_forward.1} parent=11 // pred_check_branch
        %511 = sbr.rel (%p509) target = $region60
      $region59: #{vonet_forward.1} parent=11 // pred_region
        _
      $region60: #{vonet_forward.1} parent=11 // pred_fallthru
        _
    $region12: #{vonet_forward.1} parent=5 // pred_fallthru
      _
    %p512 = scmp.lt.s32.totalorder %s27, 2
    // Predicated region
    $region61: #{vonet_forward.1} parent=5 // pred_check
      %p513 = pneg %p512
    $region62: #{vonet_forward.1} parent=5 // pred_check_branch
      %515 = sbr.rel (%p513) target = $region64
    $region63: #{vonet_forward.1} parent=5 // pred_region
      // Predicated region
      $region65: #{vonet_forward.1} parent=63 // pred_check
        %p516 = pneg %p47
      $region66: #{vonet_forward.1} parent=63 // pred_check_branch
        %518 = sbr.rel (%p516) target = $region68
      $region67: #{vonet_forward.1} parent=63 // pred_region
        %p519 = scmp.lt.s32.totalorder %s27, 1
        %s520 = scalar_select %p519, %s27, 1
        %s521 = smul.addr %s520, 2
        %s522 = smul.addr %s521, 4
        %s523 = scalar_lea.vmem %s0, %s522
      $region68: #{vonet_forward.1} parent=63 // pred_fallthru
        _
      // Predicated region
      $region69: #{vonet_forward.1} parent=63 // pred_check
        %p524 = pneg %p73
      $region70: #{vonet_forward.1} parent=63 // pred_check_branch
        %526 = sbr.rel (%p524) target = $region72
      $region71: #{vonet_forward.1} parent=63 // pred_region
        %p527 = scmp.lt.s32.totalorder %s27, 1
        %s528 = scalar_select %p527, %s27, 1
        %s529 = smul.addr %s528, 2
        %s530 = smul.addr %s529, 2
        %s531 = scalar_lea.vmem %s1, %s530
      $region72: #{vonet_forward.1} parent=63 // pred_fallthru
        _
    $region64: #{vonet_forward.1} parent=5 // pred_fallthru
      _
    %p532 = scmp.le.s32.totalorder 1, %s27
    %p533 = scmp.lt.s32.totalorder %s27, 3
    %p534 = pnand %p532, %p533
    %p535 = pneg %p534
    // Predicated region
    $region73: #{vonet_forward.1} parent=5 // pred_check
      _
    $region74: #{vonet_forward.1} parent=5 // pred_check_branch
      %537 = sbr.rel (%p534) target = $region76
    $region75: #{vonet_forward.1} parent=5 // pred_region
      %s538 = ssub.s32 %s27, 1
      %p539 = scmp.lt.s32.totalorder %s32, 1
      %s540 = scalar_select %p539, %s32, 1
      %s541 = smul.addr %s540, 2
      %s542 = smul.addr %s541, 4
      %s543 = scalar_lea.vmem %s0, %s542
      %p544 = pneg %p53
      %p545 = pneg %p50
      %p546 = scmp.lt.s32.totalorder %s32, 1
      %s547 = scalar_select %p546, %s32, 1
      %s548 = smul.addr %s547, 2
      %s549 = smul.addr %s548, 2
      %s550 = scalar_lea.vmem %s1, %s549
      %p551 = pneg %p79
      %p552 = pneg %p76
      %p553 = pneg %p100
      %p554 = pneg %p97
      %p555 = pneg %p121
      %p556 = pneg %p118
      %p557 = pneg %p142
      %p558 = pneg %p139
      %p559 = pneg %p163
      %p560 = pneg %p160
      %p561 = pneg %p184
      %p562 = pneg %p181
      %p563 = pneg %p205
      %p564 = pneg %p202
      %p565 = pneg %p226
      %p566 = pneg %p223
      %p567 = pneg %p247
      %p568 = pneg %p244
      %p569 = pneg %p268
      %p570 = pneg %p265
      %p571 = pneg %p289
      %p572 = pneg %p286
      %p573 = pneg %p310
      %p574 = pneg %p307
      %p575 = pneg %p331
      %p576 = pneg %p328
      %p577 = pneg %p357
      %p578 = pneg %p354
      %p579 = scmp.lt.s32.totalorder %s32, 1
      %s580 = scalar_select %p579, %s32, 1
      %s581 = smul.addr %s580, 2
      %s582 = smul.addr %s581, 2
      %s583 = scalar_lea.vmem %s14, %s582
      %p584 = pneg %p383
      %p585 = pneg %p380
      %p586 = scmp.lt.s32.totalorder %s32, 1
      %s587 = scalar_select %p586, %s32, 1
      %s588 = smul.addr %s587, 2
      %s589 = smul.addr %s588, 2
      %s590 = scalar_lea.vmem %s15, %s589
      %p591 = pneg %p409
      %p592 = pneg %p406
      %p593 = scmp.lt.s32.totalorder %s32, 1
      %s594 = scalar_select %p593, %s32, 1
      %s595 = smul.addr %s594, 2
      %s596 = scalar_lea.vmem %s16, %s595
      %p597 = pneg %p435
      %p598 = pneg %p432
      %p599 = scmp.lt.s32.totalorder %s32, 1
      %s600 = scalar_select %p599, %s32, 1
      %s601 = smul.addr %s600, 4
      %s602 = smul.addr %s601, 8
      %s603 = scalar_lea.vmem %s17, %s602
      %p604 = pneg %p461
      %p605 = pneg %p458
      %p606 = scmp.lt.s32.totalorder %s32, 1
      %s607 = scalar_select %p606, %s32, 1
      %s608 = smul.addr %s607, 2
      %s609 = smul.addr %s608, 4
      %s610 = scalar_lea.vmem %s18, %s609
      %p611 = scmp.lt.s32.totalorder %s32, 1
      %s612 = scalar_select %p611, %s32, 1
      %s613 = smul.addr %s612, 2
      %s614 = smul.addr %s613, 4
      %s615 = scalar_lea.vmem %s0, %s614
      %p616 = scmp.lt.s32.totalorder %s32, 1
      %s617 = scalar_select %p616, %s32, 1
      %s618 = smul.addr %s617, 2
      %s619 = smul.addr %s618, 2
      %s620 = scalar_lea.vmem %s1, %s619
      %p621 = scmp.lt.s32.totalorder %s32, 1
      %s622 = scalar_select %p621, %s32, 1
      %s623 = smul.addr %s622, 2
      %s624 = smul.addr %s623, 2
      %s625 = scalar_lea.vmem %s14, %s624
      %p626 = scmp.lt.s32.totalorder %s32, 1
      %s627 = scalar_select %p626, %s32, 1
      %s628 = smul.addr %s627, 2
      %s629 = smul.addr %s628, 2
      %s630 = scalar_lea.vmem %s15, %s629
      %p631 = scmp.lt.s32.totalorder %s32, 1
      %s632 = scalar_select %p631, %s32, 1
      %s633 = smul.addr %s632, 2
      %s634 = scalar_lea.vmem %s16, %s633
      %p635 = scmp.lt.s32.totalorder %s32, 1
      %s636 = scalar_select %p635, %s32, 1
      %s637 = smul.addr %s636, 4
      %s638 = smul.addr %s637, 8
      %s639 = scalar_lea.vmem %s17, %s638
      %p640 = scmp.lt.s32.totalorder %s32, 1
      %s641 = scalar_select %p640, %s32, 1
      %s642 = smul.addr %s641, 2
      %s643 = smul.addr %s642, 4
      %s644 = scalar_lea.vmem %s18, %s643
      %645 = vst [vmem:[#allocation2] sm:$0xff] 0.0
      %646 = vst [vmem:[#allocation2 + $0x8] sm:$0xff] 0.0
      %647 = vst [vmem:[#allocation2 + $0x10] sm:$0xff] 0.0
      %648 = vst [vmem:[#allocation2 + $0x18] sm:$0xff] 0.0
      %649 = vst [vmem:[#allocation2 + $0x20] sm:$0xff] 0.0
      %650 = vst [vmem:[#allocation2 + $0x28] sm:$0xff] 0.0
      %651 = vst [vmem:[#allocation2 + $0x30] sm:$0xff] 0.0
      %652 = vst [vmem:[#allocation2 + $0x38] sm:$0xff] 0.0
      %v653 = vlaneseq
      %v654 = vand.u32 %v653, 127
      %v655 = vadd.s32 %v654, 128
      %vm656 = vcmp.lt.s32.totalorder %v654, 0
      %v657 = vsub.s32 0, %v654
      %v658 = vsel %vm656, %v657, %v654
      %v659 = vshrl.u32 %v658, 4
      %v660 = vand.u32 %v658, 15
      %v661 = vsub.s32 0, %v660
      %v662 = vsel %vm656, %v661, %v660
      %vm663 = vcmp.lt.s32.totalorder %v655, 0
      %v664 = vsub.s32 0, %v655
      %v665 = vsel %vm663, %v664, %v655
      %v666 = vshrl.u32 %v665, 4
      %v667 = vand.u32 %v665, 15
      %v668 = vsub.s32 0, %v667
      %v669 = vsel %vm663, %v668, %v667
      %vm670 = vcmp.ne.s32.totalorder %v662, 0
      %vm671 = vcmp.ne.s32.totalorder %v669, 0
      %vm672 = vcmp.lt.s32.totalorder %v662, 0
      %vm673 = vcmp.lt.s32.totalorder %v669, 0
      %vm674 = vmand %vm672, %vm670
      %vm675 = vmand %vm673, %vm671
      %v676 = vadd.s32 %v662, 16
      %v677 = vadd.s32 %v669, 16
      %v678 = vsel %vm674, %v676, %v662
      %v679 = vsel %vm675, %v677, %v669
      %vm680 = vcmp.ge.s32.totalorder %v678, 1
      %vm681 = vcmp.ge.s32.totalorder %v679, 1
      %vm682 = vcmp.lt.s32.totalorder %v678, 15
      %vm683 = vcmp.lt.s32.totalorder %v679, 15
      %v684 = vld [vmem:[%s620] sm:$0xf]
      %v687 = vunpack.c.l.s4 1983009808
      %v688 = vunpack.c.0.s8 %v687
      %v689 = vlaneseq
      %v690 = vshrl.u32 %v689, 7
      %v691 = vsub.s32 %v688, %v690
      %v692 = vrot.slane %v684, %v691
      %v693 = vcombine.high %v692, %v692
      %696 = vst [vmem:[#allocation2 + $0x8] sm:$0x3] %v692
      %697 = vst [vmem:[#allocation2 + $0x10] sm:$0x3] %v693
      %v698 = vld [vmem:[%s2] sm:$0x3]
      %v699 = vld [vmem:[#allocation2] sm:$0x3]
      %v700 = vld [vmem:[#allocation2 + $0x8] sm:$0x3]
      %v701 = vld [vmem:[#allocation2 + $0x10] sm:$0x3]
      %v702 = vsel %vm680, 1, 0
      %v703 = vsel %vm681, 1, 0
      %vm704 = vcmp.eq.s32.totalorder %v702, 1
      %vm705 = vcmp.eq.s32.totalorder %v703, 1
      %709 = vrot.lane.b32.xlu0 %v699, 17
      %v710 = vpop.permute.xlu0 %709
      %711 = vrot.lane.b32.xlu0 %v700, 17
      %v712 = vpop.permute.xlu0 %711
      %713 = vrot.lane.b32.xlu0 %v701, 17
      %v714 = vpop.permute.xlu0 %713
      %vm715 = vcmask 138240
      %v716 = vsel %vm715, %v710, %v712
      %v717 = vsel %vm715, %v712, %v714
      %v720 = vsel %vm704, %v716, 0.0
      %v721 = vsel %vm705, %v717, 0.0
      %s722 = scalar_lea.vmem %s2, 2
      %v723 = vld [vmem:[%s722] sm:$0x3]
      %724 = vrot.lane.b32.xlu0 %v699, 16
      %v725 = vpop.permute.xlu0 %724
      %726 = vrot.lane.b32.xlu0 %v700, 16
      %v727 = vpop.permute.xlu0 %726
      %728 = vrot.lane.b32.xlu0 %v701, 16
      %v729 = vpop.permute.xlu0 %728
      %vm730 = vcmask 130048
      %v731 = vsel %vm730, %v725, %v727
      %v732 = vsel %vm730, %v727, %v729
      %vm733 = vcmask 15360
      %v735 = vsel %vm733, %v723, 0
      %vm737 = vcmask 1041408
      %v738 = vsel %vm737, %v731, 0
      %v740 = vsel %vm737, %v732, 0
      %742 = vmatprep.subr.mxu0 %v740
      %743 = vmatpush1.msra.mxu0 %v738
      %744 = vmatprep.subr.mxu0 0.0
      %745 = vmatpush1.msra.mxu0 0.0
      %746 = vmatprep.subr.mxu0 0.0
      %747 = vmatpush1.msra.mxu0 0.0
      %748 = vmatprep.subr.mxu0 0.0
      %749 = vmatpush1.msra.mxu0 0.0
      %750 = vmatprep.subr.mxu0 0.0
      %751 = vmatpush1.msra.mxu0 0.0
      %752 = vmatprep.subr.mxu0 0.0
      %753 = vmatpush1.msra.mxu0 0.0
      %754 = vmatprep.subr.mxu0 0.0
      %755 = vmatpush1.msra.mxu0 0.0
      %756 = vmatprep.subr.mxu0 0.0
      %757 = vmatpush1.msra.mxu0 0.0
      %758 = vmatprep.subr.mxu0 0.0
      %759 = vmatpush1.msra.mxu0 0.0
      %760 = vmatprep.subr.mxu0 0.0
      %761 = vmatpush1.msra.mxu0 0.0
      %762 = vmatprep.subr.mxu0 0.0
      %763 = vmatpush1.msra.mxu0 0.0
      %764 = vmatprep.subr.mxu0 0.0
      %765 = vmatpush1.msra.mxu0 0.0
      %766 = vmatprep.subr.mxu0 0.0
      %767 = vmatpush1.msra.mxu0 0.0
      %768 = vmatprep.subr.mxu0 0.0
      %769 = vmatpush1.msra.mxu0 0.0
      %770 = vmatprep.subr.mxu0 0.0
      %771 = vmatpush1.msra.mxu0 0.0
      %772 = vmatprep.subr.mxu0 0.0
      %773 = vmatpush1.msra.mxu0 0.0
      %774 = vmatprep.subr.mxu0 0.0
      %775 = vmatpush1.msra.mxu0 0.0
      %776 = vmatprep.subr.mxu0 0.0
      %777 = vmatpush1.msra.mxu0 0.0
      %778 = vmatprep.subr.mxu0 0.0
      %779 = vmatpush1.msra.mxu0 0.0
      %780 = vmatprep.subr.mxu0 0.0
      %781 = vmatpush1.msra.mxu0 0.0
      %782 = vmatprep.subr.mxu0 0.0
      %783 = vmatpush1.msra.mxu0 0.0
      %784 = vmatprep.subr.mxu0 0.0
      %785 = vmatpush1.msra.mxu0 0.0
      %786 = vmatprep.subr.mxu0 0.0
      %787 = vmatpush1.msra.mxu0 0.0
      %788 = vmatprep.subr.mxu0 0.0
      %789 = vmatpush1.msra.mxu0 0.0
      %790 = vmatprep.subr.mxu0 0.0
      %791 = vmatpush1.msra.mxu0 0.0
      %792 = vmatprep.subr.mxu0 0.0
      %793 = vmatpush1.msra.mxu0 0.0
      %794 = vmatprep.subr.mxu0 0.0
      %795 = vmatpush1.msra.mxu0 0.0
      %796 = vmatprep.subr.mxu0 0.0
      %797 = vmatpush1.msra.mxu0 0.0
      %798 = vmatprep.subr.mxu0 0.0
      %799 = vmatpush1.msra.mxu0 0.0
      %800 = vmatprep.subr.mxu0 0.0
      %801 = vmatpush1.msra.mxu0 0.0
      %802 = vmatprep.subr.mxu0 0.0
      %803 = vmatpush1.msra.mxu0 0.0
      %804 = vmatprep.subr.mxu0 0.0
      %805 = vmatpush1.msra.mxu0 0.0
      %806 = vmatprep.mubr.f32.mxu0 0.0
      %807 = vmatmul.mubr.f32.gmra.mrb[0].mxu0 %v735
      %v808 = vpop.f32.mrb[0].mxu0
      %v809 = vadd.f32 0.0, %v808
      %v810 = vpop.f32.mrb[0].mxu0
      %v811 = vadd.f32 0.0, %v810
      %812 = vdwg.mxu0
      %v814 = vsel %vm733, %v698, 0
      %v817 = vsel %vm737, %v720, 0
      %v820 = vsel %vm737, %v721, 0
      %822 = vmatprep.subr.mxu0 %v820
      %823 = vmatpush1.msra.mxu0 %v817
      %824 = vmatprep.subr.mxu0 0.0
      %825 = vmatpush1.msra.mxu0 0.0
      %826 = vmatprep.subr.mxu0 0.0
      %827 = vmatpush1.msra.mxu0 0.0
      %828 = vmatprep.subr.mxu0 0.0
      %829 = vmatpush1.msra.mxu0 0.0
      %830 = vmatprep.subr.mxu0 0.0
      %831 = vmatpush1.msra.mxu0 0.0
      %832 = vmatprep.subr.mxu0 0.0
      %833 = vmatpush1.msra.mxu0 0.0
      %834 = vmatprep.subr.mxu0 0.0
      %835 = vmatpush1.msra.mxu0 0.0
      %836 = vmatprep.subr.mxu0 0.0
      %837 = vmatpush1.msra.mxu0 0.0
      %838 = vmatprep.subr.mxu0 0.0
      %839 = vmatpush1.msra.mxu0 0.0
      %840 = vmatprep.subr.mxu0 0.0
      %841 = vmatpush1.msra.mxu0 0.0
      %842 = vmatprep.subr.mxu0 0.0
      %843 = vmatpush1.msra.mxu0 0.0
      %844 = vmatprep.subr.mxu0 0.0
      %845 = vmatpush1.msra.mxu0 0.0
      %846 = vmatprep.subr.mxu0 0.0
      %847 = vmatpush1.msra.mxu0 0.0
      %848 = vmatprep.subr.mxu0 0.0
      %849 = vmatpush1.msra.mxu0 0.0
      %850 = vmatprep.subr.mxu0 0.0
      %851 = vmatpush1.msra.mxu0 0.0
      %852 = vmatprep.subr.mxu0 0.0
      %853 = vmatpush1.msra.mxu0 0.0
      %854 = vmatprep.subr.mxu0 0.0
      %855 = vmatpush1.msra.mxu0 0.0
      %856 = vmatprep.subr.mxu0 0.0
      %857 = vmatpush1.msra.mxu0 0.0
      %858 = vmatprep.subr.mxu0 0.0
      %859 = vmatpush1.msra.mxu0 0.0
      %860 = vmatprep.subr.mxu0 0.0
      %861 = vmatpush1.msra.mxu0 0.0
      %862 = vmatprep.subr.mxu0 0.0
      %863 = vmatpush1.msra.mxu0 0.0
      %864 = vmatprep.subr.mxu0 0.0
      %865 = vmatpush1.msra.mxu0 0.0
      %866 = vmatprep.subr.mxu0 0.0
      %867 = vmatpush1.msra.mxu0 0.0
      %868 = vmatprep.subr.mxu0 0.0
      %869 = vmatpush1.msra.mxu0 0.0
      %870 = vmatprep.subr.mxu0 0.0
      %871 = vmatpush1.msra.mxu0 0.0
      %872 = vmatprep.subr.mxu0 0.0
      %873 = vmatpush1.msra.mxu0 0.0
      %874 = vmatprep.subr.mxu0 0.0
      %875 = vmatpush1.msra.mxu0 0.0
      %876 = vmatprep.subr.mxu0 0.0
      %877 = vmatpush1.msra.mxu0 0.0
      %878 = vmatprep.subr.mxu0 0.0
      %879 = vmatpush1.msra.mxu0 0.0
      %880 = vmatprep.subr.mxu0 0.0
      %881 = vmatpush1.msra.mxu0 0.0
      %882 = vmatprep.subr.mxu0 0.0
      %883 = vmatpush1.msra.mxu0 0.0
      %884 = vmatprep.subr.mxu0 0.0
      %885 = vmatpush1.msra.mxu0 0.0
      %886 = vmatprep.mubr.f32.mxu0 0.0
      %887 = vmatmul.mubr.f32.gmra.mrb[0].mxu0 %v814
      %v888 = vpop.f32.mrb[0].mxu0
      %v889 = vadd.f32 %v809, %v888
      %v890 = vpop.f32.mrb[0].mxu0
      %v891 = vadd.f32 %v811, %v890
      %892 = vdwg.mxu0
      %s893 = scalar_lea.vmem %s2, 4
      %v894 = vld [vmem:[%s893] sm:$0x3]
      %v895 = vsel %vm682, 1, 0
      %v896 = vsel %vm683, 1, 0
      %vm897 = vcmp.eq.s32.totalorder %v895, 1
      %vm898 = vcmp.eq.s32.totalorder %v896, 1
      %899 = vrot.lane.b32.xlu0 %v699, 15
      %v900 = vpop.permute.xlu0 %899
      %901 = vrot.lane.b32.xlu0 %v700, 15
      %v902 = vpop.permute.xlu0 %901
      %903 = vrot.lane.b32.xlu0 %v701, 15
      %v904 = vpop.permute.xlu0 %903
      %vm905 = vcmask 121856
      %v906 = vsel %vm905, %v900, %v902
      %v907 = vsel %vm905, %v902, %v904
      %v910 = vsel %vm897, %v906, 0.0
      %v911 = vsel %vm898, %v907, 0.0
      %v913 = vsel %vm733, %v894, 0
      %v916 = vsel %vm737, %v910, 0
      %v919 = vsel %vm737, %v911, 0
      %921 = vmatprep.subr.mxu0 %v919
      %922 = vmatpush1.msra.mxu0 %v916
      %923 = vmatprep.subr.mxu0 0.0
      %924 = vmatpush1.msra.mxu0 0.0
      %925 = vmatprep.subr.mxu0 0.0
      %926 = vmatpush1.msra.mxu0 0.0
      %927 = vmatprep.subr.mxu0 0.0
      %928 = vmatpush1.msra.mxu0 0.0
      %929 = vmatprep.subr.mxu0 0.0
      %930 = vmatpush1.msra.mxu0 0.0
      %931 = vmatprep.subr.mxu0 0.0
      %932 = vmatpush1.msra.mxu0 0.0
      %933 = vmatprep.subr.mxu0 0.0
      %934 = vmatpush1.msra.mxu0 0.0
      %935 = vmatprep.subr.mxu0 0.0
      %936 = vmatpush1.msra.mxu0 0.0
      %937 = vmatprep.subr.mxu0 0.0
      %938 = vmatpush1.msra.mxu0 0.0
      %939 = vmatprep.subr.mxu0 0.0
      %940 = vmatpush1.msra.mxu0 0.0
      %941 = vmatprep.subr.mxu0 0.0
      %942 = vmatpush1.msra.mxu0 0.0
      %943 = vmatprep.subr.mxu0 0.0
      %944 = vmatpush1.msra.mxu0 0.0
      %945 = vmatprep.subr.mxu0 0.0
      %946 = vmatpush1.msra.mxu0 0.0
      %947 = vmatprep.subr.mxu0 0.0
      %948 = vmatpush1.msra.mxu0 0.0
      %949 = vmatprep.subr.mxu0 0.0
      %950 = vmatpush1.msra.mxu0 0.0
      %951 = vmatprep.subr.mxu0 0.0
      %952 = vmatpush1.msra.mxu0 0.0
      %953 = vmatprep.subr.mxu0 0.0
      %954 = vmatpush1.msra.mxu0 0.0
      %955 = vmatprep.subr.mxu0 0.0
      %956 = vmatpush1.msra.mxu0 0.0
      %957 = vmatprep.subr.mxu0 0.0
      %958 = vmatpush1.msra.mxu0 0.0
      %959 = vmatprep.subr.mxu0 0.0
      %960 = vmatpush1.msra.mxu0 0.0
      %961 = vmatprep.subr.mxu0 0.0
      %962 = vmatpush1.msra.mxu0 0.0
      %963 = vmatprep.subr.mxu0 0.0
      %964 = vmatpush1.msra.mxu0 0.0
      %965 = vmatprep.subr.mxu0 0.0
      %966 = vmatpush1.msra.mxu0 0.0
      %967 = vmatprep.subr.mxu0 0.0
      %968 = vmatpush1.msra.mxu0 0.0
      %969 = vmatprep.subr.mxu0 0.0
      %970 = vmatpush1.msra.mxu0 0.0
      %971 = vmatprep.subr.mxu0 0.0
      %972 = vmatpush1.msra.mxu0 0.0
      %973 = vmatprep.subr.mxu0 0.0
      %974 = vmatpush1.msra.mxu0 0.0
      %975 = vmatprep.subr.mxu0 0.0
      %976 = vmatpush1.msra.mxu0 0.0
      %977 = vmatprep.subr.mxu0 0.0
      %978 = vmatpush1.msra.mxu0 0.0
      %979 = vmatprep.subr.mxu0 0.0
      %980 = vmatpush1.msra.mxu0 0.0
      %981 = vmatprep.subr.mxu0 0.0
      %982 = vmatpush1.msra.mxu0 0.0
      %983 = vmatprep.subr.mxu0 0.0
      %984 = vmatpush1.msra.mxu0 0.0
      %985 = vmatprep.mubr.f32.mxu0 0.0
      %986 = vmatmul.mubr.f32.gmra.mrb[0].mxu0 %v913
      %v987 = vpop.f32.mrb[0].mxu0
      %v988 = vadd.f32 0.0, %v987
      %v989 = vpop.f32.mrb[0].mxu0
      %v990 = vadd.f32 0.0, %v989
      %991 = vdwg.mxu0
      %v992 = vadd.f32 %v889, %v988
      %v993 = vadd.f32 %v891, %v990
      %s994 = scalar_lea.vmem %s2, 6
      %v995 = vld [vmem:[%s994] sm:$0x3]
      %996 = vrot.lane.b32.xlu0 %v699, 1
      %v997 = vpop.permute.xlu0 %996
      %998 = vrot.lane.b32.xlu0 %v700, 1
      %v999 = vpop.permute.xlu0 %998
      %1000 = vrot.lane.b32.xlu0 %v701, 1
      %v1001 = vpop.permute.xlu0 %1000
      %vm1002 = vcmask 7168
      %v1003 = vsel %vm1002, %v997, %v999
      %v1004 = vsel %vm1002, %v999, %v1001
      %v1007 = vsel %vm704, %v1003, 0.0
      %v1008 = vsel %vm705, %v1004, 0.0
      %v1010 = vsel %vm733, %v995, 0
      %v1013 = vsel %vm737, %v1007, 0
      %v1016 = vsel %vm737, %v1008, 0
      %1018 = vmatprep.subr.mxu0 %v1016
      %1019 = vmatpush1.msra.mxu0 %v1013
      %1020 = vmatprep.subr.mxu0 0.0
      %1021 = vmatpush1.msra.mxu0 0.0
      %1022 = vmatprep.subr.mxu0 0.0
      %1023 = vmatpush1.msra.mxu0 0.0
      %1024 = vmatprep.subr.mxu0 0.0
      %1025 = vmatpush1.msra.mxu0 0.0
      %1026 = vmatprep.subr.mxu0 0.0
      %1027 = vmatpush1.msra.mxu0 0.0
      %1028 = vmatprep.subr.mxu0 0.0
      %1029 = vmatpush1.msra.mxu0 0.0
      %1030 = vmatprep.subr.mxu0 0.0
      %1031 = vmatpush1.msra.mxu0 0.0
      %1032 = vmatprep.subr.mxu0 0.0
      %1033 = vmatpush1.msra.mxu0 0.0
      %1034 = vmatprep.subr.mxu0 0.0
      %1035 = vmatpush1.msra.mxu0 0.0
      %1036 = vmatprep.subr.mxu0 0.0
      %1037 = vmatpush1.msra.mxu0 0.0
      %1038 = vmatprep.subr.mxu0 0.0
      %1039 = vmatpush1.msra.mxu0 0.0
      %1040 = vmatprep.subr.mxu0 0.0
      %1041 = vmatpush1.msra.mxu0 0.0
      %1042 = vmatprep.subr.mxu0 0.0
      %1043 = vmatpush1.msra.mxu0 0.0
      %1044 = vmatprep.subr.mxu0 0.0
      %1045 = vmatpush1.msra.mxu0 0.0
      %1046 = vmatprep.subr.mxu0 0.0
      %1047 = vmatpush1.msra.mxu0 0.0
      %1048 = vmatprep.subr.mxu0 0.0
      %1049 = vmatpush1.msra.mxu0 0.0
      %1050 = vmatprep.subr.mxu0 0.0
      %1051 = vmatpush1.msra.mxu0 0.0
      %1052 = vmatprep.subr.mxu0 0.0
      %1053 = vmatpush1.msra.mxu0 0.0
      %1054 = vmatprep.subr.mxu0 0.0
      %1055 = vmatpush1.msra.mxu0 0.0
      %1056 = vmatprep.subr.mxu0 0.0
      %1057 = vmatpush1.msra.mxu0 0.0
      %1058 = vmatprep.subr.mxu0 0.0
      %1059 = vmatpush1.msra.mxu0 0.0
      %1060 = vmatprep.subr.mxu0 0.0
      %1061 = vmatpush1.msra.mxu0 0.0
      %1062 = vmatprep.subr.mxu0 0.0
      %1063 = vmatpush1.msra.mxu0 0.0
      %1064 = vmatprep.subr.mxu0 0.0
      %1065 = vmatpush1.msra.mxu0 0.0
      %1066 = vmatprep.subr.mxu0 0.0
      %1067 = vmatpush1.msra.mxu0 0.0
      %1068 = vmatprep.subr.mxu0 0.0
      %1069 = vmatpush1.msra.mxu0 0.0
      %1070 = vmatprep.subr.mxu0 0.0
      %1071 = vmatpush1.msra.mxu0 0.0
      %1072 = vmatprep.subr.mxu0 0.0
      %1073 = vmatpush1.msra.mxu0 0.0
      %1074 = vmatprep.subr.mxu0 0.0
      %1075 = vmatpush1.msra.mxu0 0.0
      %1076 = vmatprep.subr.mxu0 0.0
      %1077 = vmatpush1.msra.mxu0 0.0
      %1078 = vmatprep.subr.mxu0 0.0
      %1079 = vmatpush1.msra.mxu0 0.0
      %1080 = vmatprep.subr.mxu0 0.0
      %1081 = vmatpush1.msra.mxu0 0.0
      %1082 = vmatprep.mubr.f32.mxu0 0.0
      %1083 = vmatmul.mubr.f32.gmra.mrb[0].mxu0 %v1010
      %v1084 = vpop.f32.mrb[0].mxu0
      %v1085 = vadd.f32 0.0, %v1084
      %v1086 = vpop.f32.mrb[0].mxu0
      %v1087 = vadd.f32 0.0, %v1086
      %1088 = vdwg.mxu0
      %v1089 = vadd.f32 %v992, %v1085
      %v1090 = vadd.f32 %v993, %v1087
      %s1091 = scalar_lea.vmem %s2, 8
      %v1092 = vld [vmem:[%s1091] sm:$0x3]
      %v1094 = vsel %vm733, %v1092, 0
      %v1096 = vsel %vm737, %v700, 0
      %v1098 = vsel %vm737, %v701, 0
      %1100 = vmatprep.subr.mxu0 %v1098
      %1101 = vmatpush1.msra.mxu0 %v1096
      %1102 = vmatprep.subr.mxu0 0.0
      %1103 = vmatpush1.msra.mxu0 0.0
      %1104 = vmatprep.subr.mxu0 0.0
      %1105 = vmatpush1.msra.mxu0 0.0
      %1106 = vmatprep.subr.mxu0 0.0
      %1107 = vmatpush1.msra.mxu0 0.0
      %1108 = vmatprep.subr.mxu0 0.0
      %1109 = vmatpush1.msra.mxu0 0.0
      %1110 = vmatprep.subr.mxu0 0.0
      %1111 = vmatpush1.msra.mxu0 0.0
      %1112 = vmatprep.subr.mxu0 0.0
      %1113 = vmatpush1.msra.mxu0 0.0
      %1114 = vmatprep.subr.mxu0 0.0
      %1115 = vmatpush1.msra.mxu0 0.0
      %1116 = vmatprep.subr.mxu0 0.0
      %1117 = vmatpush1.msra.mxu0 0.0
      %1118 = vmatprep.subr.mxu0 0.0
      %1119 = vmatpush1.msra.mxu0 0.0
      %1120 = vmatprep.subr.mxu0 0.0
      %1121 = vmatpush1.msra.mxu0 0.0
      %1122 = vmatprep.subr.mxu0 0.0
      %1123 = vmatpush1.msra.mxu0 0.0
      %1124 = vmatprep.subr.mxu0 0.0
      %1125 = vmatpush1.msra.mxu0 0.0
      %1126 = vmatprep.subr.mxu0 0.0
      %1127 = vmatpush1.msra.mxu0 0.0
      %1128 = vmatprep.subr.mxu0 0.0
      %1129 = vmatpush1.msra.mxu0 0.0
      %1130 = vmatprep.subr.mxu0 0.0
      %1131 = vmatpush1.msra.mxu0 0.0
      %1132 = vmatprep.subr.mxu0 0.0
      %1133 = vmatpush1.msra.mxu0 0.0
      %1134 = vmatprep.subr.mxu0 0.0
      %1135 = vmatpush1.msra.mxu0 0.0
      %1136 = vmatprep.subr.mxu0 0.0
      %1137 = vmatpush1.msra.mxu0 0.0
      %1138 = vmatprep.subr.mxu0 0.0
      %1139 = vmatpush1.msra.mxu0 0.0
      %1140 = vmatprep.subr.mxu0 0.0
      %1141 = vmatpush1.msra.mxu0 0.0
      %1142 = vmatprep.subr.mxu0 0.0
      %1143 = vmatpush1.msra.mxu0 0.0
      %1144 = vmatprep.subr.mxu0 0.0
      %1145 = vmatpush1.msra.mxu0 0.0
      %1146 = vmatprep.subr.mxu0 0.0
      %1147 = vmatpush1.msra.mxu0 0.0
      %1148 = vmatprep.subr.mxu0 0.0
      %1149 = vmatpush1.msra.mxu0 0.0
      %1150 = vmatprep.subr.mxu0 0.0
      %1151 = vmatpush1.msra.mxu0 0.0
      %1152 = vmatprep.subr.mxu0 0.0
      %1153 = vmatpush1.msra.mxu0 0.0
      %1154 = vmatprep.subr.mxu0 0.0
      %1155 = vmatpush1.msra.mxu0 0.0
      %1156 = vmatprep.subr.mxu0 0.0
      %1157 = vmatpush1.msra.mxu0 0.0
      %1158 = vmatprep.subr.mxu0 0.0
      %1159 = vmatpush1.msra.mxu0 0.0
      %1160 = vmatprep.subr.mxu0 0.0
      %1161 = vmatpush1.msra.mxu0 0.0
      %1162 = vmatprep.subr.mxu0 0.0
      %1163 = vmatpush1.msra.mxu0 0.0
      %1164 = vmatprep.mubr.f32.mxu0 0.0
      %1165 = vmatmul.mubr.f32.gmra.mrb[0].mxu0 %v1094
      %v1166 = vpop.f32.mrb[0].mxu0
      %v1167 = vadd.f32 0.0, %v1166
      %v1168 = vpop.f32.mrb[0].mxu0
      %v1169 = vadd.f32 0.0, %v1168
      %1170 = vdwg.mxu0
      %v1171 = vadd.f32 %v1089, %v1167
      %v1172 = vadd.f32 %v1090, %v1169
      %s1173 = scalar_lea.vmem %s2, 10
      %v1174 = vld [vmem:[%s1173] sm:$0x3]
      %v1175 = vld [vmem:[#allocation2 + $0x8] sm:$0x3]
      %v1176 = vld [vmem:[#allocation2 + $0x10] sm:$0x3]
      %v1177 = vld [vmem:[#allocation2 + $0x18] sm:$0x3]
      %1181 = vrot.lane.b32.xlu0 %v1175, 127
      %v1182 = vpop.permute.xlu0 %1181
      %1183 = vrot.lane.b32.xlu0 %v1176, 127
      %v1184 = vpop.permute.xlu0 %1183
      %1185 = vrot.lane.b32.xlu0 %v1177, 127
      %v1186 = vpop.permute.xlu0 %1185
      %vm1187 = vcmask 1039360
      %v1188 = vsel %vm1187, %v1182, %v1184
      %v1189 = vsel %vm1187, %v1184, %v1186
      %v1192 = vsel %vm897, %v1188, 0.0
      %v1193 = vsel %vm898, %v1189, 0.0
      %v1195 = vsel %vm733, %v1174, 0
      %v1198 = vsel %vm737, %v1192, 0
      %v1201 = vsel %vm737, %v1193, 0
      %1203 = vmatprep.subr.mxu0 %v1201
      %1204 = vmatpush1.msra.mxu0 %v1198
      %1205 = vmatprep.subr.mxu0 0.0
      %1206 = vmatpush1.msra.mxu0 0.0
      %1207 = vmatprep.subr.mxu0 0.0
      %1208 = vmatpush1.msra.mxu0 0.0
      %1209 = vmatprep.subr.mxu0 0.0
      %1210 = vmatpush1.msra.mxu0 0.0
      %1211 = vmatprep.subr.mxu0 0.0
      %1212 = vmatpush1.msra.mxu0 0.0
      %1213 = vmatprep.subr.mxu0 0.0
      %1214 = vmatpush1.msra.mxu0 0.0
      %1215 = vmatprep.subr.mxu0 0.0
      %1216 = vmatpush1.msra.mxu0 0.0
      %1217 = vmatprep.subr.mxu0 0.0
      %1218 = vmatpush1.msra.mxu0 0.0
      %1219 = vmatprep.subr.mxu0 0.0
      %1220 = vmatpush1.msra.mxu0 0.0
      %1221 = vmatprep.subr.mxu0 0.0
      %1222 = vmatpush1.msra.mxu0 0.0
      %1223 = vmatprep.subr.mxu0 0.0
      %1224 = vmatpush1.msra.mxu0 0.0
      %1225 = vmatprep.subr.mxu0 0.0
      %1226 = vmatpush1.msra.mxu0 0.0
      %1227 = vmatprep.subr.mxu0 0.0
      %1228 = vmatpush1.msra.mxu0 0.0
      %1229 = vmatprep.subr.mxu0 0.0
      %1230 = vmatpush1.msra.mxu0 0.0
      %1231 = vmatprep.subr.mxu0 0.0
      %1232 = vmatpush1.msra.mxu0 0.0
      %1233 = vmatprep.subr.mxu0 0.0
      %1234 = vmatpush1.msra.mxu0 0.0
      %1235 = vmatprep.subr.mxu0 0.0
      %1236 = vmatpush1.msra.mxu0 0.0
      %1237 = vmatprep.subr.mxu0 0.0
      %1238 = vmatpush1.msra.mxu0 0.0
      %1239 = vmatprep.subr.mxu0 0.0
      %1240 = vmatpush1.msra.mxu0 0.0
      %1241 = vmatprep.subr.mxu0 0.0
      %1242 = vmatpush1.msra.mxu0 0.0
      %1243 = vmatprep.subr.mxu0 0.0
      %1244 = vmatpush1.msra.mxu0 0.0
      %1245 = vmatprep.subr.mxu0 0.0
      %1246 = vmatpush1.msra.mxu0 0.0
      %1247 = vmatprep.subr.mxu0 0.0
      %1248 = vmatpush1.msra.mxu0 0.0
      %1249 = vmatprep.subr.mxu0 0.0
      %1250 = vmatpush1.msra.mxu0 0.0
      %1251 = vmatprep.subr.mxu0 0.0
      %1252 = vmatpush1.msra.mxu0 0.0
      %1253 = vmatprep.subr.mxu0 0.0
      %1254 = vmatpush1.msra.mxu0 0.0
      %1255 = vmatprep.subr.mxu0 0.0
      %1256 = vmatpush1.msra.mxu0 0.0
      %1257 = vmatprep.subr.mxu0 0.0
      %1258 = vmatpush1.msra.mxu0 0.0
      %1259 = vmatprep.subr.mxu0 0.0
      %1260 = vmatpush1.msra.mxu0 0.0
      %1261 = vmatprep.subr.mxu0 0.0
      %1262 = vmatpush1.msra.mxu0 0.0
      %1263 = vmatprep.subr.mxu0 0.0
      %1264 = vmatpush1.msra.mxu0 0.0
      %1265 = vmatprep.subr.mxu0 0.0
      %1266 = vmatpush1.msra.mxu0 0.0
      %1267 = vmatprep.mubr.f32.mxu0 0.0
      %1268 = vmatmul.mubr.f32.gmra.mrb[0].mxu0 %v1195
      %v1269 = vpop.f32.mrb[0].mxu0
      %v1270 = vadd.f32 0.0, %v1269
      %v1271 = vpop.f32.mrb[0].mxu0
      %v1272 = vadd.f32 0.0, %v1271
      %1273 = vdwg.mxu0
      %v1274 = vadd.f32 %v1171, %v1270
      %v1275 = vadd.f32 %v1172, %v1272
      %s1276 = scalar_lea.vmem %s2, 12
      %v1277 = vld [vmem:[%s1276] sm:$0x3]
      %1278 = vrot.lane.b32.xlu0 %v1175, 113
      %v1279 = vpop.permute.xlu0 %1278
      %1280 = vrot.lane.b32.xlu0 %v1176, 113
      %v1281 = vpop.permute.xlu0 %1280
      %1282 = vrot.lane.b32.xlu0 %v1177, 113
      %v1283 = vpop.permute.xlu0 %1282
      %vm1284 = vcmask 924672
      %v1285 = vsel %vm1284, %v1279, %v1281
      %v1286 = vsel %vm1284, %v1281, %v1283
      %v1289 = vsel %vm704, %v1285, 0.0
      %v1290 = vsel %vm705, %v1286, 0.0
      %v1292 = vsel %vm733, %v1277, 0
      %v1295 = vsel %vm737, %v1289, 0
      %v1298 = vsel %vm737, %v1290, 0
      %1300 = vmatprep.subr.mxu0 %v1298
      %1301 = vmatpush1.msra.mxu0 %v1295
      %1302 = vmatprep.subr.mxu0 0.0
      %1303 = vmatpush1.msra.mxu0 0.0
      %1304 = vmatprep.subr.mxu0 0.0
      %1305 = vmatpush1.msra.mxu0 0.0
      %1306 = vmatprep.subr.mxu0 0.0
      %1307 = vmatpush1.msra.mxu0 0.0
      %1308 = vmatprep.subr.mxu0 0.0
      %1309 = vmatpush1.msra.mxu0 0.0
      %1310 = vmatprep.subr.mxu0 0.0
      %1311 = vmatpush1.msra.mxu0 0.0
      %1312 = vmatprep.subr.mxu0 0.0
      %1313 = vmatpush1.msra.mxu0 0.0
      %1314 = vmatprep.subr.mxu0 0.0
      %1315 = vmatpush1.msra.mxu0 0.0
      %1316 = vmatprep.subr.mxu0 0.0
      %1317 = vmatpush1.msra.mxu0 0.0
      %1318 = vmatprep.subr.mxu0 0.0
      %1319 = vmatpush1.msra.mxu0 0.0
      %1320 = vmatprep.subr.mxu0 0.0
      %1321 = vmatpush1.msra.mxu0 0.0
      %1322 = vmatprep.subr.mxu0 0.0
      %1323 = vmatpush1.msra.mxu0 0.0
      %1324 = vmatprep.subr.mxu0 0.0
      %1325 = vmatpush1.msra.mxu0 0.0
      %1326 = vmatprep.subr.mxu0 0.0
      %1327 = vmatpush1.msra.mxu0 0.0
      %1328 = vmatprep.subr.mxu0 0.0
      %1329 = vmatpush1.msra.mxu0 0.0
      %1330 = vmatprep.subr.mxu0 0.0
      %1331 = vmatpush1.msra.mxu0 0.0
      %1332 = vmatprep.subr.mxu0 0.0
      %1333 = vmatpush1.msra.mxu0 0.0
      %1334 = vmatprep.subr.mxu0 0.0
      %1335 = vmatpush1.msra.mxu0 0.0
      %1336 = vmatprep.subr.mxu0 0.0
      %1337 = vmatpush1.msra.mxu0 0.0
      %1338 = vmatprep.subr.mxu0 0.0
      %1339 = vmatpush1.msra.mxu0 0.0
      %1340 = vmatprep.subr.mxu0 0.0
      %1341 = vmatpush1.msra.mxu0 0.0
      %1342 = vmatprep.subr.mxu0 0.0
      %1343 = vmatpush1.msra.mxu0 0.0
      %1344 = vmatprep.subr.mxu0 0.0
      %1345 = vmatpush1.msra.mxu0 0.0
      %1346 = vmatprep.subr.mxu0 0.0
      %1347 = vmatpush1.msra.mxu0 0.0
      %1348 = vmatprep.subr.mxu0 0.0
      %1349 = vmatpush1.msra.mxu0 0.0
      %1350 = vmatprep.subr.mxu0 0.0
      %1351 = vmatpush1.msra.mxu0 0.0
      %1352 = vmatprep.subr.mxu0 0.0
      %1353 = vmatpush1.msra.mxu0 0.0
      %1354 = vmatprep.subr.mxu0 0.0
      %1355 = vmatpush1.msra.mxu0 0.0
      %1356 = vmatprep.subr.mxu0 0.0
      %1357 = vmatpush1.msra.mxu0 0.0
      %1358 = vmatprep.subr.mxu0 0.0
      %1359 = vmatpush1.msra.mxu0 0.0
      %1360 = vmatprep.subr.mxu0 0.0
      %1361 = vmatpush1.msra.mxu0 0.0
      %1362 = vmatprep.subr.mxu0 0.0
      %1363 = vmatpush1.msra.mxu0 0.0
      %1364 = vmatprep.mubr.f32.mxu0 0.0
      %1365 = vmatmul.mubr.f32.gmra.mrb[0].mxu0 %v1292
      %v1366 = vpop.f32.mrb[0].mxu0
      %v1367 = vadd.f32 0.0, %v1366
      %v1368 = vpop.f32.mrb[0].mxu0
      %v1369 = vadd.f32 0.0, %v1368
      %1370 = vdwg.mxu0
      %v1371 = vadd.f32 %v1274, %v1367
      %v1372 = vadd.f32 %v1275, %v1369
      %s1373 = scalar_lea.vmem %s2, 14
      %v1374 = vld [vmem:[%s1373] sm:$0x3]
      %1375 = vrot.lane.b32.xlu0 %v1175, 112
      %v1376 = vpop.permute.xlu0 %1375
      %1377 = vrot.lane.b32.xlu0 %v1176, 112
      %v1378 = vpop.permute.xlu0 %1377
      %1379 = vrot.lane.b32.xlu0 %v1177, 112
      %v1380 = vpop.permute.xlu0 %1379
      %vm1381 = vcmask 916480
      %v1382 = vsel %vm1381, %v1376, %v1378
      %v1383 = vsel %vm1381, %v1378, %v1380
      %v1385 = vsel %vm733, %v1374, 0
      %v1387 = vsel %vm737, %v1382, 0
      %v1389 = vsel %vm737, %v1383, 0
      %1391 = vmatprep.subr.mxu0 %v1389
      %1392 = vmatpush1.msra.mxu0 %v1387
      %1393 = vmatprep.subr.mxu0 0.0
      %1394 = vmatpush1.msra.mxu0 0.0
      %1395 = vmatprep.subr.mxu0 0.0
      %1396 = vmatpush1.msra.mxu0 0.0
      %1397 = vmatprep.subr.mxu0 0.0
      %1398 = vmatpush1.msra.mxu0 0.0
      %1399 = vmatprep.subr.mxu0 0.0
      %1400 = vmatpush1.msra.mxu0 0.0
      %1401 = vmatprep.subr.mxu0 0.0
      %1402 = vmatpush1.msra.mxu0 0.0
      %1403 = vmatprep.subr.mxu0 0.0
      %1404 = vmatpush1.msra.mxu0 0.0
      %1405 = vmatprep.subr.mxu0 0.0
      %1406 = vmatpush1.msra.mxu0 0.0
      %1407 = vmatprep.subr.mxu0 0.0
      %1408 = vmatpush1.msra.mxu0 0.0
      %1409 = vmatprep.subr.mxu0 0.0
      %1410 = vmatpush1.msra.mxu0 0.0
      %1411 = vmatprep.subr.mxu0 0.0
      %1412 = vmatpush1.msra.mxu0 0.0
      %1413 = vmatprep.subr.mxu0 0.0
      %1414 = vmatpush1.msra.mxu0 0.0
      %1415 = vmatprep.subr.mxu0 0.0
      %1416 = vmatpush1.msra.mxu0 0.0
      %1417 = vmatprep.subr.mxu0 0.0
      %1418 = vmatpush1.msra.mxu0 0.0
      %1419 = vmatprep.subr.mxu0 0.0
      %1420 = vmatpush1.msra.mxu0 0.0
      %1421 = vmatprep.subr.mxu0 0.0
      %1422 = vmatpush1.msra.mxu0 0.0
      %1423 = vmatprep.subr.mxu0 0.0
      %1424 = vmatpush1.msra.mxu0 0.0
      %1425 = vmatprep.subr.mxu0 0.0
      %1426 = vmatpush1.msra.mxu0 0.0
      %1427 = vmatprep.subr.mxu0 0.0
      %1428 = vmatpush1.msra.mxu0 0.0
      %1429 = vmatprep.subr.mxu0 0.0
      %1430 = vmatpush1.msra.mxu0 0.0
      %1431 = vmatprep.subr.mxu0 0.0
      %1432 = vmatpush1.msra.mxu0 0.0
      %1433 = vmatprep.subr.mxu0 0.0
      %1434 = vmatpush1.msra.mxu0 0.0
      %1435 = vmatprep.subr.mxu0 0.0
      %1436 = vmatpush1.msra.mxu0 0.0
      %1437 = vmatprep.subr.mxu0 0.0
      %1438 = vmatpush1.msra.mxu0 0.0
      %1439 = vmatprep.subr.mxu0 0.0
      %1440 = vmatpush1.msra.mxu0 0.0
      %1441 = vmatprep.subr.mxu0 0.0
      %1442 = vmatpush1.msra.mxu0 0.0
      %1443 = vmatprep.subr.mxu0 0.0
      %1444 = vmatpush1.msra.mxu0 0.0
      %1445 = vmatprep.subr.mxu0 0.0
      %1446 = vmatpush1.msra.mxu0 0.0
      %1447 = vmatprep.subr.mxu0 0.0
      %1448 = vmatpush1.msra.mxu0 0.0
      %1449 = vmatprep.subr.mxu0 0.0
      %1450 = vmatpush1.msra.mxu0 0.0
      %1451 = vmatprep.subr.mxu0 0.0
      %1452 = vmatpush1.msra.mxu0 0.0
      %1453 = vmatprep.subr.mxu0 0.0
      %1454 = vmatpush1.msra.mxu0 0.0
      %1455 = vmatprep.mubr.f32.mxu0 0.0
      %1456 = vmatmul.mubr.f32.gmra.mrb[0].mxu0 %v1385
      %v1457 = vpop.f32.mrb[0].mxu0
      %v1458 = vadd.f32 0.0, %v1457
      %v1459 = vpop.f32.mrb[0].mxu0
      %v1460 = vadd.f32 0.0, %v1459
      %1461 = vdwg.mxu0
      %v1462 = vadd.f32 %v1371, %v1458
      %v1463 = vadd.f32 %v1372, %v1460
      %s1464 = scalar_lea.vmem %s2, 16
      %v1465 = vld [vmem:[%s1464] sm:$0x3]
      %1466 = vrot.lane.b32.xlu0 %v1175, 111
      %v1467 = vpop.permute.xlu0 %1466
      %1468 = vrot.lane.b32.xlu0 %v1176, 111
      %v1469 = vpop.permute.xlu0 %1468
      %1470 = vrot.lane.b32.xlu0 %v1177, 111
      %v1471 = vpop.permute.xlu0 %1470
      %vm1472 = vcmask 908288
      %v1473 = vsel %vm1472, %v1467, %v1469
      %v1474 = vsel %vm1472, %v1469, %v1471
      %v1477 = vsel %vm897, %v1473, 0.0
      %v1478 = vsel %vm898, %v1474, 0.0
      %v1480 = vsel %vm733, %v1465, 0
      %v1483 = vsel %vm737, %v1477, 0
      %v1486 = vsel %vm737, %v1478, 0
      %1488 = vmatprep.subr.mxu0 %v1486
      %1489 = vmatpush1.msra.mxu0 %v1483
      %1490 = vmatprep.subr.mxu0 0.0
      %1491 = vmatpush1.msra.mxu0 0.0
      %1492 = vmatprep.subr.mxu0 0.0
      %1493 = vmatpush1.msra.mxu0 0.0
      %1494 = vmatprep.subr.mxu0 0.0
      %1495 = vmatpush1.msra.mxu0 0.0
      %1496 = vmatprep.subr.mxu0 0.0
      %1497 = vmatpush1.msra.mxu0 0.0
      %1498 = vmatprep.subr.mxu0 0.0
      %1499 = vmatpush1.msra.mxu0 0.0
      %1500 = vmatprep.subr.mxu0 0.0
      %1501 = vmatpush1.msra.mxu0 0.0
      %1502 = vmatprep.subr.mxu0 0.0
      %1503 = vmatpush1.msra.mxu0 0.0
      %1504 = vmatprep.subr.mxu0 0.0
      %1505 = vmatpush1.msra.mxu0 0.0
      %1506 = vmatprep.subr.mxu0 0.0
      %1507 = vmatpush1.msra.mxu0 0.0
      %1508 = vmatprep.subr.mxu0 0.0
      %1509 = vmatpush1.msra.mxu0 0.0
      %1510 = vmatprep.subr.mxu0 0.0
      %1511 = vmatpush1.msra.mxu0 0.0
      %1512 = vmatprep.subr.mxu0 0.0
      %1513 = vmatpush1.msra.mxu0 0.0
      %1514 = vmatprep.subr.mxu0 0.0
      %1515 = vmatpush1.msra.mxu0 0.0
      %1516 = vmatprep.subr.mxu0 0.0
      %1517 = vmatpush1.msra.mxu0 0.0
      %1518 = vmatprep.subr.mxu0 0.0
      %1519 = vmatpush1.msra.mxu0 0.0
      %1520 = vmatprep.subr.mxu0 0.0
      %1521 = vmatpush1.msra.mxu0 0.0
      %1522 = vmatprep.subr.mxu0 0.0
      %1523 = vmatpush1.msra.mxu0 0.0
      %1524 = vmatprep.subr.mxu0 0.0
      %1525 = vmatpush1.msra.mxu0 0.0
      %1526 = vmatprep.subr.mxu0 0.0
      %1527 = vmatpush1.msra.mxu0 0.0
      %1528 = vmatprep.subr.mxu0 0.0
      %1529 = vmatpush1.msra.mxu0 0.0
      %1530 = vmatprep.subr.mxu0 0.0
      %1531 = vmatpush1.msra.mxu0 0.0
      %1532 = vmatprep.subr.mxu0 0.0
      %1533 = vmatpush1.msra.mxu0 0.0
      %1534 = vmatprep.subr.mxu0 0.0
      %1535 = vmatpush1.msra.mxu0 0.0
      %1536 = vmatprep.subr.mxu0 0.0
      %1537 = vmatpush1.msra.mxu0 0.0
      %1538 = vmatprep.subr.mxu0 0.0
      %1539 = vmatpush1.msra.mxu0 0.0
      %1540 = vmatprep.subr.mxu0 0.0
      %1541 = vmatpush1.msra.mxu0 0.0
      %1542 = vmatprep.subr.mxu0 0.0
      %1543 = vmatpush1.msra.mxu0 0.0
      %1544 = vmatprep.subr.mxu0 0.0
      %1545 = vmatpush1.msra.mxu0 0.0
      %1546 = vmatprep.subr.mxu0 0.0
      %1547 = vmatpush1.msra.mxu0 0.0
      %1548 = vmatprep.subr.mxu0 0.0
      %1549 = vmatpush1.msra.mxu0 0.0
      %1550 = vmatprep.subr.mxu0 0.0
      %1551 = vmatpush1.msra.mxu0 0.0
      %1552 = vmatprep.mubr.f32.mxu0 0.0
      %1553 = vmatmul.mubr.f32.gmra.mrb[0].mxu0 %v1480
      %v1554 = vpop.f32.mrb[0].mxu0
      %v1555 = vadd.f32 0.0, %v1554
      %v1556 = vpop.f32.mrb[0].mxu0
      %v1557 = vadd.f32 0.0, %v1556
      %1558 = vdwg.mxu0
      %v1559 = vadd.f32 %v1462, %v1555
      %v1560 = vadd.f32 %v1463, %v1557
      %v1561 = vld [vmem:[%s3] sm:$0x3]
      %1563 = vset.pattern.permute.xlu0 0
      %1564 = vperm.xlu0 %1563, %v1561
      %v1565 = vpop.permute.xlu0 %1564
      %v1567 = vadd.f32 %v1559, %v1565
      %v1568 = vadd.f32 %v1560, %v1565
      %v1569 = vmax.f32 %v1567, 0.0
      %v1570 = vmax.f32 %v1568, 0.0
      %1571 = vst [vmem:[#allocation2 + $0x8] sm:$0x3] %v1569
      %1572 = vst [vmem:[#allocation2 + $0x10] sm:$0x3] %v1570
      %v1573 = vld [vmem:[%s4] sm:$0x3]
      %v1574 = vld [vmem:[#allocation2] sm:$0x3]
      %v1575 = vld [vmem:[#allocation2 + $0x8] sm:$0x3]
      %v1576 = vld [vmem:[#allocation2 + $0x10] sm:$0x3]
      %1580 = vrot.lane.b32.xlu0 %v1574, 17
      %v1581 = vpop.permute.xlu0 %1580
      %1582 = vrot.lane.b32.xlu0 %v1575, 17
      %v1583 = vpop.permute.xlu0 %1582
      %1584 = vrot.lane.b32.xlu0 %v1576, 17
      %v1585 = vpop.permute.xlu0 %1584
      %v1586 = vsel %vm715, %v1581, %v1583
      %v1587 = vsel %vm715, %v1583, %v1585
      %v1590 = vsel %vm704, %v1586, 0.0
      %v1591 = vsel %vm705, %v1587, 0.0
      %s1592 = scalar_lea.vmem %s4, 2
      %v1593 = vld [vmem:[%s1592] sm:$0x3]
      %1594 = vrot.lane.b32.xlu0 %v1574, 16
      %v1595 = vpop.permute.xlu0 %1594
      %1596 = vrot.lane.b32.xlu0 %v1575, 16
      %v1597 = vpop.permute.xlu0 %1596
      %1598 = vrot.lane.b32.xlu0 %v1576, 16
      %v1599 = vpop.permute.xlu0 %1598
      %v1600 = vsel %vm730, %v1595, %v1597
      %v1601 = vsel %vm730, %v1597, %v1599
      %v1603 = vsel %vm733, %v1593, 0
      %v1605 = vsel %vm737, %v1600, 0
      %v1607 = vsel %vm737, %v1601, 0
      %1609 = vmatprep.subr.mxu0 %v1607
      %1610 = vmatpush1.msra.mxu0 %v1605
      %1611 = vmatprep.subr.mxu0 0.0
      %1612 = vmatpush1.msra.mxu0 0.0
      %1613 = vmatprep.subr.mxu0 0.0
      %1614 = vmatpush1.msra.mxu0 0.0
      %1615 = vmatprep.subr.mxu0 0.0
      %1616 = vmatpush1.msra.mxu0 0.0
      %1617 = vmatprep.subr.mxu0 0.0
      %1618 = vmatpush1.msra.mxu0 0.0
      %1619 = vmatprep.subr.mxu0 0.0
      %1620 = vmatpush1.msra.mxu0 0.0
      %1621 = vmatprep.subr.mxu0 0.0
      %1622 = vmatpush1.msra.mxu0 0.0
      %1623 = vmatprep.subr.mxu0 0.0
      %1624 = vmatpush1.msra.mxu0 0.0
      %1625 = vmatprep.subr.mxu0 0.0
      %1626 = vmatpush1.msra.mxu0 0.0
      %1627 = vmatprep.subr.mxu0 0.0
      %1628 = vmatpush1.msra.mxu0 0.0
      %1629 = vmatprep.subr.mxu0 0.0
      %1630 = vmatpush1.msra.mxu0 0.0
      %1631 = vmatprep.subr.mxu0 0.0
      %1632 = vmatpush1.msra.mxu0 0.0
      %1633 = vmatprep.subr.mxu0 0.0
      %1634 = vmatpush1.msra.mxu0 0.0
      %1635 = vmatprep.subr.mxu0 0.0
      %1636 = vmatpush1.msra.mxu0 0.0
      %1637 = vmatprep.subr.mxu0 0.0
      %1638 = vmatpush1.msra.mxu0 0.0
      %1639 = vmatprep.subr.mxu0 0.0
      %1640 = vmatpush1.msra.mxu0 0.0
      %1641 = vmatprep.subr.mxu0 0.0
      %1642 = vmatpush1.msra.mxu0 0.0
      %1643 = vmatprep.subr.mxu0 0.0
      %1644 = vmatpush1.msra.mxu0 0.0
      %1645 = vmatprep.subr.mxu0 0.0
      %1646 = vmatpush1.msra.mxu0 0.0
      %1647 = vmatprep.subr.mxu0 0.0
      %1648 = vmatpush1.msra.mxu0 0.0
      %1649 = vmatprep.subr.mxu0 0.0
      %1650 = vmatpush1.msra.mxu0 0.0
      %1651 = vmatprep.subr.mxu0 0.0
      %1652 = vmatpush1.msra.mxu0 0.0
      %1653 = vmatprep.subr.mxu0 0.0
      %1654 = vmatpush1.msra.mxu0 0.0
      %1655 = vmatprep.subr.mxu0 0.0
      %1656 = vmatpush1.msra.mxu0 0.0
      %1657 = vmatprep.subr.mxu0 0.0
      %1658 = vmatpush1.msra.mxu0 0.0
      %1659 = vmatprep.subr.mxu0 0.0
      %1660 = vmatpush1.msra.mxu0 0.0
      %1661 = vmatprep.subr.mxu0 0.0
      %1662 = vmatpush1.msra.mxu0 0.0
      %1663 = vmatprep.subr.mxu0 0.0
      %1664 = vmatpush1.msra.mxu0 0.0
      %1665 = vmatprep.subr.mxu0 0.0
      %1666 = vmatpush1.msra.mxu0 0.0
      %1667 = vmatprep.subr.mxu0 0.0
      %1668 = vmatpush1.msra.mxu0 0.0
      %1669 = vmatprep.subr.mxu0 0.0
      %1670 = vmatpush1.msra.mxu0 0.0
      %1671 = vmatprep.subr.mxu0 0.0
      %1672 = vmatpush1.msra.mxu0 0.0
      %1673 = vmatprep.mubr.f32.mxu0 0.0
      %1674 = vmatmul.mubr.f32.gmra.mrb[0].mxu0 %v1603
      %v1675 = vpop.f32.mrb[0].mxu0
      %v1676 = vadd.f32 0.0, %v1675
      %v1677 = vpop.f32.mrb[0].mxu0
      %v1678 = vadd.f32 0.0, %v1677
      %1679 = vdwg.mxu0
      %v1681 = vsel %vm733, %v1573, 0
      %v1684 = vsel %vm737, %v1590, 0
      %v1687 = vsel %vm737, %v1591, 0
      %1689 = vmatprep.subr.mxu0 %v1687
      %1690 = vmatpush1.msra.mxu0 %v1684
      %1691 = vmatprep.subr.mxu0 0.0
      %1692 = vmatpush1.msra.mxu0 0.0
      %1693 = vmatprep.subr.mxu0 0.0
      %1694 = vmatpush1.msra.mxu0 0.0
      %1695 = vmatprep.subr.mxu0 0.0
      %1696 = vmatpush1.msra.mxu0 0.0
      %1697 = vmatprep.subr.mxu0 0.0
      %1698 = vmatpush1.msra.mxu0 0.0
      %1699 = vmatprep.subr.mxu0 0.0
      %1700 = vmatpush1.msra.mxu0 0.0
      %1701 = vmatprep.subr.mxu0 0.0
      %1702 = vmatpush1.msra.mxu0 0.0
      %1703 = vmatprep.subr.mxu0 0.0
      %1704 = vmatpush1.msra.mxu0 0.0
      %1705 = vmatprep.subr.mxu0 0.0
      %1706 = vmatpush1.msra.mxu0 0.0
      %1707 = vmatprep.subr.mxu0 0.0
      %1708 = vmatpush1.msra.mxu0 0.0
      %1709 = vmatprep.subr.mxu0 0.0
      %1710 = vmatpush1.msra.mxu0 0.0
      %1711 = vmatprep.subr.mxu0 0.0
      %1712 = vmatpush1.msra.mxu0 0.0
      %1713 = vmatprep.subr.mxu0 0.0
      %1714 = vmatpush1.msra.mxu0 0.0
      %1715 = vmatprep.subr.mxu0 0.0
      %1716 = vmatpush1.msra.mxu0 0.0
      %1717 = vmatprep.subr.mxu0 0.0
      %1718 = vmatpush1.msra.mxu0 0.0
      %1719 = vmatprep.subr.mxu0 0.0
      %1720 = vmatpush1.msra.mxu0 0.0
      %1721 = vmatprep.subr.mxu0 0.0
      %1722 = vmatpush1.msra.mxu0 0.0
      %1723 = vmatprep.subr.mxu0 0.0
      %1724 = vmatpush1.msra.mxu0 0.0
      %1725 = vmatprep.subr.mxu0 0.0
      %1726 = vmatpush1.msra.mxu0 0.0
      %1727 = vmatprep.subr.mxu0 0.0
      %1728 = vmatpush1.msra.mxu0 0.0
      %1729 = vmatprep.subr.mxu0 0.0
      %1730 = vmatpush1.msra.mxu0 0.0
      %1731 = vmatprep.subr.mxu0 0.0
      %1732 = vmatpush1.msra.mxu0 0.0
      %1733 = vmatprep.subr.mxu0 0.0
      %1734 = vmatpush1.msra.mxu0 0.0
      %1735 = vmatprep.subr.mxu0 0.0
      %1736 = vmatpush1.msra.mxu0 0.0
      %1737 = vmatprep.subr.mxu0 0.0
      %1738 = vmatpush1.msra.mxu0 0.0
      %1739 = vmatprep.subr.mxu0 0.0
      %1740 = vmatpush1.msra.mxu0 0.0
      %1741 = vmatprep.subr.mxu0 0.0
      %1742 = vmatpush1.msra.mxu0 0.0
      %1743 = vmatprep.subr.mxu0 0.0
      %1744 = vmatpush1.msra.mxu0 0.0
      %1745 = vmatprep.subr.mxu0 0.0
      %1746 = vmatpush1.msra.mxu0 0.0
      %1747 = vmatprep.subr.mxu0 0.0
      %1748 = vmatpush1.msra.mxu0 0.0
      %1749 = vmatprep.subr.mxu0 0.0
      %1750 = vmatpush1.msra.mxu0 0.0
      %1751 = vmatprep.subr.mxu0 0.0
      %1752 = vmatpush1.msra.mxu0 0.0
      %1753 = vmatprep.mubr.f32.mxu0 0.0
      %1754 = vmatmul.mubr.f32.gmra.mrb[0].mxu0 %v1681
      %v1755 = vpop.f32.mrb[0].mxu0
      %v1756 = vadd.f32 %v1676, %v1755
      %v1757 = vpop.f32.mrb[0].mxu0
      %v1758 = vadd.f32 %v1678, %v1757
      %1759 = vdwg.mxu0
      %s1760 = scalar_lea.vmem %s4, 4
      %v1761 = vld [vmem:[%s1760] sm:$0x3]
      %1762 = vrot.lane.b32.xlu0 %v1574, 15
      %v1763 = vpop.permute.xlu0 %1762
      %1764 = vrot.lane.b32.xlu0 %v1575, 15
      %v1765 = vpop.permute.xlu0 %1764
      %1766 = vrot.lane.b32.xlu0 %v1576, 15
      %v1767 = vpop.permute.xlu0 %1766
      %v1768 = vsel %vm905, %v1763, %v1765
      %v1769 = vsel %vm905, %v1765, %v1767
      %v1772 = vsel %vm897, %v1768, 0.0
      %v1773 = vsel %vm898, %v1769, 0.0
      %v1775 = vsel %vm733, %v1761, 0
      %v1778 = vsel %vm737, %v1772, 0
      %v1781 = vsel %vm737, %v1773, 0
      %1783 = vmatprep.subr.mxu0 %v1781
      %1784 = vmatpush1.msra.mxu0 %v1778
      %1785 = vmatprep.subr.mxu0 0.0
      %1786 = vmatpush1.msra.mxu0 0.0
      %1787 = vmatprep.subr.mxu0 0.0
      %1788 = vmatpush1.msra.mxu0 0.0
      %1789 = vmatprep.subr.mxu0 0.0
      %1790 = vmatpush1.msra.mxu0 0.0
      %1791 = vmatprep.subr.mxu0 0.0
      %1792 = vmatpush1.msra.mxu0 0.0
      %1793 = vmatprep.subr.mxu0 0.0
      %1794 = vmatpush1.msra.mxu0 0.0
      %1795 = vmatprep.subr.mxu0 0.0
      %1796 = vmatpush1.msra.mxu0 0.0
      %1797 = vmatprep.subr.mxu0 0.0
      %1798 = vmatpush1.msra.mxu0 0.0
      %1799 = vmatprep.subr.mxu0 0.0
      %1800 = vmatpush1.msra.mxu0 0.0
      %1801 = vmatprep.subr.mxu0 0.0
      %1802 = vmatpush1.msra.mxu0 0.0
      %1803 = vmatprep.subr.mxu0 0.0
      %1804 = vmatpush1.msra.mxu0 0.0
      %1805 = vmatprep.subr.mxu0 0.0
      %1806 = vmatpush1.msra.mxu0 0.0
      %1807 = vmatprep.subr.mxu0 0.0
      %1808 = vmatpush1.msra.mxu0 0.0
      %1809 = vmatprep.subr.mxu0 0.0
      %1810 = vmatpush1.msra.mxu0 0.0
      %1811 = vmatprep.subr.mxu0 0.0
      %1812 = vmatpush1.msra.mxu0 0.0
      %1813 = vmatprep.subr.mxu0 0.0
      %1814 = vmatpush1.msra.mxu0 0.0
      %1815 = vmatprep.subr.mxu0 0.0
      %1816 = vmatpush1.msra.mxu0 0.0
      %1817 = vmatprep.subr.mxu0 0.0
      %1818 = vmatpush1.msra.mxu0 0.0
      %1819 = vmatprep.subr.mxu0 0.0
      %1820 = vmatpush1.msra.mxu0 0.0
      %1821 = vmatprep.subr.mxu0 0.0
      %1822 = vmatpush1.msra.mxu0 0.0
      %1823 = vmatprep.subr.mxu0 0.0
      %1824 = vmatpush1.msra.mxu0 0.0
      %1825 = vmatprep.subr.mxu0 0.0
      %1826 = vmatpush1.msra.mxu0 0.0
      %1827 = vmatprep.subr.mxu0 0.0
      %1828 = vmatpush1.msra.mxu0 0.0
      %1829 = vmatprep.subr.mxu0 0.0
      %1830 = vmatpush1.msra.mxu0 0.0
      %1831 = vmatprep.subr.mxu0 0.0
      %1832 = vmatpush1.msra.mxu0 0.0
      %1833 = vmatprep.subr.mxu0 0.0
      %1834 = vmatpush1.msra.mxu0 0.0
      %1835 = vmatprep.subr.mxu0 0.0
      %1836 = vmatpush1.msra.mxu0 0.0
      %1837 = vmatprep.subr.mxu0 0.0
      %1838 = vmatpush1.msra.mxu0 0.0
      %1839 = vmatprep.subr.mxu0 0.0
      %1840 = vmatpush1.msra.mxu0 0.0
      %1841 = vmatprep.subr.mxu0 0.0
      %1842 = vmatpush1.msra.mxu0 0.0
      %1843 = vmatprep.subr.mxu0 0.0
      %1844 = vmatpush1.msra.mxu0 0.0
      %1845 = vmatprep.subr.mxu0 0.0
      %1846 = vmatpush1.msra.mxu0 0.0
      %1847 = vmatprep.mubr.f32.mxu0 0.0
      %1848 = vmatmul.mubr.f32.gmra.mrb[0].mxu0 %v1775
      %v1849 = vpop.f32.mrb[0].mxu0
      %v1850 = vadd.f32 0.0, %v1849
      %v1851 = vpop.f32.mrb[0].mxu0
      %v1852 = vadd.f32 0.0, %v1851
      %1853 = vdwg.mxu0
      %v1854 = vadd.f32 %v1756, %v1850
      %v1855 = vadd.f32 %v1758, %v1852
      %s1856 = scalar_lea.vmem %s4, 6
      %v1857 = vld [vmem:[%s1856] sm:$0x3]
      %1858 = vrot.lane.b32.xlu0 %v1574, 1
      %v1859 = vpop.permute.xlu0 %1858
      %1860 = vrot.lane.b32.xlu0 %v1575, 1
      %v1861 = vpop.permute.xlu0 %1860
      %1862 = vrot.lane.b32.xlu0 %v1576, 1
      %v1863 = vpop.permute.xlu0 %1862
      %v1864 = vsel %vm1002, %v1859, %v1861
      %v1865 = vsel %vm1002, %v1861, %v1863
      %v1868 = vsel %vm704, %v1864, 0.0
      %v1869 = vsel %vm705, %v1865, 0.0
      %v1871 = vsel %vm733, %v1857, 0
      %v1874 = vsel %vm737, %v1868, 0
      %v1877 = vsel %vm737, %v1869, 0
      %1879 = vmatprep.subr.mxu0 %v1877
      %1880 = vmatpush1.msra.mxu0 %v1874
      %1881 = vmatprep.subr.mxu0 0.0
      %1882 = vmatpush1.msra.mxu0 0.0
      %1883 = vmatprep.subr.mxu0 0.0
      %1884 = vmatpush1.msra.mxu0 0.0
      %1885 = vmatprep.subr.mxu0 0.0
      %1886 = vmatpush1.msra.mxu0 0.0
      %1887 = vmatprep.subr.mxu0 0.0
      %1888 = vmatpush1.msra.mxu0 0.0
      %1889 = vmatprep.subr.mxu0 0.0
      %1890 = vmatpush1.msra.mxu0 0.0
      %1891 = vmatprep.subr.mxu0 0.0
      %1892 = vmatpush1.msra.mxu0 0.0
      %1893 = vmatprep.subr.mxu0 0.0
      %1894 = vmatpush1.msra.mxu0 0.0
      %1895 = vmatprep.subr.mxu0 0.0
      %1896 = vmatpush1.msra.mxu0 0.0
      %1897 = vmatprep.subr.mxu0 0.0
      %1898 = vmatpush1.msra.mxu0 0.0
      %1899 = vmatprep.subr.mxu0 0.0
      %1900 = vmatpush1.msra.mxu0 0.0
      %1901 = vmatprep.subr.mxu0 0.0
      %1902 = vmatpush1.msra.mxu0 0.0
      %1903 = vmatprep.subr.mxu0 0.0
      %1904 = vmatpush1.msra.mxu0 0.0
      %1905 = vmatprep.subr.mxu0 0.0
      %1906 = vmatpush1.msra.mxu0 0.0
      %1907 = vmatprep.subr.mxu0 0.0
      %1908 = vmatpush1.msra.mxu0 0.0
      %1909 = vmatprep.subr.mxu0 0.0
      %1910 = vmatpush1.msra.mxu0 0.0
      %1911 = vmatprep.subr.mxu0 0.0
      %1912 = vmatpush1.msra.mxu0 0.0
      %1913 = vmatprep.subr.mxu0 0.0
      %1914 = vmatpush1.msra.mxu0 0.0
      %1915 = vmatprep.subr.mxu0 0.0
      %1916 = vmatpush1.msra.mxu0 0.0
      %1917 = vmatprep.subr.mxu0 0.0
      %1918 = vmatpush1.msra.mxu0 0.0
      %1919 = vmatprep.subr.mxu0 0.0
      %1920 = vmatpush1.msra.mxu0 0.0
      %1921 = vmatprep.subr.mxu0 0.0
      %1922 = vmatpush1.msra.mxu0 0.0
      %1923 = vmatprep.subr.mxu0 0.0
      %1924 = vmatpush1.msra.mxu0 0.0
      %1925 = vmatprep.subr.mxu0 0.0
      %1926 = vmatpush1.msra.mxu0 0.0
      %1927 = vmatprep.subr.mxu0 0.0
      %1928 = vmatpush1.msra.mxu0 0.0
      %1929 = vmatprep.subr.mxu0 0.0
      %1930 = vmatpush1.msra.mxu0 0.0
      %1931 = vmatprep.subr.mxu0 0.0
      %1932 = vmatpush1.msra.mxu0 0.0
      %1933 = vmatprep.subr.mxu0 0.0
      %1934 = vmatpush1.msra.mxu0 0.0
      %1935 = vmatprep.subr.mxu0 0.0
      %1936 = vmatpush1.msra.mxu0 0.0
      %1937 = vmatprep.subr.mxu0 0.0
      %1938 = vmatpush1.msra.mxu0 0.0
      %1939 = vmatprep.subr.mxu0 0.0
      %1940 = vmatpush1.msra.mxu0 0.0
      %1941 = vmatprep.subr.mxu0 0.0
      %1942 = vmatpush1.msra.mxu0 0.0
      %1943 = vmatprep.mubr.f32.mxu0 0.0
      %1944 = vmatmul.mubr.f32.gmra.mrb[0].mxu0 %v1871
      %v1945 = vpop.f32.mrb[0].mxu0
      %v1946 = vadd.f32 0.0, %v1945
      %v1947 = vpop.f32.mrb[0].mxu0
      %v1948 = vadd.f32 0.0, %v1947
      %1949 = vdwg.mxu0
      %v1950 = vadd.f32 %v1854, %v1946
      %v1951 = vadd.f32 %v1855, %v1948
      %s1952 = scalar_lea.vmem %s4, 8
      %v1953 = vld [vmem:[%s1952] sm:$0x3]
      %v1955 = vsel %vm733, %v1953, 0
      %v1957 = vsel %vm737, %v1575, 0
      %v1959 = vsel %vm737, %v1576, 0
      %1961 = vmatprep.subr.mxu0 %v1959
      %1962 = vmatpush1.msra.mxu0 %v1957
      %1963 = vmatprep.subr.mxu0 0.0
      %1964 = vmatpush1.msra.mxu0 0.0
      %1965 = vmatprep.subr.mxu0 0.0
      %1966 = vmatpush1.msra.mxu0 0.0
      %1967 = vmatprep.subr.mxu0 0.0
      %1968 = vmatpush1.msra.mxu0 0.0
      %1969 = vmatprep.subr.mxu0 0.0
      %1970 = vmatpush1.msra.mxu0 0.0
      %1971 = vmatprep.subr.mxu0 0.0
      %1972 = vmatpush1.msra.mxu0 0.0
      %1973 = vmatprep.subr.mxu0 0.0
      %1974 = vmatpush1.msra.mxu0 0.0
      %1975 = vmatprep.subr.mxu0 0.0
      %1976 = vmatpush1.msra.mxu0 0.0
      %1977 = vmatprep.subr.mxu0 0.0
      %1978 = vmatpush1.msra.mxu0 0.0
      %1979 = vmatprep.subr.mxu0 0.0
      %1980 = vmatpush1.msra.mxu0 0.0
      %1981 = vmatprep.subr.mxu0 0.0
      %1982 = vmatpush1.msra.mxu0 0.0
      %1983 = vmatprep.subr.mxu0 0.0
      %1984 = vmatpush1.msra.mxu0 0.0
      %1985 = vmatprep.subr.mxu0 0.0
      %1986 = vmatpush1.msra.mxu0 0.0
      %1987 = vmatprep.subr.mxu0 0.0
      %1988 = vmatpush1.msra.mxu0 0.0
      %1989 = vmatprep.subr.mxu0 0.0
      %1990 = vmatpush1.msra.mxu0 0.0
      %1991 = vmatprep.subr.mxu0 0.0
      %1992 = vmatpush1.msra.mxu0 0.0
      %1993 = vmatprep.subr.mxu0 0.0
      %1994 = vmatpush1.msra.mxu0 0.0
      %1995 = vmatprep.subr.mxu0 0.0
      %1996 = vmatpush1.msra.mxu0 0.0
      %1997 = vmatprep.subr.mxu0 0.0
      %1998 = vmatpush1.msra.mxu0 0.0
      %1999 = vmatprep.subr.mxu0 0.0
      %2000 = vmatpush1.msra.mxu0 0.0
      %2001 = vmatprep.subr.mxu0 0.0
      %2002 = vmatpush1.msra.mxu0 0.0
      %2003 = vmatprep.subr.mxu0 0.0
      %2004 = vmatpush1.msra.mxu0 0.0
      %2005 = vmatprep.subr.mxu0 0.0
      %2006 = vmatpush1.msra.mxu0 0.0
      %2007 = vmatprep.subr.mxu0 0.0
      %2008 = vmatpush1.msra.mxu0 0.0
      %2009 = vmatprep.subr.mxu0 0.0
      %2010 = vmatpush1.msra.mxu0 0.0
      %2011 = vmatprep.subr.mxu0 0.0
      %2012 = vmatpush1.msra.mxu0 0.0
      %2013 = vmatprep.subr.mxu0 0.0
      %2014 = vmatpush1.msra.mxu0 0.0
      %2015 = vmatprep.subr.mxu0 0.0
      %2016 = vmatpush1.msra.mxu0 0.0
      %2017 = vmatprep.subr.mxu0 0.0
      %2018 = vmatpush1.msra.mxu0 0.0
      %2019 = vmatprep.subr.mxu0 0.0
      %2020 = vmatpush1.msra.mxu0 0.0
      %2021 = vmatprep.subr.mxu0 0.0
      %2022 = vmatpush1.msra.mxu0 0.0
      %2023 = vmatprep.subr.mxu0 0.0
      %2024 = vmatpush1.msra.mxu0 0.0
      %2025 = vmatprep.mubr.f32.mxu0 0.0
      %2026 = vmatmul.mubr.f32.gmra.mrb[0].mxu0 %v1955
      %v2027 = vpop.f32.mrb[0].mxu0
      %v2028 = vadd.f32 0.0, %v2027
      %v2029 = vpop.f32.mrb[0].mxu0
      %v2030 = vadd.f32 0.0, %v2029
      %2031 = vdwg.mxu0
      %v2032 = vadd.f32 %v1950, %v2028
      %v2033 = vadd.f32 %v1951, %v2030
      %s2034 = scalar_lea.vmem %s4, 10
      %v2035 = vld [vmem:[%s2034] sm:$0x3]
      %v2036 = vld [vmem:[#allocation2 + $0x8] sm:$0x3]
      %v2037 = vld [vmem:[#allocation2 + $0x10] sm:$0x3]
      %v2038 = vld [vmem:[#allocation2 + $0x18] sm:$0x3]
      %2042 = vrot.lane.b32.xlu0 %v2036, 127
      %v2043 = vpop.permute.xlu0 %2042
      %2044 = vrot.lane.b32.xlu0 %v2037, 127
      %v2045 = vpop.permute.xlu0 %2044
      %2046 = vrot.lane.b32.xlu0 %v2038, 127
      %v2047 = vpop.permute.xlu0 %2046
      %v2048 = vsel %vm1187, %v2043, %v2045
      %v2049 = vsel %vm1187, %v2045, %v2047
      %v2052 = vsel %vm897, %v2048, 0.0
      %v2053 = vsel %vm898, %v2049, 0.0
      %v2055 = vsel %vm733, %v2035, 0
      %v2058 = vsel %vm737, %v2052, 0
      %v2061 = vsel %vm737, %v2053, 0
      %2063 = vmatprep.subr.mxu0 %v2061
      %2064 = vmatpush1.msra.mxu0 %v2058
      %2065 = vmatprep.subr.mxu0 0.0
      %2066 = vmatpush1.msra.mxu0 0.0
      %2067 = vmatprep.subr.mxu0 0.0
      %2068 = vmatpush1.msra.mxu0 0.0
      %2069 = vmatprep.subr.mxu0 0.0
      %2070 = vmatpush1.msra.mxu0 0.0
      %2071 = vmatprep.subr.mxu0 0.0
      %2072 = vmatpush1.msra.mxu0 0.0
      %2073 = vmatprep.subr.mxu0 0.0
      %2074 = vmatpush1.msra.mxu0 0.0
      %2075 = vmatprep.subr.mxu0 0.0
      %2076 = vmatpush1.msra.mxu0 0.0
      %2077 = vmatprep.subr.mxu0 0.0
      %2078 = vmatpush1.msra.mxu0 0.0
      %2079 = vmatprep.subr.mxu0 0.0
      %2080 = vmatpush1.msra.mxu0 0.0
      %2081 = vmatprep.subr.mxu0 0.0
      %2082 = vmatpush1.msra.mxu0 0.0
      %2083 = vmatprep.subr.mxu0 0.0
      %2084 = vmatpush1.msra.mxu0 0.0
      %2085 = vmatprep.subr.mxu0 0.0
      %2086 = vmatpush1.msra.mxu0 0.0
      %2087 = vmatprep.subr.mxu0 0.0
      %2088 = vmatpush1.msra.mxu0 0.0
      %2089 = vmatprep.subr.mxu0 0.0
      %2090 = vmatpush1.msra.mxu0 0.0
      %2091 = vmatprep.subr.mxu0 0.0
      %2092 = vmatpush1.msra.mxu0 0.0
      %2093 = vmatprep.subr.mxu0 0.0
      %2094 = vmatpush1.msra.mxu0 0.0
      %2095 = vmatprep.subr.mxu0 0.0
      %2096 = vmatpush1.msra.mxu0 0.0
      %2097 = vmatprep.subr.mxu0 0.0
      %2098 = vmatpush1.msra.mxu0 0.0
      %2099 = vmatprep.subr.mxu0 0.0
      %2100 = vmatpush1.msra.mxu0 0.0
      %2101 = vmatprep.subr.mxu0 0.0
      %2102 = vmatpush1.msra.mxu0 0.0
      %2103 = vmatprep.subr.mxu0 0.0
      %2104 = vmatpush1.msra.mxu0 0.0
      %2105 = vmatprep.subr.mxu0 0.0
      %2106 = vmatpush1.msra.mxu0 0.0
      %2107 = vmatprep.subr.mxu0 0.0
      %2108 = vmatpush1.msra.mxu0 0.0
      %2109 = vmatprep.subr.mxu0 0.0
      %2110 = vmatpush1.msra.mxu0 0.0
      %2111 = vmatprep.subr.mxu0 0.0
      %2112 = vmatpush1.msra.mxu0 0.0
      %2113 = vmatprep.subr.mxu0 0.0
      %2114 = vmatpush1.msra.mxu0 0.0
      %2115 = vmatprep.subr.mxu0 0.0
      %2116 = vmatpush1.msra.mxu0 0.0
      %2117 = vmatprep.subr.mxu0 0.0
      %2118 = vmatpush1.msra.mxu0 0.0
      %2119 = vmatprep.subr.mxu0 0.0
      %2120 = vmatpush1.msra.mxu0 0.0
      %2121 = vmatprep.subr.mxu0 0.0
      %2122 = vmatpush1.msra.mxu0 0.0
      %2123 = vmatprep.subr.mxu0 0.0
      %2124 = vmatpush1.msra.mxu0 0.0
      %2125 = vmatprep.subr.mxu0 0.0
      %2126 = vmatpush1.msra.mxu0 0.0
      %2127 = vmatprep.mubr.f32.mxu0 0.0
      %2128 = vmatmul.mubr.f32.gmra.mrb[0].mxu0 %v2055
      %v2129 = vpop.f32.mrb[0].mxu0
      %v2130 = vadd.f32 0.0, %v2129
      %v2131 = vpop.f32.mrb[0].mxu0
      %v2132 = vadd.f32 0.0, %v2131
      %2133 = vdwg.mxu0
      %v2134 = vadd.f32 %v2032, %v2130
      %v2135 = vadd.f32 %v2033, %v2132
      %s2136 = scalar_lea.vmem %s4, 12
      %v2137 = vld [vmem:[%s2136] sm:$0x3]
      %2138 = vrot.lane.b32.xlu0 %v2036, 113
      %v2139 = vpop.permute.xlu0 %2138
      %2140 = vrot.lane.b32.xlu0 %v2037, 113
      %v2141 = vpop.permute.xlu0 %2140
      %2142 = vrot.lane.b32.xlu0 %v2038, 113
      %v2143 = vpop.permute.xlu0 %2142
      %v2144 = vsel %vm1284, %v2139, %v2141
      %v2145 = vsel %vm1284, %v2141, %v2143
      %v2148 = vsel %vm704, %v2144, 0.0
      %v2149 = vsel %vm705, %v2145, 0.0
      %v2151 = vsel %vm733, %v2137, 0
      %v2154 = vsel %vm737, %v2148, 0
      %v2157 = vsel %vm737, %v2149, 0
      %2159 = vmatprep.subr.mxu0 %v2157
      %2160 = vmatpush1.msra.mxu0 %v2154
      %2161 = vmatprep.subr.mxu0 0.0
      %2162 = vmatpush1.msra.mxu0 0.0
      %2163 = vmatprep.subr.mxu0 0.0
      %2164 = vmatpush1.msra.mxu0 0.0
      %2165 = vmatprep.subr.mxu0 0.0
      %2166 = vmatpush1.msra.mxu0 0.0
      %2167 = vmatprep.subr.mxu0 0.0
      %2168 = vmatpush1.msra.mxu0 0.0
      %2169 = vmatprep.subr.mxu0 0.0
      %2170 = vmatpush1.msra.mxu0 0.0
      %2171 = vmatprep.subr.mxu0 0.0
      %2172 = vmatpush1.msra.mxu0 0.0
      %2173 = vmatprep.subr.mxu0 0.0
      %2174 = vmatpush1.msra.mxu0 0.0
      %2175 = vmatprep.subr.mxu0 0.0
      %2176 = vmatpush1.msra.mxu0 0.0
      %2177 = vmatprep.subr.mxu0 0.0
      %2178 = vmatpush1.msra.mxu0 0.0
      %2179 = vmatprep.subr.mxu0 0.0
      %2180 = vmatpush1.msra.mxu0 0.0
      %2181 = vmatprep.subr.mxu0 0.0
      %2182 = vmatpush1.msra.mxu0 0.0
      %2183 = vmatprep.subr.mxu0 0.0
      %2184 = vmatpush1.msra.mxu0 0.0
      %2185 = vmatprep.subr.mxu0 0.0
      %2186 = vmatpush1.msra.mxu0 0.0
      %2187 = vmatprep.subr.mxu0 0.0
      %2188 = vmatpush1.msra.mxu0 0.0
      %2189 = vmatprep.subr.mxu0 0.0
      %2190 = vmatpush1.msra.mxu0 0.0
      %2191 = vmatprep.subr.mxu0 0.0
      %2192 = vmatpush1.msra.mxu0 0.0
      %2193 = vmatprep.subr.mxu0 0.0
      %2194 = vmatpush1.msra.mxu0 0.0
      %2195 = vmatprep.subr.mxu0 0.0
      %2196 = vmatpush1.msra.mxu0 0.0
      %2197 = vmatprep.subr.mxu0 0.0
      %2198 = vmatpush1.msra.mxu0 0.0
      %2199 = vmatprep.subr.mxu0 0.0
      %2200 = vmatpush1.msra.mxu0 0.0
      %2201 = vmatprep.subr.mxu0 0.0
      %2202 = vmatpush1.msra.mxu0 0.0
      %2203 = vmatprep.subr.mxu0 0.0
      %2204 = vmatpush1.msra.mxu0 0.0
      %2205 = vmatprep.subr.mxu0 0.0
      %2206 = vmatpush1.msra.mxu0 0.0
      %2207 = vmatprep.subr.mxu0 0.0
      %2208 = vmatpush1.msra.mxu0 0.0
      %2209 = vmatprep.subr.mxu0 0.0
      %2210 = vmatpush1.msra.mxu0 0.0
      %2211 = vmatprep.subr.mxu0 0.0
      %2212 = vmatpush1.msra.mxu0 0.0
      %2213 = vmatprep.subr.mxu0 0.0
      %2214 = vmatpush1.msra.mxu0 0.0
      %2215 = vmatprep.subr.mxu0 0.0
      %2216 = vmatpush1.msra.mxu0 0.0
      %2217 = vmatprep.subr.mxu0 0.0
      %2218 = vmatpush1.msra.mxu0 0.0
      %2219 = vmatprep.subr.mxu0 0.0
      %2220 = vmatpush1.msra.mxu0 0.0
      %2221 = vmatprep.subr.mxu0 0.0
      %2222 = vmatpush1.msra.mxu0 0.0
      %2223 = vmatprep.mubr.f32.mxu0 0.0
      %2224 = vmatmul.mubr.f32.gmra.mrb[0].mxu0 %v2151
      %v2225 = vpop.f32.mrb[0].mxu0
      %v2226 = vadd.f32 0.0, %v2225
      %v2227 = vpop.f32.mrb[0].mxu0
      %v2228 = vadd.f32 0.0, %v2227
      %2229 = vdwg.mxu0
      %v2230 = vadd.f32 %v2134, %v2226
      %v2231 = vadd.f32 %v2135, %v2228
      %s2232 = scalar_lea.vmem %s4, 14
      %v2233 = vld [vmem:[%s2232] sm:$0x3]
      %2234 = vrot.lane.b32.xlu0 %v2036, 112
      %v2235 = vpop.permute.xlu0 %2234
      %2236 = vrot.lane.b32.xlu0 %v2037, 112
      %v2237 = vpop.permute.xlu0 %2236
      %2238 = vrot.lane.b32.xlu0 %v2038, 112
      %v2239 = vpop.permute.xlu0 %2238
      %v2240 = vsel %vm1381, %v2235, %v2237
      %v2241 = vsel %vm1381, %v2237, %v2239
      %v2243 = vsel %vm733, %v2233, 0
      %v2245 = vsel %vm737, %v2240, 0
      %v2247 = vsel %vm737, %v2241, 0
      %2249 = vmatprep.subr.mxu0 %v2247
      %2250 = vmatpush1.msra.mxu0 %v2245
      %2251 = vmatprep.subr.mxu0 0.0
      %2252 = vmatpush1.msra.mxu0 0.0
      %2253 = vmatprep.subr.mxu0 0.0
      %2254 = vmatpush1.msra.mxu0 0.0
      %2255 = vmatprep.subr.mxu0 0.0
      %2256 = vmatpush1.msra.mxu0 0.0
      %2257 = vmatprep.subr.mxu0 0.0
      %2258 = vmatpush1.msra.mxu0 0.0
      %2259 = vmatprep.subr.mxu0 0.0
      %2260 = vmatpush1.msra.mxu0 0.0
      %2261 = vmatprep.subr.mxu0 0.0
      %2262 = vmatpush1.msra.mxu0 0.0
      %2263 = vmatprep.subr.mxu0 0.0
      %2264 = vmatpush1.msra.mxu0 0.0
      %2265 = vmatprep.subr.mxu0 0.0
      %2266 = vmatpush1.msra.mxu0 0.0
      %2267 = vmatprep.subr.mxu0 0.0
      %2268 = vmatpush1.msra.mxu0 0.0
      %2269 = vmatprep.subr.mxu0 0.0
      %2270 = vmatpush1.msra.mxu0 0.0
      %2271 = vmatprep.subr.mxu0 0.0
      %2272 = vmatpush1.msra.mxu0 0.0
      %2273 = vmatprep.subr.mxu0 0.0
      %2274 = vmatpush1.msra.mxu0 0.0
      %2275 = vmatprep.subr.mxu0 0.0
      %2276 = vmatpush1.msra.mxu0 0.0
      %2277 = vmatprep.subr.mxu0 0.0
      %2278 = vmatpush1.msra.mxu0 0.0
      %2279 = vmatprep.subr.mxu0 0.0
      %2280 = vmatpush1.msra.mxu0 0.0
      %2281 = vmatprep.subr.mxu0 0.0
      %2282 = vmatpush1.msra.mxu0 0.0
      %2283 = vmatprep.subr.mxu0 0.0
      %2284 = vmatpush1.msra.mxu0 0.0
      %2285 = vmatprep.subr.mxu0 0.0
      %2286 = vmatpush1.msra.mxu0 0.0
      %2287 = vmatprep.subr.mxu0 0.0
      %2288 = vmatpush1.msra.mxu0 0.0
      %2289 = vmatprep.subr.mxu0 0.0
      %2290 = vmatpush1.msra.mxu0 0.0
      %2291 = vmatprep.subr.mxu0 0.0
      %2292 = vmatpush1.msra.mxu0 0.0
      %2293 = vmatprep.subr.mxu0 0.0
      %2294 = vmatpush1.msra.mxu0 0.0
      %2295 = vmatprep.subr.mxu0 0.0
      %2296 = vmatpush1.msra.mxu0 0.0
      %2297 = vmatprep.subr.mxu0 0.0
      %2298 = vmatpush1.msra.mxu0 0.0
      %2299 = vmatprep.subr.mxu0 0.0
      %2300 = vmatpush1.msra.mxu0 0.0
      %2301 = vmatprep.subr.mxu0 0.0
      %2302 = vmatpush1.msra.mxu0 0.0
      %2303 = vmatprep.subr.mxu0 0.0
      %2304 = vmatpush1.msra.mxu0 0.0
      %2305 = vmatprep.subr.mxu0 0.0
      %2306 = vmatpush1.msra.mxu0 0.0
      %2307 = vmatprep.subr.mxu0 0.0
      %2308 = vmatpush1.msra.mxu0 0.0
      %2309 = vmatprep.subr.mxu0 0.0
      %2310 = vmatpush1.msra.mxu0 0.0
      %2311 = vmatprep.subr.mxu0 0.0
      %2312 = vmatpush1.msra.mxu0 0.0
      %2313 = vmatprep.mubr.f32.mxu0 0.0
      %2314 = vmatmul.mubr.f32.gmra.mrb[0].mxu0 %v2243
      %v2315 = vpop.f32.mrb[0].mxu0
      %v2316 = vadd.f32 0.0, %v2315
      %v2317 = vpop.f32.mrb[0].mxu0
      %v2318 = vadd.f32 0.0, %v2317
      %2319 = vdwg.mxu0
      %v2320 = vadd.f32 %v2230, %v2316
      %v2321 = vadd.f32 %v2231, %v2318
      %s2322 = scalar_lea.vmem %s4, 16
      %v2323 = vld [vmem:[%s2322] sm:$0x3]
      %2324 = vrot.lane.b32.xlu0 %v2036, 111
      %v2325 = vpop.permute.xlu0 %2324
      %2326 = vrot.lane.b32.xlu0 %v2037, 111
      %v2327 = vpop.permute.xlu0 %2326
      %2328 = vrot.lane.b32.xlu0 %v2038, 111
      %v2329 = vpop.permute.xlu0 %2328
      %v2330 = vsel %vm1472, %v2325, %v2327
      %v2331 = vsel %vm1472, %v2327, %v2329
      %v2334 = vsel %vm897, %v2330, 0.0
      %v2335 = vsel %vm898, %v2331, 0.0
      %v2337 = vsel %vm733, %v2323, 0
      %v2340 = vsel %vm737, %v2334, 0
      %v2343 = vsel %vm737, %v2335, 0
      %2345 = vmatprep.subr.mxu0 %v2343
      %2346 = vmatpush1.msra.mxu0 %v2340
      %2347 = vmatprep.subr.mxu0 0.0
      %2348 = vmatpush1.msra.mxu0 0.0
      %2349 = vmatprep.subr.mxu0 0.0
      %2350 = vmatpush1.msra.mxu0 0.0
      %2351 = vmatprep.subr.mxu0 0.0
      %2352 = vmatpush1.msra.mxu0 0.0
      %2353 = vmatprep.subr.mxu0 0.0
      %2354 = vmatpush1.msra.mxu0 0.0
      %2355 = vmatprep.subr.mxu0 0.0
      %2356 = vmatpush1.msra.mxu0 0.0
      %2357 = vmatprep.subr.mxu0 0.0
      %2358 = vmatpush1.msra.mxu0 0.0
      %2359 = vmatprep.subr.mxu0 0.0
      %2360 = vmatpush1.msra.mxu0 0.0
      %2361 = vmatprep.subr.mxu0 0.0
      %2362 = vmatpush1.msra.mxu0 0.0
      %2363 = vmatprep.subr.mxu0 0.0
      %2364 = vmatpush1.msra.mxu0 0.0
      %2365 = vmatprep.subr.mxu0 0.0
      %2366 = vmatpush1.msra.mxu0 0.0
      %2367 = vmatprep.subr.mxu0 0.0
      %2368 = vmatpush1.msra.mxu0 0.0
      %2369 = vmatprep.subr.mxu0 0.0
      %2370 = vmatpush1.msra.mxu0 0.0
      %2371 = vmatprep.subr.mxu0 0.0
      %2372 = vmatpush1.msra.mxu0 0.0
      %2373 = vmatprep.subr.mxu0 0.0
      %2374 = vmatpush1.msra.mxu0 0.0
      %2375 = vmatprep.subr.mxu0 0.0
      %2376 = vmatpush1.msra.mxu0 0.0
      %2377 = vmatprep.subr.mxu0 0.0
      %2378 = vmatpush1.msra.mxu0 0.0
      %2379 = vmatprep.subr.mxu0 0.0
      %2380 = vmatpush1.msra.mxu0 0.0
      %2381 = vmatprep.subr.mxu0 0.0
      %2382 = vmatpush1.msra.mxu0 0.0
      %2383 = vmatprep.subr.mxu0 0.0
      %2384 = vmatpush1.msra.mxu0 0.0
      %2385 = vmatprep.subr.mxu0 0.0
      %2386 = vmatpush1.msra.mxu0 0.0
      %2387 = vmatprep.subr.mxu0 0.0
      %2388 = vmatpush1.msra.mxu0 0.0
      %2389 = vmatprep.subr.mxu0 0.0
      %2390 = vmatpush1.msra.mxu0 0.0
      %2391 = vmatprep.subr.mxu0 0.0
      %2392 = vmatpush1.msra.mxu0 0.0
      %2393 = vmatprep.subr.mxu0 0.0
      %2394 = vmatpush1.msra.mxu0 0.0
      %2395 = vmatprep.subr.mxu0 0.0
      %2396 = vmatpush1.msra.mxu0 0.0
      %2397 = vmatprep.subr.mxu0 0.0
      %2398 = vmatpush1.msra.mxu0 0.0
      %2399 = vmatprep.subr.mxu0 0.0
      %2400 = vmatpush1.msra.mxu0 0.0
      %2401 = vmatprep.subr.mxu0 0.0
      %2402 = vmatpush1.msra.mxu0 0.0
      %2403 = vmatprep.subr.mxu0 0.0
      %2404 = vmatpush1.msra.mxu0 0.0
      %2405 = vmatprep.subr.mxu0 0.0
      %2406 = vmatpush1.msra.mxu0 0.0
      %2407 = vmatprep.subr.mxu0 0.0
      %2408 = vmatpush1.msra.mxu0 0.0
      %2409 = vmatprep.mubr.f32.mxu0 0.0
      %2410 = vmatmul.mubr.f32.gmra.mrb[0].mxu0 %v2337
      %v2411 = vpop.f32.mrb[0].mxu0
      %v2412 = vadd.f32 0.0, %v2411
      %v2413 = vpop.f32.mrb[0].mxu0
      %v2414 = vadd.f32 0.0, %v2413
      %2415 = vdwg.mxu0
      %v2416 = vadd.f32 %v2320, %v2412
      %v2417 = vadd.f32 %v2321, %v2414
      %v2418 = vld [vmem:[%s5] sm:$0x3]
      %2420 = vset.pattern.permute.xlu0 0
      %2421 = vperm.xlu0 %2420, %v2418
      %v2422 = vpop.permute.xlu0 %2421
      %v2424 = vadd.f32 %v2416, %v2422
      %v2425 = vadd.f32 %v2417, %v2422
      %v2426 = vmax.f32 %v2424, 0.0
      %v2427 = vmax.f32 %v2425, 0.0
      %v2428 = vld [vmem:[%s6] sm:$0x1]
      %v2429 = vld [vmem:[#allocation3] sm:$0x1]
      %2431 = vset.pattern.permute.xlu0 0
      %2432 = vperm.xlu0 %2431, %v2429
      %v2433 = vpop.permute.xlu0 %2432
      %v2435 = vlaneseq
      %v2436 = vshrl.u32 %v2435, 7
      %v2437 = vsub.s32 0, %v2436
      %v2438 = vrot.slane %v2433, %v2437
      %v2440 = vsel %vm733, %v2428, 0
      %v2443 = vsel %vm737, %v2426, 0
      %v2446 = vsel %vm737, %v2427, 0
      %2448 = vmatprep.subr.mxu0 %v2446
      %2449 = vmatpush1.msra.mxu0 %v2443
      %2450 = vmatprep.subr.mxu0 0.0
      %2451 = vmatpush1.msra.mxu0 0.0
      %2452 = vmatprep.subr.mxu0 0.0
      %2453 = vmatpush1.msra.mxu0 0.0
      %2454 = vmatprep.subr.mxu0 0.0
      %2455 = vmatpush1.msra.mxu0 0.0
      %2456 = vmatprep.subr.mxu0 0.0
      %2457 = vmatpush1.msra.mxu0 0.0
      %2458 = vmatprep.subr.mxu0 0.0
      %2459 = vmatpush1.msra.mxu0 0.0
      %2460 = vmatprep.subr.mxu0 0.0
      %2461 = vmatpush1.msra.mxu0 0.0
      %2462 = vmatprep.subr.mxu0 0.0
      %2463 = vmatpush1.msra.mxu0 0.0
      %2464 = vmatprep.subr.mxu0 0.0
      %2465 = vmatpush1.msra.mxu0 0.0
      %2466 = vmatprep.subr.mxu0 0.0
      %2467 = vmatpush1.msra.mxu0 0.0
      %2468 = vmatprep.subr.mxu0 0.0
      %2469 = vmatpush1.msra.mxu0 0.0
      %2470 = vmatprep.subr.mxu0 0.0
      %2471 = vmatpush1.msra.mxu0 0.0
      %2472 = vmatprep.subr.mxu0 0.0
      %2473 = vmatpush1.msra.mxu0 0.0
      %2474 = vmatprep.subr.mxu0 0.0
      %2475 = vmatpush1.msra.mxu0 0.0
      %2476 = vmatprep.subr.mxu0 0.0
      %2477 = vmatpush1.msra.mxu0 0.0
      %2478 = vmatprep.subr.mxu0 0.0
      %2479 = vmatpush1.msra.mxu0 0.0
      %2480 = vmatprep.subr.mxu0 0.0
      %2481 = vmatpush1.msra.mxu0 0.0
      %2482 = vmatprep.subr.mxu0 0.0
      %2483 = vmatpush1.msra.mxu0 0.0
      %2484 = vmatprep.subr.mxu0 0.0
      %2485 = vmatpush1.msra.mxu0 0.0
      %2486 = vmatprep.subr.mxu0 0.0
      %2487 = vmatpush1.msra.mxu0 0.0
      %2488 = vmatprep.subr.mxu0 0.0
      %2489 = vmatpush1.msra.mxu0 0.0
      %2490 = vmatprep.subr.mxu0 0.0
      %2491 = vmatpush1.msra.mxu0 0.0
      %2492 = vmatprep.subr.mxu0 0.0
      %2493 = vmatpush1.msra.mxu0 0.0
      %2494 = vmatprep.subr.mxu0 0.0
      %2495 = vmatpush1.msra.mxu0 0.0
      %2496 = vmatprep.subr.mxu0 0.0
      %2497 = vmatpush1.msra.mxu0 0.0
      %2498 = vmatprep.subr.mxu0 0.0
      %2499 = vmatpush1.msra.mxu0 0.0
      %2500 = vmatprep.subr.mxu0 0.0
      %2501 = vmatpush1.msra.mxu0 0.0
      %2502 = vmatprep.subr.mxu0 0.0
      %2503 = vmatpush1.msra.mxu0 0.0
      %2504 = vmatprep.subr.mxu0 0.0
      %2505 = vmatpush1.msra.mxu0 0.0
      %2506 = vmatprep.subr.mxu0 0.0
      %2507 = vmatpush1.msra.mxu0 0.0
      %2508 = vmatprep.subr.mxu0 0.0
      %2509 = vmatpush1.msra.mxu0 0.0
      %2510 = vmatprep.subr.mxu0 0.0
      %2511 = vmatpush1.msra.mxu0 0.0
      %2512 = vmatprep.mubr.f32.mxu0 0.0
      %2513 = vmatmul.mubr.f32.gmra.mrb[0].mxu0 %v2440
      %v2514 = vpop.f32.mrb[0].mxu0
      %v2515 = vadd.f32 %v2438, %v2514
      %v2516 = vpop.f32.mrb[0].mxu0
      %v2517 = vadd.f32 %v2438, %v2516
      %2518 = vdwg.mxu0
      %v2519 = vsub.f32 0.0, %v2515
      %v2520 = vsub.f32 0.0, %v2517
      %v2521 = vmul.f32 %v2519, 1.442695
      %v2522 = vpow.pop %v2521
      %v2523 = vmul.f32 %v2520, 1.442695
      %v2524 = vpow.pop %v2523
      %v2525 = vadd.f32 %v2522, 1.0
      %v2526 = vadd.f32 %v2524, 1.0
      %v2527 = vrcp.pop %v2525
      %v2528 = vmul.f32 1.0, %v2527
      %v2529 = vrcp.pop %v2526
      %v2530 = vmul.f32 1.0, %v2529
      %v2531 = vld [vmem:[%s615] sm:$0x77]
      %v2533 = vcombine.high %v2531, %v2531
      %2535 = vst [vmem:[#allocation2 + $0x8] sm:$0x7] %v2531
      %2536 = vst [vmem:[#allocation2 + $0x10] sm:$0x7] %v2533
      %v2539 = vcombine.low %v2528, %v2530
      %v2541 = vunpack.c.l.s4 1966171168
      %v2542 = vunpack.c.0.s8 %v2541
      %v2543 = vlaneseq
      %v2544 = vshrl.u32 %v2543, 7
      %v2545 = vsub.s32 %v2542, %v2544
      %v2546 = vrot.slane %v2539, %v2545
      %v2548 = vunpack.c.l.s4 1966171168
      %v2549 = vunpack.c.0.s8 %v2548
      %v2550 = vlaneseq
      %v2551 = vshrl.u32 %v2550, 7
      %v2552 = vsub.s32 %v2549, %v2551
      %v2553 = vrot.slane %v2546, %v2552
      %v2555 = vlaneseq
      %vm2556 = vcmp.ge.s32.totalorder %v2555, 0
      %vm2557 = vcmp.lt.s32.totalorder %v2555, 256
      %vm2558 = vmand %vm2556, %vm2557
      %s2559 = scalar_lea.vmem [#allocation2], 11
      %2560 = vst.msk [vmem:[%s2559] ss:$8 sm:$0x3] %vm2558, %v2553
      %2561 = vst.msk [vmem:[%s2559] ss:$8 sm:$0x0] %vm2558, %v2553
      %v2562 = vld [vmem:[%s8] sm:$0xff]
      %v2563 = vld [vmem:[%s8 + $0x8] sm:$0xff]
      %v2564 = vld [vmem:[#allocation2] sm:$0xf]
      %v2565 = vld [vmem:[#allocation2 + $0x8] sm:$0xf]
      %v2566 = vld [vmem:[#allocation2 + $0x10] sm:$0xf]
      %2570 = vrot.lane.b32.xlu0 %v2564, 17
      %v2571 = vpop.permute.xlu0 %2570
      %2572 = vrot.lane.b32.xlu0 %v2565, 17
      %v2573 = vpop.permute.xlu0 %2572
      %2574 = vrot.lane.b32.xlu0 %v2566, 17
      %v2575 = vpop.permute.xlu0 %2574
      %v2576 = vsel %vm715, %v2571, %v2573
      %v2577 = vsel %vm715, %v2573, %v2575
      %v2580 = vsel %vm704, %v2576, 0.0
      %v2581 = vsel %vm705, %v2577, 0.0
      %s2582 = scalar_lea.vmem %s8, 16
      %v2583 = vld [vmem:[%s2582] sm:$0xff]
      %v2584 = vld [vmem:[%s2582 + $0x8] sm:$0xff]
      %2585 = vrot.lane.b32.xlu0 %v2564, 16
      %v2586 = vpop.permute.xlu0 %2585
      %2587 = vrot.lane.b32.xlu0 %v2565, 16
      %v2588 = vpop.permute.xlu0 %2587
      %2589 = vrot.lane.b32.xlu0 %v2566, 16
      %v2590 = vpop.permute.xlu0 %2589
      %v2591 = vsel %vm730, %v2586, %v2588
      %v2592 = vsel %vm730, %v2588, %v2590
      %vm2593 = vcmask 31744
      %v2595 = vsel %vm2593, %v2583, 0
      %v2598 = vsel %vm2593, %v2584, 0
      %vm2600 = vcmask 1043456
      %v2601 = vsel %vm2600, %v2591, 0
      %v2603 = vsel %vm2600, %v2592, 0
      %2605 = vmatprep.subr.mxu0 %v2603
      %2606 = vmatpush1.msra.mxu0 %v2601
      %2607 = vmatprep.subr.mxu0 0.0
      %2608 = vmatpush1.msra.mxu0 0.0
      %2609 = vmatprep.subr.mxu0 0.0
      %2610 = vmatpush1.msra.mxu0 0.0
      %2611 = vmatprep.subr.mxu0 0.0
      %2612 = vmatpush1.msra.mxu0 0.0
      %2613 = vmatprep.subr.mxu0 0.0
      %2614 = vmatpush1.msra.mxu0 0.0
      %2615 = vmatprep.subr.mxu0 0.0
      %2616 = vmatpush1.msra.mxu0 0.0
      %2617 = vmatprep.subr.mxu0 0.0
      %2618 = vmatpush1.msra.mxu0 0.0
      %2619 = vmatprep.subr.mxu0 0.0
      %2620 = vmatpush1.msra.mxu0 0.0
      %2621 = vmatprep.subr.mxu0 0.0
      %2622 = vmatpush1.msra.mxu0 0.0
      %2623 = vmatprep.subr.mxu0 0.0
      %2624 = vmatpush1.msra.mxu0 0.0
      %2625 = vmatprep.subr.mxu0 0.0
      %2626 = vmatpush1.msra.mxu0 0.0
      %2627 = vmatprep.subr.mxu0 0.0
      %2628 = vmatpush1.msra.mxu0 0.0
      %2629 = vmatprep.subr.mxu0 0.0
      %2630 = vmatpush1.msra.mxu0 0.0
      %2631 = vmatprep.subr.mxu0 0.0
      %2632 = vmatpush1.msra.mxu0 0.0
      %2633 = vmatprep.subr.mxu0 0.0
      %2634 = vmatpush1.msra.mxu0 0.0
      %2635 = vmatprep.subr.mxu0 0.0
      %2636 = vmatpush1.msra.mxu0 0.0
      %2637 = vmatprep.subr.mxu0 0.0
      %2638 = vmatpush1.msra.mxu0 0.0
      %2639 = vmatprep.subr.mxu0 0.0
      %2640 = vmatpush1.msra.mxu0 0.0
      %2641 = vmatprep.subr.mxu0 0.0
      %2642 = vmatpush1.msra.mxu0 0.0
      %2643 = vmatprep.subr.mxu0 0.0
      %2644 = vmatpush1.msra.mxu0 0.0
      %2645 = vmatprep.subr.mxu0 0.0
      %2646 = vmatpush1.msra.mxu0 0.0
      %2647 = vmatprep.subr.mxu0 0.0
      %2648 = vmatpush1.msra.mxu0 0.0
      %2649 = vmatprep.subr.mxu0 0.0
      %2650 = vmatpush1.msra.mxu0 0.0
      %2651 = vmatprep.subr.mxu0 0.0
      %2652 = vmatpush1.msra.mxu0 0.0
      %2653 = vmatprep.subr.mxu0 0.0
      %2654 = vmatpush1.msra.mxu0 0.0
      %2655 = vmatprep.subr.mxu0 0.0
      %2656 = vmatpush1.msra.mxu0 0.0
      %2657 = vmatprep.subr.mxu0 0.0
      %2658 = vmatpush1.msra.mxu0 0.0
      %2659 = vmatprep.subr.mxu0 0.0
      %2660 = vmatpush1.msra.mxu0 0.0
      %2661 = vmatprep.subr.mxu0 0.0
      %2662 = vmatpush1.msra.mxu0 0.0
      %2663 = vmatprep.subr.mxu0 0.0
      %2664 = vmatpush1.msra.mxu0 0.0
      %2665 = vmatprep.subr.mxu0 0.0
      %2666 = vmatpush1.msra.mxu0 0.0
      %2667 = vmatprep.subr.mxu0 0.0
      %2668 = vmatpush1.msra.mxu0 0.0
      %2669 = vmatprep.mubr.f32.mxu0 0.0
      %2670 = vmatmul.mubr.f32.gmra.mrb[0].mxu0 %v2595
      %v2671 = vpop.f32.mrb[0].mxu0
      %v2672 = vadd.f32 0.0, %v2671
      %v2673 = vpop.f32.mrb[0].mxu0
      %v2674 = vadd.f32 0.0, %v2673
      %2675 = vmatprep.mubr.f32.mxu0 0.0
      %2676 = vmatmul.mubr.f32.gmra.mrb[0].mxu0 %v2598
      %v2677 = vpop.f32.mrb[0].mxu0
      %v2678 = vadd.f32 0.0, %v2677
      %v2679 = vpop.f32.mrb[0].mxu0
      %v2680 = vadd.f32 0.0, %v2679
      %2681 = vdwg.mxu0
      %v2683 = vsel %vm2593, %v2562, 0
      %v2686 = vsel %vm2593, %v2563, 0
      %v2689 = vsel %vm2600, %v2580, 0
      %v2692 = vsel %vm2600, %v2581, 0
      %2694 = vmatprep.subr.mxu0 %v2692
      %2695 = vmatpush1.msra.mxu0 %v2689
      %2696 = vmatprep.subr.mxu0 0.0
      %2697 = vmatpush1.msra.mxu0 0.0
      %2698 = vmatprep.subr.mxu0 0.0
      %2699 = vmatpush1.msra.mxu0 0.0
      %2700 = vmatprep.subr.mxu0 0.0
      %2701 = vmatpush1.msra.mxu0 0.0
      %2702 = vmatprep.subr.mxu0 0.0
      %2703 = vmatpush1.msra.mxu0 0.0
      %2704 = vmatprep.subr.mxu0 0.0
      %2705 = vmatpush1.msra.mxu0 0.0
      %2706 = vmatprep.subr.mxu0 0.0
      %2707 = vmatpush1.msra.mxu0 0.0
      %2708 = vmatprep.subr.mxu0 0.0
      %2709 = vmatpush1.msra.mxu0 0.0
      %2710 = vmatprep.subr.mxu0 0.0
      %2711 = vmatpush1.msra.mxu0 0.0
      %2712 = vmatprep.subr.mxu0 0.0
      %2713 = vmatpush1.msra.mxu0 0.0
      %2714 = vmatprep.subr.mxu0 0.0
      %2715 = vmatpush1.msra.mxu0 0.0
      %2716 = vmatprep.subr.mxu0 0.0
      %2717 = vmatpush1.msra.mxu0 0.0
      %2718 = vmatprep.subr.mxu0 0.0
      %2719 = vmatpush1.msra.mxu0 0.0
      %2720 = vmatprep.subr.mxu0 0.0
      %2721 = vmatpush1.msra.mxu0 0.0
      %2722 = vmatprep.subr.mxu0 0.0
      %2723 = vmatpush1.msra.mxu0 0.0
      %2724 = vmatprep.subr.mxu0 0.0
      %2725 = vmatpush1.msra.mxu0 0.0
      %2726 = vmatprep.subr.mxu0 0.0
      %2727 = vmatpush1.msra.mxu0 0.0
      %2728 = vmatprep.subr.mxu0 0.0
      %2729 = vmatpush1.msra.mxu0 0.0
      %2730 = vmatprep.subr.mxu0 0.0
      %2731 = vmatpush1.msra.mxu0 0.0
      %2732 = vmatprep.subr.mxu0 0.0
      %2733 = vmatpush1.msra.mxu0 0.0
      %2734 = vmatprep.subr.mxu0 0.0
      %2735 = vmatpush1.msra.mxu0 0.0
      %2736 = vmatprep.subr.mxu0 0.0
      %2737 = vmatpush1.msra.mxu0 0.0
      %2738 = vmatprep.subr.mxu0 0.0
      %2739 = vmatpush1.msra.mxu0 0.0
      %2740 = vmatprep.subr.mxu0 0.0
      %2741 = vmatpush1.msra.mxu0 0.0
      %2742 = vmatprep.subr.mxu0 0.0
      %2743 = vmatpush1.msra.mxu0 0.0
      %2744 = vmatprep.subr.mxu0 0.0
      %2745 = vmatpush1.msra.mxu0 0.0
      %2746 = vmatprep.subr.mxu0 0.0
      %2747 = vmatpush1.msra.mxu0 0.0
      %2748 = vmatprep.subr.mxu0 0.0
      %2749 = vmatpush1.msra.mxu0 0.0
      %2750 = vmatprep.subr.mxu0 0.0
      %2751 = vmatpush1.msra.mxu0 0.0
      %2752 = vmatprep.subr.mxu0 0.0
      %2753 = vmatpush1.msra.mxu0 0.0
      %2754 = vmatprep.subr.mxu0 0.0
      %2755 = vmatpush1.msra.mxu0 0.0
      %2756 = vmatprep.subr.mxu0 0.0
      %2757 = vmatpush1.msra.mxu0 0.0
      %2758 = vmatprep.mubr.f32.mxu0 0.0
      %2759 = vmatmul.mubr.f32.gmra.mrb[0].mxu0 %v2683
      %v2760 = vpop.f32.mrb[0].mxu0
      %v2761 = vadd.f32 %v2672, %v2760
      %v2762 = vpop.f32.mrb[0].mxu0
      %v2763 = vadd.f32 %v2674, %v2762
      %2764 = vmatprep.mubr.f32.mxu0 0.0
      %2765 = vmatmul.mubr.f32.gmra.mrb[0].mxu0 %v2686
      %v2766 = vpop.f32.mrb[0].mxu0
      %v2767 = vadd.f32 %v2678, %v2766
      %v2768 = vpop.f32.mrb[0].mxu0
      %v2769 = vadd.f32 %v2680, %v2768
      %2770 = vdwg.mxu0
      %s2771 = scalar_lea.vmem %s8, 32
      %v2772 = vld [vmem:[%s2771] sm:$0xff]
      %v2773 = vld [vmem:[%s2771 + $0x8] sm:$0xff]
      %2774 = vrot.lane.b32.xlu0 %v2564, 15
      %v2775 = vpop.permute.xlu0 %2774
      %2776 = vrot.lane.b32.xlu0 %v2565, 15
      %v2777 = vpop.permute.xlu0 %2776
      %2778 = vrot.lane.b32.xlu0 %v2566, 15
      %v2779 = vpop.permute.xlu0 %2778
      %v2780 = vsel %vm905, %v2775, %v2777
      %v2781 = vsel %vm905, %v2777, %v2779
      %v2784 = vsel %vm897, %v2780, 0.0
      %v2785 = vsel %vm898, %v2781, 0.0
      %v2787 = vsel %vm2593, %v2772, 0
      %v2790 = vsel %vm2593, %v2773, 0
      %v2793 = vsel %vm2600, %v2784, 0
      %v2796 = vsel %vm2600, %v2785, 0
      %2798 = vmatprep.subr.mxu0 %v2796
      %2799 = vmatpush1.msra.mxu0 %v2793
      %2800 = vmatprep.subr.mxu0 0.0
      %2801 = vmatpush1.msra.mxu0 0.0
      %2802 = vmatprep.subr.mxu0 0.0
      %2803 = vmatpush1.msra.mxu0 0.0
      %2804 = vmatprep.subr.mxu0 0.0
      %2805 = vmatpush1.msra.mxu0 0.0
      %2806 = vmatprep.subr.mxu0 0.0
      %2807 = vmatpush1.msra.mxu0 0.0
      %2808 = vmatprep.subr.mxu0 0.0
      %2809 = vmatpush1.msra.mxu0 0.0
      %2810 = vmatprep.subr.mxu0 0.0
      %2811 = vmatpush1.msra.mxu0 0.0
      %2812 = vmatprep.subr.mxu0 0.0
      %2813 = vmatpush1.msra.mxu0 0.0
      %2814 = vmatprep.subr.mxu0 0.0
      %2815 = vmatpush1.msra.mxu0 0.0
      %2816 = vmatprep.subr.mxu0 0.0
      %2817 = vmatpush1.msra.mxu0 0.0
      %2818 = vmatprep.subr.mxu0 0.0
      %2819 = vmatpush1.msra.mxu0 0.0
      %2820 = vmatprep.subr.mxu0 0.0
      %2821 = vmatpush1.msra.mxu0 0.0
      %2822 = vmatprep.subr.mxu0 0.0
      %2823 = vmatpush1.msra.mxu0 0.0
      %2824 = vmatprep.subr.mxu0 0.0
      %2825 = vmatpush1.msra.mxu0 0.0
      %2826 = vmatprep.subr.mxu0 0.0
      %2827 = vmatpush1.msra.mxu0 0.0
      %2828 = vmatprep.subr.mxu0 0.0
      %2829 = vmatpush1.msra.mxu0 0.0
      %2830 = vmatprep.subr.mxu0 0.0
      %2831 = vmatpush1.msra.mxu0 0.0
      %2832 = vmatprep.subr.mxu0 0.0
      %2833 = vmatpush1.msra.mxu0 0.0
      %2834 = vmatprep.subr.mxu0 0.0
      %2835 = vmatpush1.msra.mxu0 0.0
      %2836 = vmatprep.subr.mxu0 0.0
      %2837 = vmatpush1.msra.mxu0 0.0
      %2838 = vmatprep.subr.mxu0 0.0
      %2839 = vmatpush1.msra.mxu0 0.0
      %2840 = vmatprep.subr.mxu0 0.0
      %2841 = vmatpush1.msra.mxu0 0.0
      %2842 = vmatprep.subr.mxu0 0.0
      %2843 = vmatpush1.msra.mxu0 0.0
      %2844 = vmatprep.subr.mxu0 0.0
      %2845 = vmatpush1.msra.mxu0 0.0
      %2846 = vmatprep.subr.mxu0 0.0
      %2847 = vmatpush1.msra.mxu0 0.0
      %2848 = vmatprep.subr.mxu0 0.0
      %2849 = vmatpush1.msra.mxu0 0.0
      %2850 = vmatprep.subr.mxu0 0.0
      %2851 = vmatpush1.msra.mxu0 0.0
      %2852 = vmatprep.subr.mxu0 0.0
      %2853 = vmatpush1.msra.mxu0 0.0
      %2854 = vmatprep.subr.mxu0 0.0
      %2855 = vmatpush1.msra.mxu0 0.0
      %2856 = vmatprep.subr.mxu0 0.0
      %2857 = vmatpush1.msra.mxu0 0.0
      %2858 = vmatprep.subr.mxu0 0.0
      %2859 = vmatpush1.msra.mxu0 0.0
      %2860 = vmatprep.subr.mxu0 0.0
      %2861 = vmatpush1.msra.mxu0 0.0
      %2862 = vmatprep.mubr.f32.mxu0 0.0
      %2863 = vmatmul.mubr.f32.gmra.mrb[0].mxu0 %v2787
      %v2864 = vpop.f32.mrb[0].mxu0
      %v2865 = vadd.f32 0.0, %v2864
      %v2866 = vpop.f32.mrb[0].mxu0
      %v2867 = vadd.f32 0.0, %v2866
      %2868 = vmatprep.mubr.f32.mxu0 0.0
      %2869 = vmatmul.mubr.f32.gmra.mrb[0].mxu0 %v2790
      %v2870 = vpop.f32.mrb[0].mxu0
      %v2871 = vadd.f32 0.0, %v2870
      %v2872 = vpop.f32.mrb[0].mxu0
      %v2873 = vadd.f32 0.0, %v2872
      %2874 = vdwg.mxu0
      %v2875 = vadd.f32 %v2761, %v2865
      %v2876 = vadd.f32 %v2763, %v2867
      %v2877 = vadd.f32 %v2767, %v2871
      %v2878 = vadd.f32 %v2769, %v2873
      %s2879 = scalar_lea.vmem %s8, 48
      %v2880 = vld [vmem:[%s2879] sm:$0xff]
      %v2881 = vld [vmem:[%s2879 + $0x8] sm:$0xff]
      %2882 = vrot.lane.b32.xlu0 %v2564, 1
      %v2883 = vpop.permute.xlu0 %2882
      %2884 = vrot.lane.b32.xlu0 %v2565, 1
      %v2885 = vpop.permute.xlu0 %2884
      %2886 = vrot.lane.b32.xlu0 %v2566, 1
      %v2887 = vpop.permute.xlu0 %2886
      %v2888 = vsel %vm1002, %v2883, %v2885
      %v2889 = vsel %vm1002, %v2885, %v2887
      %v2892 = vsel %vm704, %v2888, 0.0
      %v2893 = vsel %vm705, %v2889, 0.0
      %v2895 = vsel %vm2593, %v2880, 0
      %v2898 = vsel %vm2593, %v2881, 0
      %v2901 = vsel %vm2600, %v2892, 0
      %v2904 = vsel %vm2600, %v2893, 0
      %2906 = vmatprep.subr.mxu0 %v2904
      %2907 = vmatpush1.msra.mxu0 %v2901
      %2908 = vmatprep.subr.mxu0 0.0
      %2909 = vmatpush1.msra.mxu0 0.0
      %2910 = vmatprep.subr.mxu0 0.0
      %2911 = vmatpush1.msra.mxu0 0.0
      %2912 = vmatprep.subr.mxu0 0.0
      %2913 = vmatpush1.msra.mxu0 0.0
      %2914 = vmatprep.subr.mxu0 0.0
      %2915 = vmatpush1.msra.mxu0 0.0
      %2916 = vmatprep.subr.mxu0 0.0
      %2917 = vmatpush1.msra.mxu0 0.0
      %2918 = vmatprep.subr.mxu0 0.0
      %2919 = vmatpush1.msra.mxu0 0.0
      %2920 = vmatprep.subr.mxu0 0.0
      %2921 = vmatpush1.msra.mxu0 0.0
      %2922 = vmatprep.subr.mxu0 0.0
      %2923 = vmatpush1.msra.mxu0 0.0
      %2924 = vmatprep.subr.mxu0 0.0
      %2925 = vmatpush1.msra.mxu0 0.0
      %2926 = vmatprep.subr.mxu0 0.0
      %2927 = vmatpush1.msra.mxu0 0.0
      %2928 = vmatprep.subr.mxu0 0.0
      %2929 = vmatpush1.msra.mxu0 0.0
      %2930 = vmatprep.subr.mxu0 0.0
      %2931 = vmatpush1.msra.mxu0 0.0
      %2932 = vmatprep.subr.mxu0 0.0
      %2933 = vmatpush1.msra.mxu0 0.0
      %2934 = vmatprep.subr.mxu0 0.0
      %2935 = vmatpush1.msra.mxu0 0.0
      %2936 = vmatprep.subr.mxu0 0.0
      %2937 = vmatpush1.msra.mxu0 0.0
      %2938 = vmatprep.subr.mxu0 0.0
      %2939 = vmatpush1.msra.mxu0 0.0
      %2940 = vmatprep.subr.mxu0 0.0
      %2941 = vmatpush1.msra.mxu0 0.0
      %2942 = vmatprep.subr.mxu0 0.0
      %2943 = vmatpush1.msra.mxu0 0.0
      %2944 = vmatprep.subr.mxu0 0.0
      %2945 = vmatpush1.msra.mxu0 0.0
      %2946 = vmatprep.subr.mxu0 0.0
      %2947 = vmatpush1.msra.mxu0 0.0
      %2948 = vmatprep.subr.mxu0 0.0
      %2949 = vmatpush1.msra.mxu0 0.0
      %2950 = vmatprep.subr.mxu0 0.0
      %2951 = vmatpush1.msra.mxu0 0.0
      %2952 = vmatprep.subr.mxu0 0.0
      %2953 = vmatpush1.msra.mxu0 0.0
      %2954 = vmatprep.subr.mxu0 0.0
      %2955 = vmatpush1.msra.mxu0 0.0
      %2956 = vmatprep.subr.mxu0 0.0
      %2957 = vmatpush1.msra.mxu0 0.0
      %2958 = vmatprep.subr.mxu0 0.0
      %2959 = vmatpush1.msra.mxu0 0.0
      %2960 = vmatprep.subr.mxu0 0.0
      %2961 = vmatpush1.msra.mxu0 0.0
      %2962 = vmatprep.subr.mxu0 0.0
      %2963 = vmatpush1.msra.mxu0 0.0
      %2964 = vmatprep.subr.mxu0 0.0
      %2965 = vmatpush1.msra.mxu0 0.0
      %2966 = vmatprep.subr.mxu0 0.0
      %2967 = vmatpush1.msra.mxu0 0.0
      %2968 = vmatprep.subr.mxu0 0.0
      %2969 = vmatpush1.msra.mxu0 0.0
      %2970 = vmatprep.mubr.f32.mxu0 0.0
      %2971 = vmatmul.mubr.f32.gmra.mrb[0].mxu0 %v2895
      %v2972 = vpop.f32.mrb[0].mxu0
      %v2973 = vadd.f32 0.0, %v2972
      %v2974 = vpop.f32.mrb[0].mxu0
      %v2975 = vadd.f32 0.0, %v2974
      %2976 = vmatprep.mubr.f32.mxu0 0.0
      %2977 = vmatmul.mubr.f32.gmra.mrb[0].mxu0 %v2898
      %v2978 = vpop.f32.mrb[0].mxu0
      %v2979 = vadd.f32 0.0, %v2978
      %v2980 = vpop.f32.mrb[0].mxu0
      %v2981 = vadd.f32 0.0, %v2980
      %2982 = vdwg.mxu0
      %v2983 = vadd.f32 %v2875, %v2973
      %v2984 = vadd.f32 %v2876, %v2975
      %v2985 = vadd.f32 %v2877, %v2979
      %v2986 = vadd.f32 %v2878, %v2981
      %s2987 = scalar_lea.vmem %s8, 64
      %v2988 = vld [vmem:[%s2987] sm:$0xff]
      %v2989 = vld [vmem:[%s2987 + $0x8] sm:$0xff]
      %v2991 = vsel %vm2593, %v2988, 0
      %v2994 = vsel %vm2593, %v2989, 0
      %v2996 = vsel %vm2600, %v2565, 0
      %v2998 = vsel %vm2600, %v2566, 0
      %3000 = vmatprep.subr.mxu0 %v2998
      %3001 = vmatpush1.msra.mxu0 %v2996
      %3002 = vmatprep.subr.mxu0 0.0
      %3003 = vmatpush1.msra.mxu0 0.0
      %3004 = vmatprep.subr.mxu0 0.0
      %3005 = vmatpush1.msra.mxu0 0.0
      %3006 = vmatprep.subr.mxu0 0.0
      %3007 = vmatpush1.msra.mxu0 0.0
      %3008 = vmatprep.subr.mxu0 0.0
      %3009 = vmatpush1.msra.mxu0 0.0
      %3010 = vmatprep.subr.mxu0 0.0
      %3011 = vmatpush1.msra.mxu0 0.0
      %3012 = vmatprep.subr.mxu0 0.0
      %3013 = vmatpush1.msra.mxu0 0.0
      %3014 = vmatprep.subr.mxu0 0.0
      %3015 = vmatpush1.msra.mxu0 0.0
      %3016 = vmatprep.subr.mxu0 0.0
      %3017 = vmatpush1.msra.mxu0 0.0
      %3018 = vmatprep.subr.mxu0 0.0
      %3019 = vmatpush1.msra.mxu0 0.0
      %3020 = vmatprep.subr.mxu0 0.0
      %3021 = vmatpush1.msra.mxu0 0.0
      %3022 = vmatprep.subr.mxu0 0.0
      %3023 = vmatpush1.msra.mxu0 0.0
      %3024 = vmatprep.subr.mxu0 0.0
      %3025 = vmatpush1.msra.mxu0 0.0
      %3026 = vmatprep.subr.mxu0 0.0
      %3027 = vmatpush1.msra.mxu0 0.0
      %3028 = vmatprep.subr.mxu0 0.0
      %3029 = vmatpush1.msra.mxu0 0.0
      %3030 = vmatprep.subr.mxu0 0.0
      %3031 = vmatpush1.msra.mxu0 0.0
      %3032 = vmatprep.subr.mxu0 0.0
      %3033 = vmatpush1.msra.mxu0 0.0
      %3034 = vmatprep.subr.mxu0 0.0
      %3035 = vmatpush1.msra.mxu0 0.0
      %3036 = vmatprep.subr.mxu0 0.0
      %3037 = vmatpush1.msra.mxu0 0.0
      %3038 = vmatprep.subr.mxu0 0.0
      %3039 = vmatpush1.msra.mxu0 0.0
      %3040 = vmatprep.subr.mxu0 0.0
      %3041 = vmatpush1.msra.mxu0 0.0
      %3042 = vmatprep.subr.mxu0 0.0
      %3043 = vmatpush1.msra.mxu0 0.0
      %3044 = vmatprep.subr.mxu0 0.0
      %3045 = vmatpush1.msra.mxu0 0.0
      %3046 = vmatprep.subr.mxu0 0.0
      %3047 = vmatpush1.msra.mxu0 0.0
      %3048 = vmatprep.subr.mxu0 0.0
      %3049 = vmatpush1.msra.mxu0 0.0
      %3050 = vmatprep.subr.mxu0 0.0
      %3051 = vmatpush1.msra.mxu0 0.0
      %3052 = vmatprep.subr.mxu0 0.0
      %3053 = vmatpush1.msra.mxu0 0.0
      %3054 = vmatprep.subr.mxu0 0.0
      %3055 = vmatpush1.msra.mxu0 0.0
      %3056 = vmatprep.subr.mxu0 0.0
      %3057 = vmatpush1.msra.mxu0 0.0
      %3058 = vmatprep.subr.mxu0 0.0
      %3059 = vmatpush1.msra.mxu0 0.0
      %3060 = vmatprep.subr.mxu0 0.0
      %3061 = vmatpush1.msra.mxu0 0.0
      %3062 = vmatprep.subr.mxu0 0.0
      %3063 = vmatpush1.msra.mxu0 0.0
      %3064 = vmatprep.mubr.f32.mxu0 0.0
      %3065 = vmatmul.mubr.f32.gmra.mrb[0].mxu0 %v2991
      %v3066 = vpop.f32.mrb[0].mxu0
      %v3067 = vadd.f32 0.0, %v3066
      %v3068 = vpop.f32.mrb[0].mxu0
      %v3069 = vadd.f32 0.0, %v3068
      %3070 = vmatprep.mubr.f32.mxu0 0.0
      %3071 = vmatmul.mubr.f32.gmra.mrb[0].mxu0 %v2994
      %v3072 = vpop.f32.mrb[0].mxu0
      %v3073 = vadd.f32 0.0, %v3072
      %v3074 = vpop.f32.mrb[0].mxu0
      %v3075 = vadd.f32 0.0, %v3074
      %3076 = vdwg.mxu0
      %v3077 = vadd.f32 %v2983, %v3067
      %v3078 = vadd.f32 %v2984, %v3069
      %v3079 = vadd.f32 %v2985, %v3073
      %v3080 = vadd.f32 %v2986, %v3075
      %s3081 = scalar_lea.vmem %s8, 80
      %v3082 = vld [vmem:[%s3081] sm:$0xff]
      %v3083 = vld [vmem:[%s3081 + $0x8] sm:$0xff]
      %v3084 = vld [vmem:[#allocation2 + $0x8] sm:$0xf]
      %v3085 = vld [vmem:[#allocation2 + $0x10] sm:$0xf]
      %v3086 = vld [vmem:[#allocation2 + $0x18] sm:$0xf]
      %3090 = vrot.lane.b32.xlu0 %v3084, 127
      %v3091 = vpop.permute.xlu0 %3090
      %3092 = vrot.lane.b32.xlu0 %v3085, 127
      %v3093 = vpop.permute.xlu0 %3092
      %3094 = vrot.lane.b32.xlu0 %v3086, 127
      %v3095 = vpop.permute.xlu0 %3094
      %v3096 = vsel %vm1187, %v3091, %v3093
      %v3097 = vsel %vm1187, %v3093, %v3095
      %v3100 = vsel %vm897, %v3096, 0.0
      %v3101 = vsel %vm898, %v3097, 0.0
      %v3103 = vsel %vm2593, %v3082, 0
      %v3106 = vsel %vm2593, %v3083, 0
      %v3109 = vsel %vm2600, %v3100, 0
      %v3112 = vsel %vm2600, %v3101, 0
      %3114 = vmatprep.subr.mxu0 %v3112
      %3115 = vmatpush1.msra.mxu0 %v3109
      %3116 = vmatprep.subr.mxu0 0.0
      %3117 = vmatpush1.msra.mxu0 0.0
      %3118 = vmatprep.subr.mxu0 0.0
      %3119 = vmatpush1.msra.mxu0 0.0
      %3120 = vmatprep.subr.mxu0 0.0
      %3121 = vmatpush1.msra.mxu0 0.0
      %3122 = vmatprep.subr.mxu0 0.0
      %3123 = vmatpush1.msra.mxu0 0.0
      %3124 = vmatprep.subr.mxu0 0.0
      %3125 = vmatpush1.msra.mxu0 0.0
      %3126 = vmatprep.subr.mxu0 0.0
      %3127 = vmatpush1.msra.mxu0 0.0
      %3128 = vmatprep.subr.mxu0 0.0
      %3129 = vmatpush1.msra.mxu0 0.0
      %3130 = vmatprep.subr.mxu0 0.0
      %3131 = vmatpush1.msra.mxu0 0.0
      %3132 = vmatprep.subr.mxu0 0.0
      %3133 = vmatpush1.msra.mxu0 0.0
      %3134 = vmatprep.subr.mxu0 0.0
      %3135 = vmatpush1.msra.mxu0 0.0
      %3136 = vmatprep.subr.mxu0 0.0
      %3137 = vmatpush1.msra.mxu0 0.0
      %3138 = vmatprep.subr.mxu0 0.0
      %3139 = vmatpush1.msra.mxu0 0.0
      %3140 = vmatprep.subr.mxu0 0.0
      %3141 = vmatpush1.msra.mxu0 0.0
      %3142 = vmatprep.subr.mxu0 0.0
      %3143 = vmatpush1.msra.mxu0 0.0
      %3144 = vmatprep.subr.mxu0 0.0
      %3145 = vmatpush1.msra.mxu0 0.0
      %3146 = vmatprep.subr.mxu0 0.0
      %3147 = vmatpush1.msra.mxu0 0.0
      %3148 = vmatprep.subr.mxu0 0.0
      %3149 = vmatpush1.msra.mxu0 0.0
      %3150 = vmatprep.subr.mxu0 0.0
      %3151 = vmatpush1.msra.mxu0 0.0
      %3152 = vmatprep.subr.mxu0 0.0
      %3153 = vmatpush1.msra.mxu0 0.0
      %3154 = vmatprep.subr.mxu0 0.0
      %3155 = vmatpush1.msra.mxu0 0.0
      %3156 = vmatprep.subr.mxu0 0.0
      %3157 = vmatpush1.msra.mxu0 0.0
      %3158 = vmatprep.subr.mxu0 0.0
      %3159 = vmatpush1.msra.mxu0 0.0
      %3160 = vmatprep.subr.mxu0 0.0
      %3161 = vmatpush1.msra.mxu0 0.0
      %3162 = vmatprep.subr.mxu0 0.0
      %3163 = vmatpush1.msra.mxu0 0.0
      %3164 = vmatprep.subr.mxu0 0.0
      %3165 = vmatpush1.msra.mxu0 0.0
      %3166 = vmatprep.subr.mxu0 0.0
      %3167 = vmatpush1.msra.mxu0 0.0
      %3168 = vmatprep.subr.mxu0 0.0
      %3169 = vmatpush1.msra.mxu0 0.0
      %3170 = vmatprep.subr.mxu0 0.0
      %3171 = vmatpush1.msra.mxu0 0.0
      %3172 = vmatprep.subr.mxu0 0.0
      %3173 = vmatpush1.msra.mxu0 0.0
      %3174 = vmatprep.subr.mxu0 0.0
      %3175 = vmatpush1.msra.mxu0 0.0
      %3176 = vmatprep.subr.mxu0 0.0
      %3177 = vmatpush1.msra.mxu0 0.0
      %3178 = vmatprep.mubr.f32.mxu0 0.0
      %3179 = vmatmul.mubr.f32.gmra.mrb[0].mxu0 %v3103
      %v3180 = vpop.f32.mrb[0].mxu0
      %v3181 = vadd.f32 0.0, %v3180
      %v3182 = vpop.f32.mrb[0].mxu0
      %v3183 = vadd.f32 0.0, %v3182
      %3184 = vmatprep.mubr.f32.mxu0 0.0
      %3185 = vmatmul.mubr.f32.gmra.mrb[0].mxu0 %v3106
      %v3186 = vpop.f32.mrb[0].mxu0
      %v3187 = vadd.f32 0.0, %v3186
      %v3188 = vpop.f32.mrb[0].mxu0
      %v3189 = vadd.f32 0.0, %v3188
      %3190 = vdwg.mxu0
      %v3191 = vadd.f32 %v3077, %v3181
      %v3192 = vadd.f32 %v3078, %v3183
      %v3193 = vadd.f32 %v3079, %v3187
      %v3194 = vadd.f32 %v3080, %v3189
      %s3195 = scalar_lea.vmem %s8, 96
      %v3196 = vld [vmem:[%s3195] sm:$0xff]
      %v3197 = vld [vmem:[%s3195 + $0x8] sm:$0xff]
      %3198 = vrot.lane.b32.xlu0 %v3084, 113
      %v3199 = vpop.permute.xlu0 %3198
      %3200 = vrot.lane.b32.xlu0 %v3085, 113
      %v3201 = vpop.permute.xlu0 %3200
      %3202 = vrot.lane.b32.xlu0 %v3086, 113
      %v3203 = vpop.permute.xlu0 %3202
      %v3204 = vsel %vm1284, %v3199, %v3201
      %v3205 = vsel %vm1284, %v3201, %v3203
      %v3208 = vsel %vm704, %v3204, 0.0
      %v3209 = vsel %vm705, %v3205, 0.0
      %v3211 = vsel %vm2593, %v3196, 0
      %v3214 = vsel %vm2593, %v3197, 0
      %v3217 = vsel %vm2600, %v3208, 0
      %v3220 = vsel %vm2600, %v3209, 0
      %3222 = vmatprep.subr.mxu0 %v3220
      %3223 = vmatpush1.msra.mxu0 %v3217
      %3224 = vmatprep.subr.mxu0 0.0
      %3225 = vmatpush1.msra.mxu0 0.0
      %3226 = vmatprep.subr.mxu0 0.0
      %3227 = vmatpush1.msra.mxu0 0.0
      %3228 = vmatprep.subr.mxu0 0.0
      %3229 = vmatpush1.msra.mxu0 0.0
      %3230 = vmatprep.subr.mxu0 0.0
      %3231 = vmatpush1.msra.mxu0 0.0
      %3232 = vmatprep.subr.mxu0 0.0
      %3233 = vmatpush1.msra.mxu0 0.0
      %3234 = vmatprep.subr.mxu0 0.0
      %3235 = vmatpush1.msra.mxu0 0.0
      %3236 = vmatprep.subr.mxu0 0.0
      %3237 = vmatpush1.msra.mxu0 0.0
      %3238 = vmatprep.subr.mxu0 0.0
      %3239 = vmatpush1.msra.mxu0 0.0
      %3240 = vmatprep.subr.mxu0 0.0
      %3241 = vmatpush1.msra.mxu0 0.0
      %3242 = vmatprep.subr.mxu0 0.0
      %3243 = vmatpush1.msra.mxu0 0.0
      %3244 = vmatprep.subr.mxu0 0.0
      %3245 = vmatpush1.msra.mxu0 0.0
      %3246 = vmatprep.subr.mxu0 0.0
      %3247 = vmatpush1.msra.mxu0 0.0
      %3248 = vmatprep.subr.mxu0 0.0
      %3249 = vmatpush1.msra.mxu0 0.0
      %3250 = vmatprep.subr.mxu0 0.0
      %3251 = vmatpush1.msra.mxu0 0.0
      %3252 = vmatprep.subr.mxu0 0.0
      %3253 = vmatpush1.msra.mxu0 0.0
      %3254 = vmatprep.subr.mxu0 0.0
      %3255 = vmatpush1.msra.mxu0 0.0
      %3256 = vmatprep.subr.mxu0 0.0
      %3257 = vmatpush1.msra.mxu0 0.0
      %3258 = vmatprep.subr.mxu0 0.0
      %3259 = vmatpush1.msra.mxu0 0.0
      %3260 = vmatprep.subr.mxu0 0.0
      %3261 = vmatpush1.msra.mxu0 0.0
      %3262 = vmatprep.subr.mxu0 0.0
      %3263 = vmatpush1.msra.mxu0 0.0
      %3264 = vmatprep.subr.mxu0 0.0
      %3265 = vmatpush1.msra.mxu0 0.0
      %3266 = vmatprep.subr.mxu0 0.0
      %3267 = vmatpush1.msra.mxu0 0.0
      %3268 = vmatprep.subr.mxu0 0.0
      %3269 = vmatpush1.msra.mxu0 0.0
      %3270 = vmatprep.subr.mxu0 0.0
      %3271 = vmatpush1.msra.mxu0 0.0
      %3272 = vmatprep.subr.mxu0 0.0
      %3273 = vmatpush1.msra.mxu0 0.0
      %3274 = vmatprep.subr.mxu0 0.0
      %3275 = vmatpush1.msra.mxu0 0.0
      %3276 = vmatprep.subr.mxu0 0.0
      %3277 = vmatpush1.msra.mxu0 0.0
      %3278 = vmatprep.subr.mxu0 0.0
      %3279 = vmatpush1.msra.mxu0 0.0
      %3280 = vmatprep.subr.mxu0 0.0
      %3281 = vmatpush1.msra.mxu0 0.0
      %3282 = vmatprep.subr.mxu0 0.0
      %3283 = vmatpush1.msra.mxu0 0.0
      %3284 = vmatprep.subr.mxu0 0.0
      %3285 = vmatpush1.msra.mxu0 0.0
      %3286 = vmatprep.mubr.f32.mxu0 0.0
      %3287 = vmatmul.mubr.f32.gmra.mrb[0].mxu0 %v3211
      %v3288 = vpop.f32.mrb[0].mxu0
      %v3289 = vadd.f32 0.0, %v3288
      %v3290 = vpop.f32.mrb[0].mxu0
      %v3291 = vadd.f32 0.0, %v3290
      %3292 = vmatprep.mubr.f32.mxu0 0.0
      %3293 = vmatmul.mubr.f32.gmra.mrb[0].mxu0 %v3214
      %v3294 = vpop.f32.mrb[0].mxu0
      %v3295 = vadd.f32 0.0, %v3294
      %v3296 = vpop.f32.mrb[0].mxu0
      %v3297 = vadd.f32 0.0, %v3296
      %3298 = vdwg.mxu0
      %v3299 = vadd.f32 %v3191, %v3289
      %v3300 = vadd.f32 %v3192, %v3291
      %v3301 = vadd.f32 %v3193, %v3295
      %v3302 = vadd.f32 %v3194, %v3297
      %s3303 = scalar_lea.vmem %s8, 112
      %v3304 = vld [vmem:[%s3303] sm:$0xff]
      %v3305 = vld [vmem:[%s3303 + $0x8] sm:$0xff]
      %3306 = vrot.lane.b32.xlu0 %v3084, 112
      %v3307 = vpop.permute.xlu0 %3306
      %3308 = vrot.lane.b32.xlu0 %v3085, 112
      %v3309 = vpop.permute.xlu0 %3308
      %3310 = vrot.lane.b32.xlu0 %v3086, 112
      %v3311 = vpop.permute.xlu0 %3310
      %v3312 = vsel %vm1381, %v3307, %v3309
      %v3313 = vsel %vm1381, %v3309, %v3311
      %v3315 = vsel %vm2593, %v3304, 0
      %v3318 = vsel %vm2593, %v3305, 0
      %v3320 = vsel %vm2600, %v3312, 0
      %v3322 = vsel %vm2600, %v3313, 0
      %3324 = vmatprep.subr.mxu0 %v3322
      %3325 = vmatpush1.msra.mxu0 %v3320
      %3326 = vmatprep.subr.mxu0 0.0
      %3327 = vmatpush1.msra.mxu0 0.0
      %3328 = vmatprep.subr.mxu0 0.0
      %3329 = vmatpush1.msra.mxu0 0.0
      %3330 = vmatprep.subr.mxu0 0.0
      %3331 = vmatpush1.msra.mxu0 0.0
      %3332 = vmatprep.subr.mxu0 0.0
      %3333 = vmatpush1.msra.mxu0 0.0
      %3334 = vmatprep.subr.mxu0 0.0
      %3335 = vmatpush1.msra.mxu0 0.0
      %3336 = vmatprep.subr.mxu0 0.0
      %3337 = vmatpush1.msra.mxu0 0.0
      %3338 = vmatprep.subr.mxu0 0.0
      %3339 = vmatpush1.msra.mxu0 0.0
      %3340 = vmatprep.subr.mxu0 0.0
      %3341 = vmatpush1.msra.mxu0 0.0
      %3342 = vmatprep.subr.mxu0 0.0
      %3343 = vmatpush1.msra.mxu0 0.0
      %3344 = vmatprep.subr.mxu0 0.0
      %3345 = vmatpush1.msra.mxu0 0.0
      %3346 = vmatprep.subr.mxu0 0.0
      %3347 = vmatpush1.msra.mxu0 0.0
      %3348 = vmatprep.subr.mxu0 0.0
      %3349 = vmatpush1.msra.mxu0 0.0
      %3350 = vmatprep.subr.mxu0 0.0
      %3351 = vmatpush1.msra.mxu0 0.0
      %3352 = vmatprep.subr.mxu0 0.0
      %3353 = vmatpush1.msra.mxu0 0.0
      %3354 = vmatprep.subr.mxu0 0.0
      %3355 = vmatpush1.msra.mxu0 0.0
      %3356 = vmatprep.subr.mxu0 0.0
      %3357 = vmatpush1.msra.mxu0 0.0
      %3358 = vmatprep.subr.mxu0 0.0
      %3359 = vmatpush1.msra.mxu0 0.0
      %3360 = vmatprep.subr.mxu0 0.0
      %3361 = vmatpush1.msra.mxu0 0.0
      %3362 = vmatprep.subr.mxu0 0.0
      %3363 = vmatpush1.msra.mxu0 0.0
      %3364 = vmatprep.subr.mxu0 0.0
      %3365 = vmatpush1.msra.mxu0 0.0
      %3366 = vmatprep.subr.mxu0 0.0
      %3367 = vmatpush1.msra.mxu0 0.0
      %3368 = vmatprep.subr.mxu0 0.0
      %3369 = vmatpush1.msra.mxu0 0.0
      %3370 = vmatprep.subr.mxu0 0.0
      %3371 = vmatpush1.msra.mxu0 0.0
      %3372 = vmatprep.subr.mxu0 0.0
      %3373 = vmatpush1.msra.mxu0 0.0
      %3374 = vmatprep.subr.mxu0 0.0
      %3375 = vmatpush1.msra.mxu0 0.0
      %3376 = vmatprep.subr.mxu0 0.0
      %3377 = vmatpush1.msra.mxu0 0.0
      %3378 = vmatprep.subr.mxu0 0.0
      %3379 = vmatpush1.msra.mxu0 0.0
      %3380 = vmatprep.subr.mxu0 0.0
      %3381 = vmatpush1.msra.mxu0 0.0
      %3382 = vmatprep.subr.mxu0 0.0
      %3383 = vmatpush1.msra.mxu0 0.0
      %3384 = vmatprep.subr.mxu0 0.0
      %3385 = vmatpush1.msra.mxu0 0.0
      %3386 = vmatprep.subr.mxu0 0.0
      %3387 = vmatpush1.msra.mxu0 0.0
      %3388 = vmatprep.mubr.f32.mxu0 0.0
      %3389 = vmatmul.mubr.f32.gmra.mrb[0].mxu0 %v3315
      %v3390 = vpop.f32.mrb[0].mxu0
      %v3391 = vadd.f32 0.0, %v3390
      %v3392 = vpop.f32.mrb[0].mxu0
      %v3393 = vadd.f32 0.0, %v3392
      %3394 = vmatprep.mubr.f32.mxu0 0.0
      %3395 = vmatmul.mubr.f32.gmra.mrb[0].mxu0 %v3318
      %v3396 = vpop.f32.mrb[0].mxu0
      %v3397 = vadd.f32 0.0, %v3396
      %v3398 = vpop.f32.mrb[0].mxu0
      %v3399 = vadd.f32 0.0, %v3398
      %3400 = vdwg.mxu0
      %v3401 = vadd.f32 %v3299, %v3391
      %v3402 = vadd.f32 %v3300, %v3393
      %v3403 = vadd.f32 %v3301, %v3397
      %v3404 = vadd.f32 %v3302, %v3399
      %s3405 = scalar_lea.vmem %s8, 128
      %v3406 = vld [vmem:[%s3405] sm:$0xff]
      %v3407 = vld [vmem:[%s3405 + $0x8] sm:$0xff]
      %3408 = vrot.lane.b32.xlu0 %v3084, 111
      %v3409 = vpop.permute.xlu0 %3408
      %3410 = vrot.lane.b32.xlu0 %v3085, 111
      %v3411 = vpop.permute.xlu0 %3410
      %3412 = vrot.lane.b32.xlu0 %v3086, 111
      %v3413 = vpop.permute.xlu0 %3412
      %v3414 = vsel %vm1472, %v3409, %v3411
      %v3415 = vsel %vm1472, %v3411, %v3413
      %v3418 = vsel %vm897, %v3414, 0.0
      %v3419 = vsel %vm898, %v3415, 0.0
      %v3421 = vsel %vm2593, %v3406, 0
      %v3424 = vsel %vm2593, %v3407, 0
      %v3427 = vsel %vm2600, %v3418, 0
      %v3430 = vsel %vm2600, %v3419, 0
      %3432 = vmatprep.subr.mxu0 %v3430
      %3433 = vmatpush1.msra.mxu0 %v3427
      %3434 = vmatprep.subr.mxu0 0.0
      %3435 = vmatpush1.msra.mxu0 0.0
      %3436 = vmatprep.subr.mxu0 0.0
      %3437 = vmatpush1.msra.mxu0 0.0
      %3438 = vmatprep.subr.mxu0 0.0
      %3439 = vmatpush1.msra.mxu0 0.0
      %3440 = vmatprep.subr.mxu0 0.0
      %3441 = vmatpush1.msra.mxu0 0.0
      %3442 = vmatprep.subr.mxu0 0.0
      %3443 = vmatpush1.msra.mxu0 0.0
      %3444 = vmatprep.subr.mxu0 0.0
      %3445 = vmatpush1.msra.mxu0 0.0
      %3446 = vmatprep.subr.mxu0 0.0
      %3447 = vmatpush1.msra.mxu0 0.0
      %3448 = vmatprep.subr.mxu0 0.0
      %3449 = vmatpush1.msra.mxu0 0.0
      %3450 = vmatprep.subr.mxu0 0.0
      %3451 = vmatpush1.msra.mxu0 0.0
      %3452 = vmatprep.subr.mxu0 0.0
      %3453 = vmatpush1.msra.mxu0 0.0
      %3454 = vmatprep.subr.mxu0 0.0
      %3455 = vmatpush1.msra.mxu0 0.0
      %3456 = vmatprep.subr.mxu0 0.0
      %3457 = vmatpush1.msra.mxu0 0.0
      %3458 = vmatprep.subr.mxu0 0.0
      %3459 = vmatpush1.msra.mxu0 0.0
      %3460 = vmatprep.subr.mxu0 0.0
      %3461 = vmatpush1.msra.mxu0 0.0
      %3462 = vmatprep.subr.mxu0 0.0
      %3463 = vmatpush1.msra.mxu0 0.0
      %3464 = vmatprep.subr.mxu0 0.0
      %3465 = vmatpush1.msra.mxu0 0.0
      %3466 = vmatprep.subr.mxu0 0.0
      %3467 = vmatpush1.msra.mxu0 0.0
      %3468 = vmatprep.subr.mxu0 0.0
      %3469 = vmatpush1.msra.mxu0 0.0
      %3470 = vmatprep.subr.mxu0 0.0
      %3471 = vmatpush1.msra.mxu0 0.0
      %3472 = vmatprep.subr.mxu0 0.0
      %3473 = vmatpush1.msra.mxu0 0.0
      %3474 = vmatprep.subr.mxu0 0.0
      %3475 = vmatpush1.msra.mxu0 0.0
      %3476 = vmatprep.subr.mxu0 0.0
      %3477 = vmatpush1.msra.mxu0 0.0
      %3478 = vmatprep.subr.mxu0 0.0
      %3479 = vmatpush1.msra.mxu0 0.0
      %3480 = vmatprep.subr.mxu0 0.0
      %3481 = vmatpush1.msra.mxu0 0.0
      %3482 = vmatprep.subr.mxu0 0.0
      %3483 = vmatpush1.msra.mxu0 0.0
      %3484 = vmatprep.subr.mxu0 0.0
      %3485 = vmatpush1.msra.mxu0 0.0
      %3486 = vmatprep.subr.mxu0 0.0
      %3487 = vmatpush1.msra.mxu0 0.0
      %3488 = vmatprep.subr.mxu0 0.0
      %3489 = vmatpush1.msra.mxu0 0.0
      %3490 = vmatprep.subr.mxu0 0.0
      %3491 = vmatpush1.msra.mxu0 0.0
      %3492 = vmatprep.subr.mxu0 0.0
      %3493 = vmatpush1.msra.mxu0 0.0
      %3494 = vmatprep.subr.mxu0 0.0
      %3495 = vmatpush1.msra.mxu0 0.0
      %3496 = vmatprep.mubr.f32.mxu0 0.0
      %3497 = vmatmul.mubr.f32.gmra.mrb[0].mxu0 %v3421
      %v3498 = vpop.f32.mrb[0].mxu0
      %v3499 = vadd.f32 0.0, %v3498
      %v3500 = vpop.f32.mrb[0].mxu0
      %v3501 = vadd.f32 0.0, %v3500
      %3502 = vmatprep.mubr.f32.mxu0 0.0
      %3503 = vmatmul.mubr.f32.gmra.mrb[0].mxu0 %v3424
      %v3504 = vpop.f32.mrb[0].mxu0
      %v3505 = vadd.f32 0.0, %v3504
      %v3506 = vpop.f32.mrb[0].mxu0
      %v3507 = vadd.f32 0.0, %v3506
      %3508 = vdwg.mxu0
      %v3509 = vadd.f32 %v3401, %v3499
      %v3510 = vadd.f32 %v3402, %v3501
      %v3511 = vadd.f32 %v3403, %v3505
      %v3512 = vadd.f32 %v3404, %v3507
      %v3513 = vld [vmem:[%s9] sm:$0xff]
      %v3514 = vld [vmem:[%s9 + $0x8] sm:$0xff]
      %3516 = vset.pattern.permute.xlu0 0
      %3517 = vperm.xlu0 %3516, %v3513
      %v3518 = vpop.permute.xlu0 %3517
      %3521 = vset.pattern.permute.xlu0 0
      %3522 = vperm.xlu0 %3521, %v3514
      %v3523 = vpop.permute.xlu0 %3522
      %v3525 = vadd.f32 %v3509, %v3518
      %v3526 = vadd.f32 %v3510, %v3518
      %v3527 = vadd.f32 %v3511, %v3523
      %v3528 = vadd.f32 %v3512, %v3523
      %v3529 = vmax.f32 %v3525, 0.0
      %v3530 = vmax.f32 %v3526, 0.0
      %v3531 = vmax.f32 %v3527, 0.0
      %v3532 = vmax.f32 %v3528, 0.0
      %3533 = vst [vmem:[#allocation2 + $0x8] sm:$0xff] %v3529
      %3534 = vst [vmem:[#allocation2 + $0x10] sm:$0xff] %v3530
      %3535 = vst [vmem:[#allocation2 + $0x28] sm:$0xff] %v3531
      %3536 = vst [vmem:[#allocation2 + $0x30] sm:$0xff] %v3532
      %v3537 = vld [vmem:[%s10] sm:$0xff]
      %v3538 = vld [vmem:[%s10 + $0x8] sm:$0xff]
      %v3539 = vld [vmem:[#allocation2] sm:$0xff]
      %v3540 = vld [vmem:[#allocation2 + $0x8] sm:$0xff]
      %v3541 = vld [vmem:[#allocation2 + $0x10] sm:$0xff]
      %v3542 = vld [vmem:[#allocation2 + $0x20] sm:$0xff]
      %v3543 = vld [vmem:[#allocation2 + $0x28] sm:$0xff]
      %v3544 = vld [vmem:[#allocation2 + $0x30] sm:$0xff]
      %3551 = vrot.lane.b32.xlu0 %v3539, 17
      %v3552 = vpop.permute.xlu0 %3551
      %3553 = vrot.lane.b32.xlu0 %v3540, 17
      %v3554 = vpop.permute.xlu0 %3553
      %3555 = vrot.lane.b32.xlu0 %v3541, 17
      %v3556 = vpop.permute.xlu0 %3555
      %3557 = vrot.lane.b32.xlu0 %v3542, 17
      %v3558 = vpop.permute.xlu0 %3557
      %3559 = vrot.lane.b32.xlu0 %v3543, 17
      %v3560 = vpop.permute.xlu0 %3559
      %3561 = vrot.lane.b32.xlu0 %v3544, 17
      %v3562 = vpop.permute.xlu0 %3561
      %v3563 = vsel %vm715, %v3552, %v3554
      %v3564 = vsel %vm715, %v3554, %v3556
      %v3565 = vsel %vm715, %v3558, %v3560
      %v3566 = vsel %vm715, %v3560, %v3562
      %v3571 = vsel %vm704, %v3563, 0.0
      %v3572 = vsel %vm705, %v3564, 0.0
      %v3573 = vsel %vm704, %v3565, 0.0
      %v3574 = vsel %vm705, %v3566, 0.0
      %s3575 = scalar_lea.vmem %s10, 16
      %v3576 = vld [vmem:[%s3575] sm:$0xff]
      %v3577 = vld [vmem:[%s3575 + $0x8] sm:$0xff]
      %3578 = vrot.lane.b32.xlu0 %v3539, 16
      %v3579 = vpop.permute.xlu0 %3578
      %3580 = vrot.lane.b32.xlu0 %v3540, 16
      %v3581 = vpop.permute.xlu0 %3580
      %3582 = vrot.lane.b32.xlu0 %v3541, 16
      %v3583 = vpop.permute.xlu0 %3582
      %3584 = vrot.lane.b32.xlu0 %v3542, 16
      %v3585 = vpop.permute.xlu0 %3584
      %3586 = vrot.lane.b32.xlu0 %v3543, 16
      %v3587 = vpop.permute.xlu0 %3586
      %3588 = vrot.lane.b32.xlu0 %v3544, 16
      %v3589 = vpop.permute.xlu0 %3588
      %v3590 = vsel %vm730, %v3579, %v3581
      %v3591 = vsel %vm730, %v3581, %v3583
      %v3592 = vsel %vm730, %v3585, %v3587
      %v3593 = vsel %vm730, %v3587, %v3589
      %v3599 = vsel %vm730, %v3576, 0
      %v3602 = vsel %vm730, %v3577, 0
      %3604 = vmatprep.subr.mxu0 %v3591
      %3605 = vmatpush1.msra.mxu0 %v3590
      %3606 = vmatprep.subr.mxu0 %v3593
      %3607 = vmatpush1.msra.mxu0 %v3592
      %3608 = vmatprep.subr.mxu0 0.0
      %3609 = vmatpush1.msra.mxu0 0.0
      %3610 = vmatprep.subr.mxu0 0.0
      %3611 = vmatpush1.msra.mxu0 0.0
      %3612 = vmatprep.subr.mxu0 0.0
      %3613 = vmatpush1.msra.mxu0 0.0
      %3614 = vmatprep.subr.mxu0 0.0
      %3615 = vmatpush1.msra.mxu0 0.0
      %3616 = vmatprep.subr.mxu0 0.0
      %3617 = vmatpush1.msra.mxu0 0.0
      %3618 = vmatprep.subr.mxu0 0.0
      %3619 = vmatpush1.msra.mxu0 0.0
      %3620 = vmatprep.subr.mxu0 0.0
      %3621 = vmatpush1.msra.mxu0 0.0
      %3622 = vmatprep.subr.mxu0 0.0
      %3623 = vmatpush1.msra.mxu0 0.0
      %3624 = vmatprep.subr.mxu0 0.0
      %3625 = vmatpush1.msra.mxu0 0.0
      %3626 = vmatprep.subr.mxu0 0.0
      %3627 = vmatpush1.msra.mxu0 0.0
      %3628 = vmatprep.subr.mxu0 0.0
      %3629 = vmatpush1.msra.mxu0 0.0
      %3630 = vmatprep.subr.mxu0 0.0
      %3631 = vmatpush1.msra.mxu0 0.0
      %3632 = vmatprep.subr.mxu0 0.0
      %3633 = vmatpush1.msra.mxu0 0.0
      %3634 = vmatprep.subr.mxu0 0.0
      %3635 = vmatpush1.msra.mxu0 0.0
      %3636 = vmatprep.subr.mxu0 0.0
      %3637 = vmatpush1.msra.mxu0 0.0
      %3638 = vmatprep.subr.mxu0 0.0
      %3639 = vmatpush1.msra.mxu0 0.0
      %3640 = vmatprep.subr.mxu0 0.0
      %3641 = vmatpush1.msra.mxu0 0.0
      %3642 = vmatprep.subr.mxu0 0.0
      %3643 = vmatpush1.msra.mxu0 0.0
      %3644 = vmatprep.subr.mxu0 0.0
      %3645 = vmatpush1.msra.mxu0 0.0
      %3646 = vmatprep.subr.mxu0 0.0
      %3647 = vmatpush1.msra.mxu0 0.0
      %3648 = vmatprep.subr.mxu0 0.0
      %3649 = vmatpush1.msra.mxu0 0.0
      %3650 = vmatprep.subr.mxu0 0.0
      %3651 = vmatpush1.msra.mxu0 0.0
      %3652 = vmatprep.subr.mxu0 0.0
      %3653 = vmatpush1.msra.mxu0 0.0
      %3654 = vmatprep.subr.mxu0 0.0
      %3655 = vmatpush1.msra.mxu0 0.0
      %3656 = vmatprep.subr.mxu0 0.0
      %3657 = vmatpush1.msra.mxu0 0.0
      %3658 = vmatprep.subr.mxu0 0.0
      %3659 = vmatpush1.msra.mxu0 0.0
      %3660 = vmatprep.subr.mxu0 0.0
      %3661 = vmatpush1.msra.mxu0 0.0
      %3662 = vmatprep.subr.mxu0 0.0
      %3663 = vmatpush1.msra.mxu0 0.0
      %3664 = vmatprep.subr.mxu0 0.0
      %3665 = vmatpush1.msra.mxu0 0.0
      %3666 = vmatprep.subr.mxu0 0.0
      %3667 = vmatpush1.msra.mxu0 0.0
      %3668 = vmatprep.mubr.f32.mxu0 0.0
      %3669 = vmatmul.mubr.f32.gmra.mrb[0].mxu0 %v3599
      %v3670 = vpop.f32.mrb[0].mxu0
      %v3671 = vadd.f32 0.0, %v3670
      %v3672 = vpop.f32.mrb[0].mxu0
      %v3673 = vadd.f32 0.0, %v3672
      %3674 = vmatprep.mubr.f32.mxu0 0.0
      %3675 = vmatmul.mubr.f32.gmra.mrb[0].mxu0 %v3602
      %v3676 = vpop.f32.mrb[0].mxu0
      %v3677 = vadd.f32 0.0, %v3676
      %v3678 = vpop.f32.mrb[0].mxu0
      %v3679 = vadd.f32 0.0, %v3678
      %3680 = vdwg.mxu0
      %v3682 = vsel %vm730, %v3537, 0
      %v3685 = vsel %vm730, %v3538, 0
      %3687 = vmatprep.subr.mxu0 %v3572
      %3688 = vmatpush1.msra.mxu0 %v3571
      %3689 = vmatprep.subr.mxu0 %v3574
      %3690 = vmatpush1.msra.mxu0 %v3573
      %3691 = vmatprep.subr.mxu0 0.0
      %3692 = vmatpush1.msra.mxu0 0.0
      %3693 = vmatprep.subr.mxu0 0.0
      %3694 = vmatpush1.msra.mxu0 0.0
      %3695 = vmatprep.subr.mxu0 0.0
      %3696 = vmatpush1.msra.mxu0 0.0
      %3697 = vmatprep.subr.mxu0 0.0
      %3698 = vmatpush1.msra.mxu0 0.0
      %3699 = vmatprep.subr.mxu0 0.0
      %3700 = vmatpush1.msra.mxu0 0.0
      %3701 = vmatprep.subr.mxu0 0.0
      %3702 = vmatpush1.msra.mxu0 0.0
      %3703 = vmatprep.subr.mxu0 0.0
      %3704 = vmatpush1.msra.mxu0 0.0
      %3705 = vmatprep.subr.mxu0 0.0
      %3706 = vmatpush1.msra.mxu0 0.0
      %3707 = vmatprep.subr.mxu0 0.0
      %3708 = vmatpush1.msra.mxu0 0.0
      %3709 = vmatprep.subr.mxu0 0.0
      %3710 = vmatpush1.msra.mxu0 0.0
      %3711 = vmatprep.subr.mxu0 0.0
      %3712 = vmatpush1.msra.mxu0 0.0
      %3713 = vmatprep.subr.mxu0 0.0
      %3714 = vmatpush1.msra.mxu0 0.0
      %3715 = vmatprep.subr.mxu0 0.0
      %3716 = vmatpush1.msra.mxu0 0.0
      %3717 = vmatprep.subr.mxu0 0.0
      %3718 = vmatpush1.msra.mxu0 0.0
      %3719 = vmatprep.subr.mxu0 0.0
      %3720 = vmatpush1.msra.mxu0 0.0
      %3721 = vmatprep.subr.mxu0 0.0
      %3722 = vmatpush1.msra.mxu0 0.0
      %3723 = vmatprep.subr.mxu0 0.0
      %3724 = vmatpush1.msra.mxu0 0.0
      %3725 = vmatprep.subr.mxu0 0.0
      %3726 = vmatpush1.msra.mxu0 0.0
      %3727 = vmatprep.subr.mxu0 0.0
      %3728 = vmatpush1.msra.mxu0 0.0
      %3729 = vmatprep.subr.mxu0 0.0
      %3730 = vmatpush1.msra.mxu0 0.0
      %3731 = vmatprep.subr.mxu0 0.0
      %3732 = vmatpush1.msra.mxu0 0.0
      %3733 = vmatprep.subr.mxu0 0.0
      %3734 = vmatpush1.msra.mxu0 0.0
      %3735 = vmatprep.subr.mxu0 0.0
      %3736 = vmatpush1.msra.mxu0 0.0
      %3737 = vmatprep.subr.mxu0 0.0
      %3738 = vmatpush1.msra.mxu0 0.0
      %3739 = vmatprep.subr.mxu0 0.0
      %3740 = vmatpush1.msra.mxu0 0.0
      %3741 = vmatprep.subr.mxu0 0.0
      %3742 = vmatpush1.msra.mxu0 0.0
      %3743 = vmatprep.subr.mxu0 0.0
      %3744 = vmatpush1.msra.mxu0 0.0
      %3745 = vmatprep.subr.mxu0 0.0
      %3746 = vmatpush1.msra.mxu0 0.0
      %3747 = vmatprep.subr.mxu0 0.0
      %3748 = vmatpush1.msra.mxu0 0.0
      %3749 = vmatprep.subr.mxu0 0.0
      %3750 = vmatpush1.msra.mxu0 0.0
      %3751 = vmatprep.mubr.f32.mxu0 0.0
      %3752 = vmatmul.mubr.f32.gmra.mrb[0].mxu0 %v3682
      %v3753 = vpop.f32.mrb[0].mxu0
      %v3754 = vadd.f32 %v3671, %v3753
      %v3755 = vpop.f32.mrb[0].mxu0
      %v3756 = vadd.f32 %v3673, %v3755
      %3757 = vmatprep.mubr.f32.mxu0 0.0
      %3758 = vmatmul.mubr.f32.gmra.mrb[0].mxu0 %v3685
      %v3759 = vpop.f32.mrb[0].mxu0
      %v3760 = vadd.f32 %v3677, %v3759
      %v3761 = vpop.f32.mrb[0].mxu0
      %v3762 = vadd.f32 %v3679, %v3761
      %3763 = vdwg.mxu0
      %s3764 = scalar_lea.vmem %s10, 32
      %v3765 = vld [vmem:[%s3764] sm:$0xff]
      %v3766 = vld [vmem:[%s3764 + $0x8] sm:$0xff]
      %3767 = vrot.lane.b32.xlu0 %v3539, 15
      %v3768 = vpop.permute.xlu0 %3767
      %3769 = vrot.lane.b32.xlu0 %v3540, 15
      %v3770 = vpop.permute.xlu0 %3769
      %3771 = vrot.lane.b32.xlu0 %v3541, 15
      %v3772 = vpop.permute.xlu0 %3771
      %3773 = vrot.lane.b32.xlu0 %v3542, 15
      %v3774 = vpop.permute.xlu0 %3773
      %3775 = vrot.lane.b32.xlu0 %v3543, 15
      %v3776 = vpop.permute.xlu0 %3775
      %3777 = vrot.lane.b32.xlu0 %v3544, 15
      %v3778 = vpop.permute.xlu0 %3777
      %v3779 = vsel %vm905, %v3768, %v3770
      %v3780 = vsel %vm905, %v3770, %v3772
      %v3781 = vsel %vm905, %v3774, %v3776
      %v3782 = vsel %vm905, %v3776, %v3778
      %v3787 = vsel %vm897, %v3779, 0.0
      %v3788 = vsel %vm898, %v3780, 0.0
      %v3789 = vsel %vm897, %v3781, 0.0
      %v3790 = vsel %vm898, %v3782, 0.0
      %v3792 = vsel %vm730, %v3765, 0
      %v3795 = vsel %vm730, %v3766, 0
      %3797 = vmatprep.subr.mxu0 %v3788
      %3798 = vmatpush1.msra.mxu0 %v3787
      %3799 = vmatprep.subr.mxu0 %v3790
      %3800 = vmatpush1.msra.mxu0 %v3789
      %3801 = vmatprep.subr.mxu0 0.0
      %3802 = vmatpush1.msra.mxu0 0.0
      %3803 = vmatprep.subr.mxu0 0.0
      %3804 = vmatpush1.msra.mxu0 0.0
      %3805 = vmatprep.subr.mxu0 0.0
      %3806 = vmatpush1.msra.mxu0 0.0
      %3807 = vmatprep.subr.mxu0 0.0
      %3808 = vmatpush1.msra.mxu0 0.0
      %3809 = vmatprep.subr.mxu0 0.0
      %3810 = vmatpush1.msra.mxu0 0.0
      %3811 = vmatprep.subr.mxu0 0.0
      %3812 = vmatpush1.msra.mxu0 0.0
      %3813 = vmatprep.subr.mxu0 0.0
      %3814 = vmatpush1.msra.mxu0 0.0
      %3815 = vmatprep.subr.mxu0 0.0
      %3816 = vmatpush1.msra.mxu0 0.0
      %3817 = vmatprep.subr.mxu0 0.0
      %3818 = vmatpush1.msra.mxu0 0.0
      %3819 = vmatprep.subr.mxu0 0.0
      %3820 = vmatpush1.msra.mxu0 0.0
      %3821 = vmatprep.subr.mxu0 0.0
      %3822 = vmatpush1.msra.mxu0 0.0
      %3823 = vmatprep.subr.mxu0 0.0
      %3824 = vmatpush1.msra.mxu0 0.0
      %3825 = vmatprep.subr.mxu0 0.0
      %3826 = vmatpush1.msra.mxu0 0.0
      %3827 = vmatprep.subr.mxu0 0.0
      %3828 = vmatpush1.msra.mxu0 0.0
      %3829 = vmatprep.subr.mxu0 0.0
      %3830 = vmatpush1.msra.mxu0 0.0
      %3831 = vmatprep.subr.mxu0 0.0
      %3832 = vmatpush1.msra.mxu0 0.0
      %3833 = vmatprep.subr.mxu0 0.0
      %3834 = vmatpush1.msra.mxu0 0.0
      %3835 = vmatprep.subr.mxu0 0.0
      %3836 = vmatpush1.msra.mxu0 0.0
      %3837 = vmatprep.subr.mxu0 0.0
      %3838 = vmatpush1.msra.mxu0 0.0
      %3839 = vmatprep.subr.mxu0 0.0
      %3840 = vmatpush1.msra.mxu0 0.0
      %3841 = vmatprep.subr.mxu0 0.0
      %3842 = vmatpush1.msra.mxu0 0.0
      %3843 = vmatprep.subr.mxu0 0.0
      %3844 = vmatpush1.msra.mxu0 0.0
      %3845 = vmatprep.subr.mxu0 0.0
      %3846 = vmatpush1.msra.mxu0 0.0
      %3847 = vmatprep.subr.mxu0 0.0
      %3848 = vmatpush1.msra.mxu0 0.0
      %3849 = vmatprep.subr.mxu0 0.0
      %3850 = vmatpush1.msra.mxu0 0.0
      %3851 = vmatprep.subr.mxu0 0.0
      %3852 = vmatpush1.msra.mxu0 0.0
      %3853 = vmatprep.subr.mxu0 0.0
      %3854 = vmatpush1.msra.mxu0 0.0
      %3855 = vmatprep.subr.mxu0 0.0
      %3856 = vmatpush1.msra.mxu0 0.0
      %3857 = vmatprep.subr.mxu0 0.0
      %3858 = vmatpush1.msra.mxu0 0.0
      %3859 = vmatprep.subr.mxu0 0.0
      %3860 = vmatpush1.msra.mxu0 0.0
      %3861 = vmatprep.mubr.f32.mxu0 0.0
      %3862 = vmatmul.mubr.f32.gmra.mrb[0].mxu0 %v3792
      %v3863 = vpop.f32.mrb[0].mxu0
      %v3864 = vadd.f32 0.0, %v3863
      %v3865 = vpop.f32.mrb[0].mxu0
      %v3866 = vadd.f32 0.0, %v3865
      %3867 = vmatprep.mubr.f32.mxu0 0.0
      %3868 = vmatmul.mubr.f32.gmra.mrb[0].mxu0 %v3795
      %v3869 = vpop.f32.mrb[0].mxu0
      %v3870 = vadd.f32 0.0, %v3869
      %v3871 = vpop.f32.mrb[0].mxu0
      %v3872 = vadd.f32 0.0, %v3871
      %3873 = vdwg.mxu0
      %v3874 = vadd.f32 %v3754, %v3864
      %v3875 = vadd.f32 %v3756, %v3866
      %v3876 = vadd.f32 %v3760, %v3870
      %v3877 = vadd.f32 %v3762, %v3872
      %s3878 = scalar_lea.vmem %s10, 48
      %v3879 = vld [vmem:[%s3878] sm:$0xff]
      %v3880 = vld [vmem:[%s3878 + $0x8] sm:$0xff]
      %3881 = vrot.lane.b32.xlu0 %v3539, 1
      %v3882 = vpop.permute.xlu0 %3881
      %3883 = vrot.lane.b32.xlu0 %v3540, 1
      %v3884 = vpop.permute.xlu0 %3883
      %3885 = vrot.lane.b32.xlu0 %v3541, 1
      %v3886 = vpop.permute.xlu0 %3885
      %3887 = vrot.lane.b32.xlu0 %v3542, 1
      %v3888 = vpop.permute.xlu0 %3887
      %3889 = vrot.lane.b32.xlu0 %v3543, 1
      %v3890 = vpop.permute.xlu0 %3889
      %3891 = vrot.lane.b32.xlu0 %v3544, 1
      %v3892 = vpop.permute.xlu0 %3891
      %v3893 = vsel %vm1002, %v3882, %v3884
      %v3894 = vsel %vm1002, %v3884, %v3886
      %v3895 = vsel %vm1002, %v3888, %v3890
      %v3896 = vsel %vm1002, %v3890, %v3892
      %v3901 = vsel %vm704, %v3893, 0.0
      %v3902 = vsel %vm705, %v3894, 0.0
      %v3903 = vsel %vm704, %v3895, 0.0
      %v3904 = vsel %vm705, %v3896, 0.0
      %v3906 = vsel %vm730, %v3879, 0
      %v3909 = vsel %vm730, %v3880, 0
      %3911 = vmatprep.subr.mxu0 %v3902
      %3912 = vmatpush1.msra.mxu0 %v3901
      %3913 = vmatprep.subr.mxu0 %v3904
      %3914 = vmatpush1.msra.mxu0 %v3903
      %3915 = vmatprep.subr.mxu0 0.0
      %3916 = vmatpush1.msra.mxu0 0.0
      %3917 = vmatprep.subr.mxu0 0.0
      %3918 = vmatpush1.msra.mxu0 0.0
      %3919 = vmatprep.subr.mxu0 0.0
      %3920 = vmatpush1.msra.mxu0 0.0
      %3921 = vmatprep.subr.mxu0 0.0
      %3922 = vmatpush1.msra.mxu0 0.0
      %3923 = vmatprep.subr.mxu0 0.0
      %3924 = vmatpush1.msra.mxu0 0.0
      %3925 = vmatprep.subr.mxu0 0.0
      %3926 = vmatpush1.msra.mxu0 0.0
      %3927 = vmatprep.subr.mxu0 0.0
      %3928 = vmatpush1.msra.mxu0 0.0
      %3929 = vmatprep.subr.mxu0 0.0
      %3930 = vmatpush1.msra.mxu0 0.0
      %3931 = vmatprep.subr.mxu0 0.0
      %3932 = vmatpush1.msra.mxu0 0.0
      %3933 = vmatprep.subr.mxu0 0.0
      %3934 = vmatpush1.msra.mxu0 0.0
      %3935 = vmatprep.subr.mxu0 0.0
      %3936 = vmatpush1.msra.mxu0 0.0
      %3937 = vmatprep.subr.mxu0 0.0
      %3938 = vmatpush1.msra.mxu0 0.0
      %3939 = vmatprep.subr.mxu0 0.0
      %3940 = vmatpush1.msra.mxu0 0.0
      %3941 = vmatprep.subr.mxu0 0.0
      %3942 = vmatpush1.msra.mxu0 0.0
      %3943 = vmatprep.subr.mxu0 0.0
      %3944 = vmatpush1.msra.mxu0 0.0
      %3945 = vmatprep.subr.mxu0 0.0
      %3946 = vmatpush1.msra.mxu0 0.0
      %3947 = vmatprep.subr.mxu0 0.0
      %3948 = vmatpush1.msra.mxu0 0.0
      %3949 = vmatprep.subr.mxu0 0.0
      %3950 = vmatpush1.msra.mxu0 0.0
      %3951 = vmatprep.subr.mxu0 0.0
      %3952 = vmatpush1.msra.mxu0 0.0
      %3953 = vmatprep.subr.mxu0 0.0
      %3954 = vmatpush1.msra.mxu0 0.0
      %3955 = vmatprep.subr.mxu0 0.0
      %3956 = vmatpush1.msra.mxu0 0.0
      %3957 = vmatprep.subr.mxu0 0.0
      %3958 = vmatpush1.msra.mxu0 0.0
      %3959 = vmatprep.subr.mxu0 0.0
      %3960 = vmatpush1.msra.mxu0 0.0
      %3961 = vmatprep.subr.mxu0 0.0
      %3962 = vmatpush1.msra.mxu0 0.0
      %3963 = vmatprep.subr.mxu0 0.0
      %3964 = vmatpush1.msra.mxu0 0.0
      %3965 = vmatprep.subr.mxu0 0.0
      %3966 = vmatpush1.msra.mxu0 0.0
      %3967 = vmatprep.subr.mxu0 0.0
      %3968 = vmatpush1.msra.mxu0 0.0
      %3969 = vmatprep.subr.mxu0 0.0
      %3970 = vmatpush1.msra.mxu0 0.0
      %3971 = vmatprep.subr.mxu0 0.0
      %3972 = vmatpush1.msra.mxu0 0.0
      %3973 = vmatprep.subr.mxu0 0.0
      %3974 = vmatpush1.msra.mxu0 0.0
      %3975 = vmatprep.mubr.f32.mxu0 0.0
      %3976 = vmatmul.mubr.f32.gmra.mrb[0].mxu0 %v3906
      %v3977 = vpop.f32.mrb[0].mxu0
      %v3978 = vadd.f32 0.0, %v3977
      %v3979 = vpop.f32.mrb[0].mxu0
      %v3980 = vadd.f32 0.0, %v3979
      %3981 = vmatprep.mubr.f32.mxu0 0.0
      %3982 = vmatmul.mubr.f32.gmra.mrb[0].mxu0 %v3909
      %v3983 = vpop.f32.mrb[0].mxu0
      %v3984 = vadd.f32 0.0, %v3983
      %v3985 = vpop.f32.mrb[0].mxu0
      %v3986 = vadd.f32 0.0, %v3985
      %3987 = vdwg.mxu0
      %v3988 = vadd.f32 %v3874, %v3978
      %v3989 = vadd.f32 %v3875, %v3980
      %v3990 = vadd.f32 %v3876, %v3984
      %v3991 = vadd.f32 %v3877, %v3986
      %s3992 = scalar_lea.vmem %s10, 64
      %v3993 = vld [vmem:[%s3992] sm:$0xff]
      %v3994 = vld [vmem:[%s3992 + $0x8] sm:$0xff]
      %v3996 = vsel %vm730, %v3993, 0
      %v3999 = vsel %vm730, %v3994, 0
      %4001 = vmatprep.subr.mxu0 %v3541
      %4002 = vmatpush1.msra.mxu0 %v3540
      %4003 = vmatprep.subr.mxu0 %v3544
      %4004 = vmatpush1.msra.mxu0 %v3543
      %4005 = vmatprep.subr.mxu0 0.0
      %4006 = vmatpush1.msra.mxu0 0.0
      %4007 = vmatprep.subr.mxu0 0.0
      %4008 = vmatpush1.msra.mxu0 0.0
      %4009 = vmatprep.subr.mxu0 0.0
      %4010 = vmatpush1.msra.mxu0 0.0
      %4011 = vmatprep.subr.mxu0 0.0
      %4012 = vmatpush1.msra.mxu0 0.0
      %4013 = vmatprep.subr.mxu0 0.0
      %4014 = vmatpush1.msra.mxu0 0.0
      %4015 = vmatprep.subr.mxu0 0.0
      %4016 = vmatpush1.msra.mxu0 0.0
      %4017 = vmatprep.subr.mxu0 0.0
      %4018 = vmatpush1.msra.mxu0 0.0
      %4019 = vmatprep.subr.mxu0 0.0
      %4020 = vmatpush1.msra.mxu0 0.0
      %4021 = vmatprep.subr.mxu0 0.0
      %4022 = vmatpush1.msra.mxu0 0.0
      %4023 = vmatprep.subr.mxu0 0.0
      %4024 = vmatpush1.msra.mxu0 0.0
      %4025 = vmatprep.subr.mxu0 0.0
      %4026 = vmatpush1.msra.mxu0 0.0
      %4027 = vmatprep.subr.mxu0 0.0
      %4028 = vmatpush1.msra.mxu0 0.0
      %4029 = vmatprep.subr.mxu0 0.0
      %4030 = vmatpush1.msra.mxu0 0.0
      %4031 = vmatprep.subr.mxu0 0.0
      %4032 = vmatpush1.msra.mxu0 0.0
      %4033 = vmatprep.subr.mxu0 0.0
      %4034 = vmatpush1.msra.mxu0 0.0
      %4035 = vmatprep.subr.mxu0 0.0
      %4036 = vmatpush1.msra.mxu0 0.0
      %4037 = vmatprep.subr.mxu0 0.0
      %4038 = vmatpush1.msra.mxu0 0.0
      %4039 = vmatprep.subr.mxu0 0.0
      %4040 = vmatpush1.msra.mxu0 0.0
      %4041 = vmatprep.subr.mxu0 0.0
      %4042 = vmatpush1.msra.mxu0 0.0
      %4043 = vmatprep.subr.mxu0 0.0
      %4044 = vmatpush1.msra.mxu0 0.0
      %4045 = vmatprep.subr.mxu0 0.0
      %4046 = vmatpush1.msra.mxu0 0.0
      %4047 = vmatprep.subr.mxu0 0.0
      %4048 = vmatpush1.msra.mxu0 0.0
      %4049 = vmatprep.subr.mxu0 0.0
      %4050 = vmatpush1.msra.mxu0 0.0
      %4051 = vmatprep.subr.mxu0 0.0
      %4052 = vmatpush1.msra.mxu0 0.0
      %4053 = vmatprep.subr.mxu0 0.0
      %4054 = vmatpush1.msra.mxu0 0.0
      %4055 = vmatprep.subr.mxu0 0.0
      %4056 = vmatpush1.msra.mxu0 0.0
      %4057 = vmatprep.subr.mxu0 0.0
      %4058 = vmatpush1.msra.mxu0 0.0
      %4059 = vmatprep.subr.mxu0 0.0
      %4060 = vmatpush1.msra.mxu0 0.0
      %4061 = vmatprep.subr.mxu0 0.0
      %4062 = vmatpush1.msra.mxu0 0.0
      %4063 = vmatprep.subr.mxu0 0.0
      %4064 = vmatpush1.msra.mxu0 0.0
      %4065 = vmatprep.mubr.f32.mxu0 0.0
      %4066 = vmatmul.mubr.f32.gmra.mrb[0].mxu0 %v3996
      %v4067 = vpop.f32.mrb[0].mxu0
      %v4068 = vadd.f32 0.0, %v4067
      %v4069 = vpop.f32.mrb[0].mxu0
      %v4070 = vadd.f32 0.0, %v4069
      %4071 = vmatprep.mubr.f32.mxu0 0.0
      %4072 = vmatmul.mubr.f32.gmra.mrb[0].mxu0 %v3999
      %v4073 = vpop.f32.mrb[0].mxu0
      %v4074 = vadd.f32 0.0, %v4073
      %v4075 = vpop.f32.mrb[0].mxu0
      %v4076 = vadd.f32 0.0, %v4075
      %4077 = vdwg.mxu0
      %v4078 = vadd.f32 %v3988, %v4068
      %v4079 = vadd.f32 %v3989, %v4070
      %v4080 = vadd.f32 %v3990, %v4074
      %v4081 = vadd.f32 %v3991, %v4076
      %s4082 = scalar_lea.vmem %s10, 80
      %v4083 = vld [vmem:[%s4082] sm:$0xff]
      %v4084 = vld [vmem:[%s4082 + $0x8] sm:$0xff]
      %v4085 = vld [vmem:[#allocation2 + $0x8] sm:$0xff]
      %v4086 = vld [vmem:[#allocation2 + $0x10] sm:$0xff]
      %v4087 = vld [vmem:[#allocation2 + $0x18] sm:$0xff]
      %v4088 = vld [vmem:[#allocation2 + $0x28] sm:$0xff]
      %v4089 = vld [vmem:[#allocation2 + $0x30] sm:$0xff]
      %v4090 = vld [vmem:[#allocation2 + $0x38] sm:$0xff]
      %4097 = vrot.lane.b32.xlu0 %v4085, 127
      %v4098 = vpop.permute.xlu0 %4097
      %4099 = vrot.lane.b32.xlu0 %v4086, 127
      %v4100 = vpop.permute.xlu0 %4099
      %4101 = vrot.lane.b32.xlu0 %v4087, 127
      %v4102 = vpop.permute.xlu0 %4101
      %4103 = vrot.lane.b32.xlu0 %v4088, 127
      %v4104 = vpop.permute.xlu0 %4103
      %4105 = vrot.lane.b32.xlu0 %v4089, 127
      %v4106 = vpop.permute.xlu0 %4105
      %4107 = vrot.lane.b32.xlu0 %v4090, 127
      %v4108 = vpop.permute.xlu0 %4107
      %v4109 = vsel %vm1187, %v4098, %v4100
      %v4110 = vsel %vm1187, %v4100, %v4102
      %v4111 = vsel %vm1187, %v4104, %v4106
      %v4112 = vsel %vm1187, %v4106, %v4108
      %v4117 = vsel %vm897, %v4109, 0.0
      %v4118 = vsel %vm898, %v4110, 0.0
      %v4119 = vsel %vm897, %v4111, 0.0
      %v4120 = vsel %vm898, %v4112, 0.0
      %v4122 = vsel %vm730, %v4083, 0
      %v4125 = vsel %vm730, %v4084, 0
      %4127 = vmatprep.subr.mxu0 %v4118
      %4128 = vmatpush1.msra.mxu0 %v4117
      %4129 = vmatprep.subr.mxu0 %v4120
      %4130 = vmatpush1.msra.mxu0 %v4119
      %4131 = vmatprep.subr.mxu0 0.0
      %4132 = vmatpush1.msra.mxu0 0.0
      %4133 = vmatprep.subr.mxu0 0.0
      %4134 = vmatpush1.msra.mxu0 0.0
      %4135 = vmatprep.subr.mxu0 0.0
      %4136 = vmatpush1.msra.mxu0 0.0
      %4137 = vmatprep.subr.mxu0 0.0
      %4138 = vmatpush1.msra.mxu0 0.0
      %4139 = vmatprep.subr.mxu0 0.0
      %4140 = vmatpush1.msra.mxu0 0.0
      %4141 = vmatprep.subr.mxu0 0.0
      %4142 = vmatpush1.msra.mxu0 0.0
      %4143 = vmatprep.subr.mxu0 0.0
      %4144 = vmatpush1.msra.mxu0 0.0
      %4145 = vmatprep.subr.mxu0 0.0
      %4146 = vmatpush1.msra.mxu0 0.0
      %4147 = vmatprep.subr.mxu0 0.0
      %4148 = vmatpush1.msra.mxu0 0.0
      %4149 = vmatprep.subr.mxu0 0.0
      %4150 = vmatpush1.msra.mxu0 0.0
      %4151 = vmatprep.subr.mxu0 0.0
      %4152 = vmatpush1.msra.mxu0 0.0
      %4153 = vmatprep.subr.mxu0 0.0
      %4154 = vmatpush1.msra.mxu0 0.0
      %4155 = vmatprep.subr.mxu0 0.0
      %4156 = vmatpush1.msra.mxu0 0.0
      %4157 = vmatprep.subr.mxu0 0.0
      %4158 = vmatpush1.msra.mxu0 0.0
      %4159 = vmatprep.subr.mxu0 0.0
      %4160 = vmatpush1.msra.mxu0 0.0
      %4161 = vmatprep.subr.mxu0 0.0
      %4162 = vmatpush1.msra.mxu0 0.0
      %4163 = vmatprep.subr.mxu0 0.0
      %4164 = vmatpush1.msra.mxu0 0.0
      %4165 = vmatprep.subr.mxu0 0.0
      %4166 = vmatpush1.msra.mxu0 0.0
      %4167 = vmatprep.subr.mxu0 0.0
      %4168 = vmatpush1.msra.mxu0 0.0
      %4169 = vmatprep.subr.mxu0 0.0
      %4170 = vmatpush1.msra.mxu0 0.0
      %4171 = vmatprep.subr.mxu0 0.0
      %4172 = vmatpush1.msra.mxu0 0.0
      %4173 = vmatprep.subr.mxu0 0.0
      %4174 = vmatpush1.msra.mxu0 0.0
      %4175 = vmatprep.subr.mxu0 0.0
      %4176 = vmatpush1.msra.mxu0 0.0
      %4177 = vmatprep.subr.mxu0 0.0
      %4178 = vmatpush1.msra.mxu0 0.0
      %4179 = vmatprep.subr.mxu0 0.0
      %4180 = vmatpush1.msra.mxu0 0.0
      %4181 = vmatprep.subr.mxu0 0.0
      %4182 = vmatpush1.msra.mxu0 0.0
      %4183 = vmatprep.subr.mxu0 0.0
      %4184 = vmatpush1.msra.mxu0 0.0
      %4185 = vmatprep.subr.mxu0 0.0
      %4186 = vmatpush1.msra.mxu0 0.0
      %4187 = vmatprep.subr.mxu0 0.0
      %4188 = vmatpush1.msra.mxu0 0.0
      %4189 = vmatprep.subr.mxu0 0.0
      %4190 = vmatpush1.msra.mxu0 0.0
      %4191 = vmatprep.mubr.f32.mxu0 0.0
      %4192 = vmatmul.mubr.f32.gmra.mrb[0].mxu0 %v4122
      %v4193 = vpop.f32.mrb[0].mxu0
      %v4194 = vadd.f32 0.0, %v4193
      %v4195 = vpop.f32.mrb[0].mxu0
      %v4196 = vadd.f32 0.0, %v4195
      %4197 = vmatprep.mubr.f32.mxu0 0.0
      %4198 = vmatmul.mubr.f32.gmra.mrb[0].mxu0 %v4125
      %v4199 = vpop.f32.mrb[0].mxu0
      %v4200 = vadd.f32 0.0, %v4199
      %v4201 = vpop.f32.mrb[0].mxu0
      %v4202 = vadd.f32 0.0, %v4201
      %4203 = vdwg.mxu0
      %v4204 = vadd.f32 %v4078, %v4194
      %v4205 = vadd.f32 %v4079, %v4196
      %v4206 = vadd.f32 %v4080, %v4200
      %v4207 = vadd.f32 %v4081, %v4202
      %s4208 = scalar_lea.vmem %s10, 96
      %v4209 = vld [vmem:[%s4208] sm:$0xff]
      %v4210 = vld [vmem:[%s4208 + $0x8] sm:$0xff]
      %4211 = vrot.lane.b32.xlu0 %v4085, 113
      %v4212 = vpop.permute.xlu0 %4211
      %4213 = vrot.lane.b32.xlu0 %v4086, 113
      %v4214 = vpop.permute.xlu0 %4213
      %4215 = vrot.lane.b32.xlu0 %v4087, 113
      %v4216 = vpop.permute.xlu0 %4215
      %4217 = vrot.lane.b32.xlu0 %v4088, 113
      %v4218 = vpop.permute.xlu0 %4217
      %4219 = vrot.lane.b32.xlu0 %v4089, 113
      %v4220 = vpop.permute.xlu0 %4219
      %4221 = vrot.lane.b32.xlu0 %v4090, 113
      %v4222 = vpop.permute.xlu0 %4221
      %v4223 = vsel %vm1284, %v4212, %v4214
      %v4224 = vsel %vm1284, %v4214, %v4216
      %v4225 = vsel %vm1284, %v4218, %v4220
      %v4226 = vsel %vm1284, %v4220, %v4222
      %v4231 = vsel %vm704, %v4223, 0.0
      %v4232 = vsel %vm705, %v4224, 0.0
      %v4233 = vsel %vm704, %v4225, 0.0
      %v4234 = vsel %vm705, %v4226, 0.0
      %v4236 = vsel %vm730, %v4209, 0
      %v4239 = vsel %vm730, %v4210, 0
      %4241 = vmatprep.subr.mxu0 %v4232
      %4242 = vmatpush1.msra.mxu0 %v4231
      %4243 = vmatprep.subr.mxu0 %v4234
      %4244 = vmatpush1.msra.mxu0 %v4233
      %4245 = vmatprep.subr.mxu0 0.0
      %4246 = vmatpush1.msra.mxu0 0.0
      %4247 = vmatprep.subr.mxu0 0.0
      %4248 = vmatpush1.msra.mxu0 0.0
      %4249 = vmatprep.subr.mxu0 0.0
      %4250 = vmatpush1.msra.mxu0 0.0
      %4251 = vmatprep.subr.mxu0 0.0
      %4252 = vmatpush1.msra.mxu0 0.0
      %4253 = vmatprep.subr.mxu0 0.0
      %4254 = vmatpush1.msra.mxu0 0.0
      %4255 = vmatprep.subr.mxu0 0.0
      %4256 = vmatpush1.msra.mxu0 0.0
      %4257 = vmatprep.subr.mxu0 0.0
      %4258 = vmatpush1.msra.mxu0 0.0
      %4259 = vmatprep.subr.mxu0 0.0
      %4260 = vmatpush1.msra.mxu0 0.0
      %4261 = vmatprep.subr.mxu0 0.0
      %4262 = vmatpush1.msra.mxu0 0.0
      %4263 = vmatprep.subr.mxu0 0.0
      %4264 = vmatpush1.msra.mxu0 0.0
      %4265 = vmatprep.subr.mxu0 0.0
      %4266 = vmatpush1.msra.mxu0 0.0
      %4267 = vmatprep.subr.mxu0 0.0
      %4268 = vmatpush1.msra.mxu0 0.0
      %4269 = vmatprep.subr.mxu0 0.0
      %4270 = vmatpush1.msra.mxu0 0.0
      %4271 = vmatprep.subr.mxu0 0.0
      %4272 = vmatpush1.msra.mxu0 0.0
      %4273 = vmatprep.subr.mxu0 0.0
      %4274 = vmatpush1.msra.mxu0 0.0
      %4275 = vmatprep.subr.mxu0 0.0
      %4276 = vmatpush1.msra.mxu0 0.0
      %4277 = vmatprep.subr.mxu0 0.0
      %4278 = vmatpush1.msra.mxu0 0.0
      %4279 = vmatprep.subr.mxu0 0.0
      %4280 = vmatpush1.msra.mxu0 0.0
      %4281 = vmatprep.subr.mxu0 0.0
      %4282 = vmatpush1.msra.mxu0 0.0
      %4283 = vmatprep.subr.mxu0 0.0
      %4284 = vmatpush1.msra.mxu0 0.0
      %4285 = vmatprep.subr.mxu0 0.0
      %4286 = vmatpush1.msra.mxu0 0.0
      %4287 = vmatprep.subr.mxu0 0.0
      %4288 = vmatpush1.msra.mxu0 0.0
      %4289 = vmatprep.subr.mxu0 0.0
      %4290 = vmatpush1.msra.mxu0 0.0
      %4291 = vmatprep.subr.mxu0 0.0
      %4292 = vmatpush1.msra.mxu0 0.0
      %4293 = vmatprep.subr.mxu0 0.0
      %4294 = vmatpush1.msra.mxu0 0.0
      %4295 = vmatprep.subr.mxu0 0.0
      %4296 = vmatpush1.msra.mxu0 0.0
      %4297 = vmatprep.subr.mxu0 0.0
      %4298 = vmatpush1.msra.mxu0 0.0
      %4299 = vmatprep.subr.mxu0 0.0
      %4300 = vmatpush1.msra.mxu0 0.0
      %4301 = vmatprep.subr.mxu0 0.0
      %4302 = vmatpush1.msra.mxu0 0.0
      %4303 = vmatprep.subr.mxu0 0.0
      %4304 = vmatpush1.msra.mxu0 0.0
      %4305 = vmatprep.mubr.f32.mxu0 0.0
      %4306 = vmatmul.mubr.f32.gmra.mrb[0].mxu0 %v4236
      %v4307 = vpop.f32.mrb[0].mxu0
      %v4308 = vadd.f32 0.0, %v4307
      %v4309 = vpop.f32.mrb[0].mxu0
      %v4310 = vadd.f32 0.0, %v4309
      %4311 = vmatprep.mubr.f32.mxu0 0.0
      %4312 = vmatmul.mubr.f32.gmra.mrb[0].mxu0 %v4239
      %v4313 = vpop.f32.mrb[0].mxu0
      %v4314 = vadd.f32 0.0, %v4313
      %v4315 = vpop.f32.mrb[0].mxu0
      %v4316 = vadd.f32 0.0, %v4315
      %4317 = vdwg.mxu0
      %v4318 = vadd.f32 %v4204, %v4308
      %v4319 = vadd.f32 %v4205, %v4310
      %v4320 = vadd.f32 %v4206, %v4314
      %v4321 = vadd.f32 %v4207, %v4316
      %s4322 = scalar_lea.vmem %s10, 112
      %v4323 = vld [vmem:[%s4322] sm:$0xff]
      %v4324 = vld [vmem:[%s4322 + $0x8] sm:$0xff]
      %4325 = vrot.lane.b32.xlu0 %v4085, 112
      %v4326 = vpop.permute.xlu0 %4325
      %4327 = vrot.lane.b32.xlu0 %v4086, 112
      %v4328 = vpop.permute.xlu0 %4327
      %4329 = vrot.lane.b32.xlu0 %v4087, 112
      %v4330 = vpop.permute.xlu0 %4329
      %4331 = vrot.lane.b32.xlu0 %v4088, 112
      %v4332 = vpop.permute.xlu0 %4331
      %4333 = vrot.lane.b32.xlu0 %v4089, 112
      %v4334 = vpop.permute.xlu0 %4333
      %4335 = vrot.lane.b32.xlu0 %v4090, 112
      %v4336 = vpop.permute.xlu0 %4335
      %v4337 = vsel %vm1381, %v4326, %v4328
      %v4338 = vsel %vm1381, %v4328, %v4330
      %v4339 = vsel %vm1381, %v4332, %v4334
      %v4340 = vsel %vm1381, %v4334, %v4336
      %v4346 = vsel %vm730, %v4323, 0
      %v4349 = vsel %vm730, %v4324, 0
      %4351 = vmatprep.subr.mxu0 %v4338
      %4352 = vmatpush1.msra.mxu0 %v4337
      %4353 = vmatprep.subr.mxu0 %v4340
      %4354 = vmatpush1.msra.mxu0 %v4339
      %4355 = vmatprep.subr.mxu0 0.0
      %4356 = vmatpush1.msra.mxu0 0.0
      %4357 = vmatprep.subr.mxu0 0.0
      %4358 = vmatpush1.msra.mxu0 0.0
      %4359 = vmatprep.subr.mxu0 0.0
      %4360 = vmatpush1.msra.mxu0 0.0
      %4361 = vmatprep.subr.mxu0 0.0
      %4362 = vmatpush1.msra.mxu0 0.0
      %4363 = vmatprep.subr.mxu0 0.0
      %4364 = vmatpush1.msra.mxu0 0.0
      %4365 = vmatprep.subr.mxu0 0.0
      %4366 = vmatpush1.msra.mxu0 0.0
      %4367 = vmatprep.subr.mxu0 0.0
      %4368 = vmatpush1.msra.mxu0 0.0
      %4369 = vmatprep.subr.mxu0 0.0
      %4370 = vmatpush1.msra.mxu0 0.0
      %4371 = vmatprep.subr.mxu0 0.0
      %4372 = vmatpush1.msra.mxu0 0.0
      %4373 = vmatprep.subr.mxu0 0.0
      %4374 = vmatpush1.msra.mxu0 0.0
      %4375 = vmatprep.subr.mxu0 0.0
      %4376 = vmatpush1.msra.mxu0 0.0
      %4377 = vmatprep.subr.mxu0 0.0
      %4378 = vmatpush1.msra.mxu0 0.0
      %4379 = vmatprep.subr.mxu0 0.0
      %4380 = vmatpush1.msra.mxu0 0.0
      %4381 = vmatprep.subr.mxu0 0.0
      %4382 = vmatpush1.msra.mxu0 0.0
      %4383 = vmatprep.subr.mxu0 0.0
      %4384 = vmatpush1.msra.mxu0 0.0
      %4385 = vmatprep.subr.mxu0 0.0
      %4386 = vmatpush1.msra.mxu0 0.0
      %4387 = vmatprep.subr.mxu0 0.0
      %4388 = vmatpush1.msra.mxu0 0.0
      %4389 = vmatprep.subr.mxu0 0.0
      %4390 = vmatpush1.msra.mxu0 0.0
      %4391 = vmatprep.subr.mxu0 0.0
      %4392 = vmatpush1.msra.mxu0 0.0
      %4393 = vmatprep.subr.mxu0 0.0
      %4394 = vmatpush1.msra.mxu0 0.0
      %4395 = vmatprep.subr.mxu0 0.0
      %4396 = vmatpush1.msra.mxu0 0.0
      %4397 = vmatprep.subr.mxu0 0.0
      %4398 = vmatpush1.msra.mxu0 0.0
      %4399 = vmatprep.subr.mxu0 0.0
      %4400 = vmatpush1.msra.mxu0 0.0
      %4401 = vmatprep.subr.mxu0 0.0
      %4402 = vmatpush1.msra.mxu0 0.0
      %4403 = vmatprep.subr.mxu0 0.0
      %4404 = vmatpush1.msra.mxu0 0.0
      %4405 = vmatprep.subr.mxu0 0.0
      %4406 = vmatpush1.msra.mxu0 0.0
      %4407 = vmatprep.subr.mxu0 0.0
      %4408 = vmatpush1.msra.mxu0 0.0
      %4409 = vmatprep.subr.mxu0 0.0
      %4410 = vmatpush1.msra.mxu0 0.0
      %4411 = vmatprep.subr.mxu0 0.0
      %4412 = vmatpush1.msra.mxu0 0.0
      %4413 = vmatprep.subr.mxu0 0.0
      %4414 = vmatpush1.msra.mxu0 0.0
      %4415 = vmatprep.mubr.f32.mxu0 0.0
      %4416 = vmatmul.mubr.f32.gmra.mrb[0].mxu0 %v4346
      %v4417 = vpop.f32.mrb[0].mxu0
      %v4418 = vadd.f32 0.0, %v4417
      %v4419 = vpop.f32.mrb[0].mxu0
      %v4420 = vadd.f32 0.0, %v4419
      %4421 = vmatprep.mubr.f32.mxu0 0.0
      %4422 = vmatmul.mubr.f32.gmra.mrb[0].mxu0 %v4349
      %v4423 = vpop.f32.mrb[0].mxu0
      %v4424 = vadd.f32 0.0, %v4423
      %v4425 = vpop.f32.mrb[0].mxu0
      %v4426 = vadd.f32 0.0, %v4425
      %4427 = vdwg.mxu0
      %v4428 = vadd.f32 %v4318, %v4418
      %v4429 = vadd.f32 %v4319, %v4420
      %v4430 = vadd.f32 %v4320, %v4424
      %v4431 = vadd.f32 %v4321, %v4426
      %s4432 = scalar_lea.vmem %s10, 128
      %v4433 = vld [vmem:[%s4432] sm:$0xff]
      %v4434 = vld [vmem:[%s4432 + $0x8] sm:$0xff]
      %4435 = vrot.lane.b32.xlu0 %v4085, 111
      %v4436 = vpop.permute.xlu0 %4435
      %4437 = vrot.lane.b32.xlu0 %v4086, 111
      %v4438 = vpop.permute.xlu0 %4437
      %4439 = vrot.lane.b32.xlu0 %v4087, 111
      %v4440 = vpop.permute.xlu0 %4439
      %4441 = vrot.lane.b32.xlu0 %v4088, 111
      %v4442 = vpop.permute.xlu0 %4441
      %4443 = vrot.lane.b32.xlu0 %v4089, 111
      %v4444 = vpop.permute.xlu0 %4443
      %4445 = vrot.lane.b32.xlu0 %v4090, 111
      %v4446 = vpop.permute.xlu0 %4445
      %v4447 = vsel %vm1472, %v4436, %v4438
      %v4448 = vsel %vm1472, %v4438, %v4440
      %v4449 = vsel %vm1472, %v4442, %v4444
      %v4450 = vsel %vm1472, %v4444, %v4446
      %v4455 = vsel %vm897, %v4447, 0.0
      %v4456 = vsel %vm898, %v4448, 0.0
      %v4457 = vsel %vm897, %v4449, 0.0
      %v4458 = vsel %vm898, %v4450, 0.0
      %v4460 = vsel %vm730, %v4433, 0
      %v4463 = vsel %vm730, %v4434, 0
      %4465 = vmatprep.subr.mxu0 %v4456
      %4466 = vmatpush1.msra.mxu0 %v4455
      %4467 = vmatprep.subr.mxu0 %v4458
      %4468 = vmatpush1.msra.mxu0 %v4457
      %4469 = vmatprep.subr.mxu0 0.0
      %4470 = vmatpush1.msra.mxu0 0.0
      %4471 = vmatprep.subr.mxu0 0.0
      %4472 = vmatpush1.msra.mxu0 0.0
      %4473 = vmatprep.subr.mxu0 0.0
      %4474 = vmatpush1.msra.mxu0 0.0
      %4475 = vmatprep.subr.mxu0 0.0
      %4476 = vmatpush1.msra.mxu0 0.0
      %4477 = vmatprep.subr.mxu0 0.0
      %4478 = vmatpush1.msra.mxu0 0.0
      %4479 = vmatprep.subr.mxu0 0.0
      %4480 = vmatpush1.msra.mxu0 0.0
      %4481 = vmatprep.subr.mxu0 0.0
      %4482 = vmatpush1.msra.mxu0 0.0
      %4483 = vmatprep.subr.mxu0 0.0
      %4484 = vmatpush1.msra.mxu0 0.0
      %4485 = vmatprep.subr.mxu0 0.0
      %4486 = vmatpush1.msra.mxu0 0.0
      %4487 = vmatprep.subr.mxu0 0.0
      %4488 = vmatpush1.msra.mxu0 0.0
      %4489 = vmatprep.subr.mxu0 0.0
      %4490 = vmatpush1.msra.mxu0 0.0
      %4491 = vmatprep.subr.mxu0 0.0
      %4492 = vmatpush1.msra.mxu0 0.0
      %4493 = vmatprep.subr.mxu0 0.0
      %4494 = vmatpush1.msra.mxu0 0.0
      %4495 = vmatprep.subr.mxu0 0.0
      %4496 = vmatpush1.msra.mxu0 0.0
      %4497 = vmatprep.subr.mxu0 0.0
      %4498 = vmatpush1.msra.mxu0 0.0
      %4499 = vmatprep.subr.mxu0 0.0
      %4500 = vmatpush1.msra.mxu0 0.0
      %4501 = vmatprep.subr.mxu0 0.0
      %4502 = vmatpush1.msra.mxu0 0.0
      %4503 = vmatprep.subr.mxu0 0.0
      %4504 = vmatpush1.msra.mxu0 0.0
      %4505 = vmatprep.subr.mxu0 0.0
      %4506 = vmatpush1.msra.mxu0 0.0
      %4507 = vmatprep.subr.mxu0 0.0
      %4508 = vmatpush1.msra.mxu0 0.0
      %4509 = vmatprep.subr.mxu0 0.0
      %4510 = vmatpush1.msra.mxu0 0.0
      %4511 = vmatprep.subr.mxu0 0.0
      %4512 = vmatpush1.msra.mxu0 0.0
      %4513 = vmatprep.subr.mxu0 0.0
      %4514 = vmatpush1.msra.mxu0 0.0
      %4515 = vmatprep.subr.mxu0 0.0
      %4516 = vmatpush1.msra.mxu0 0.0
      %4517 = vmatprep.subr.mxu0 0.0
      %4518 = vmatpush1.msra.mxu0 0.0
      %4519 = vmatprep.subr.mxu0 0.0
      %4520 = vmatpush1.msra.mxu0 0.0
      %4521 = vmatprep.subr.mxu0 0.0
      %4522 = vmatpush1.msra.mxu0 0.0
      %4523 = vmatprep.subr.mxu0 0.0
      %4524 = vmatpush1.msra.mxu0 0.0
      %4525 = vmatprep.subr.mxu0 0.0
      %4526 = vmatpush1.msra.mxu0 0.0
      %4527 = vmatprep.subr.mxu0 0.0
      %4528 = vmatpush1.msra.mxu0 0.0
      %4529 = vmatprep.mubr.f32.mxu0 0.0
      %4530 = vmatmul.mubr.f32.gmra.mrb[0].mxu0 %v4460
      %v4531 = vpop.f32.mrb[0].mxu0
      %v4532 = vadd.f32 0.0, %v4531
      %v4533 = vpop.f32.mrb[0].mxu0
      %v4534 = vadd.f32 0.0, %v4533
      %4535 = vmatprep.mubr.f32.mxu0 0.0
      %4536 = vmatmul.mubr.f32.gmra.mrb[0].mxu0 %v4463
      %v4537 = vpop.f32.mrb[0].mxu0
      %v4538 = vadd.f32 0.0, %v4537
      %v4539 = vpop.f32.mrb[0].mxu0
      %v4540 = vadd.f32 0.0, %v4539
      %4541 = vdwg.mxu0
      %v4542 = vadd.f32 %v4428, %v4532
      %v4543 = vadd.f32 %v4429, %v4534
      %v4544 = vadd.f32 %v4430, %v4538
      %v4545 = vadd.f32 %v4431, %v4540
      %v4546 = vld [vmem:[%s11] sm:$0xff]
      %v4547 = vld [vmem:[%s11 + $0x8] sm:$0xff]
      %4549 = vset.pattern.permute.xlu0 0
      %4550 = vperm.xlu0 %4549, %v4546
      %v4551 = vpop.permute.xlu0 %4550
      %4554 = vset.pattern.permute.xlu0 0
      %4555 = vperm.xlu0 %4554, %v4547
      %v4556 = vpop.permute.xlu0 %4555
      %v4558 = vadd.f32 %v4542, %v4551
      %v4559 = vadd.f32 %v4543, %v4551
      %v4560 = vadd.f32 %v4544, %v4556
      %v4561 = vadd.f32 %v4545, %v4556
      %v4562 = vmax.f32 %v4558, 0.0
      %v4563 = vmax.f32 %v4559, 0.0
      %v4564 = vmax.f32 %v4560, 0.0
      %v4565 = vmax.f32 %v4561, 0.0
      %v4566 = vlaneseq
      %v4567 = vshrl.u32 %v4566, 7
      %v4568 = vsub.s32 0, %v4567
      %v4569 = vrot.slane %v2528, %v4568
      %v4570 = vlaneseq
      %v4571 = vshrl.u32 %v4570, 7
      %v4572 = vsub.s32 0, %v4571
      %v4573 = vrot.slane %v2530, %v4572
      %v4574 = vmul.f32 %v4562, %v4569
      %v4575 = vmul.f32 %v4563, %v4573
      %v4576 = vmul.f32 %v4564, %v4569
      %v4577 = vmul.f32 %v4565, %v4573
      %v4578 = vld [vmem:[%s12] sm:$0x7]
      %v4579 = vld [vmem:[%s13] sm:$0x7]
      %4581 = vset.pattern.permute.xlu0 0
      %4582 = vperm.xlu0 %4581, %v4579
      %v4583 = vpop.permute.xlu0 %4582
      %v4586 = vsel %vm730, %v4578, 0
      %4588 = vmatprep.subr.mxu0 %v4575
      %4589 = vmatpush1.msra.mxu0 %v4574
      %4590 = vmatprep.subr.mxu0 %v4577
      %4591 = vmatpush1.msra.mxu0 %v4576
      %4592 = vmatprep.subr.mxu0 0.0
      %4593 = vmatpush1.msra.mxu0 0.0
      %4594 = vmatprep.subr.mxu0 0.0
      %4595 = vmatpush1.msra.mxu0 0.0
      %4596 = vmatprep.subr.mxu0 0.0
      %4597 = vmatpush1.msra.mxu0 0.0
      %4598 = vmatprep.subr.mxu0 0.0
      %4599 = vmatpush1.msra.mxu0 0.0
      %4600 = vmatprep.subr.mxu0 0.0
      %4601 = vmatpush1.msra.mxu0 0.0
      %4602 = vmatprep.subr.mxu0 0.0
      %4603 = vmatpush1.msra.mxu0 0.0
      %4604 = vmatprep.subr.mxu0 0.0
      %4605 = vmatpush1.msra.mxu0 0.0
      %4606 = vmatprep.subr.mxu0 0.0
      %4607 = vmatpush1.msra.mxu0 0.0
      %4608 = vmatprep.subr.mxu0 0.0
      %4609 = vmatpush1.msra.mxu0 0.0
      %4610 = vmatprep.subr.mxu0 0.0
      %4611 = vmatpush1.msra.mxu0 0.0
      %4612 = vmatprep.subr.mxu0 0.0
      %4613 = vmatpush1.msra.mxu0 0.0
      %4614 = vmatprep.subr.mxu0 0.0
      %4615 = vmatpush1.msra.mxu0 0.0
      %4616 = vmatprep.subr.mxu0 0.0
      %4617 = vmatpush1.msra.mxu0 0.0
      %4618 = vmatprep.subr.mxu0 0.0
      %4619 = vmatpush1.msra.mxu0 0.0
      %4620 = vmatprep.subr.mxu0 0.0
      %4621 = vmatpush1.msra.mxu0 0.0
      %4622 = vmatprep.subr.mxu0 0.0
      %4623 = vmatpush1.msra.mxu0 0.0
      %4624 = vmatprep.subr.mxu0 0.0
      %4625 = vmatpush1.msra.mxu0 0.0
      %4626 = vmatprep.subr.mxu0 0.0
      %4627 = vmatpush1.msra.mxu0 0.0
      %4628 = vmatprep.subr.mxu0 0.0
      %4629 = vmatpush1.msra.mxu0 0.0
      %4630 = vmatprep.subr.mxu0 0.0
      %4631 = vmatpush1.msra.mxu0 0.0
      %4632 = vmatprep.subr.mxu0 0.0
      %4633 = vmatpush1.msra.mxu0 0.0
      %4634 = vmatprep.subr.mxu0 0.0
      %4635 = vmatpush1.msra.mxu0 0.0
      %4636 = vmatprep.subr.mxu0 0.0
      %4637 = vmatpush1.msra.mxu0 0.0
      %4638 = vmatprep.subr.mxu0 0.0
      %4639 = vmatpush1.msra.mxu0 0.0
      %4640 = vmatprep.subr.mxu0 0.0
      %4641 = vmatpush1.msra.mxu0 0.0
      %4642 = vmatprep.subr.mxu0 0.0
      %4643 = vmatpush1.msra.mxu0 0.0
      %4644 = vmatprep.subr.mxu0 0.0
      %4645 = vmatpush1.msra.mxu0 0.0
      %4646 = vmatprep.subr.mxu0 0.0
      %4647 = vmatpush1.msra.mxu0 0.0
      %4648 = vmatprep.subr.mxu0 0.0
      %4649 = vmatpush1.msra.mxu0 0.0
      %4650 = vmatprep.subr.mxu0 0.0
      %4651 = vmatpush1.msra.mxu0 0.0
      %4652 = vmatprep.mubr.f32.mxu0 0.0
      %4653 = vmatmul.mubr.f32.gmra.mrb[0].mxu0 %v4586
      %v4654 = vpop.f32.mrb[0].mxu0
      %v4655 = vadd.f32 %v4583, %v4654
      %v4656 = vpop.f32.mrb[0].mxu0
      %v4657 = vadd.f32 %v4583, %v4656
      %4658 = vdwg.mxu0
      %vm4659 = vcmask 1042432
      %v4660 = vsel %vm4659, %v4655, -inf
      %v4661 = vrot.slane %v4660, 4
      %v4662 = vmax.f32 %v4660, %v4661
      %v4663 = vrot.slane %v4662, 2
      %v4664 = vmax.f32 %v4662, %v4663
      %v4665 = vrot.slane %v4664, 1
      %v4666 = vmax.f32 %v4664, %v4665
      %v4667 = vsel %vm4659, %v4657, -inf
      %v4668 = vrot.slane %v4667, 4
      %v4669 = vmax.f32 %v4667, %v4668
      %v4670 = vrot.slane %v4669, 2
      %v4671 = vmax.f32 %v4669, %v4670
      %v4672 = vrot.slane %v4671, 1
      %v4673 = vmax.f32 %v4671, %v4672
      %v4674 = vsub.f32 %v4655, %v4666
      %v4675 = vsub.f32 %v4657, %v4673
      %v4676 = vmul.f32 %v4674, 1.442695
      %v4677 = vpow.pop %v4676
      %v4678 = vmul.f32 %v4675, 1.442695
      %v4679 = vpow.pop %v4678
      %v4680 = vsel %vm4659, %v4677, 0.0
      %v4681 = vrot.slane %v4680, 4
      %v4682 = vadd.f32 %v4680, %v4681
      %v4683 = vrot.slane %v4682, 2
      %v4684 = vadd.f32 %v4682, %v4683
      %v4685 = vrot.slane %v4684, 1
      %v4686 = vadd.f32 %v4684, %v4685
      %v4687 = vsel %vm4659, %v4679, 0.0
      %v4688 = vrot.slane %v4687, 4
      %v4689 = vadd.f32 %v4687, %v4688
      %v4690 = vrot.slane %v4689, 2
      %v4691 = vadd.f32 %v4689, %v4690
      %v4692 = vrot.slane %v4691, 1
      %v4693 = vadd.f32 %v4691, %v4692
      %v4694 = vrcp.pop %v4686
      %v4695 = vrcp.pop %v4693
      %v4696 = vmul.f32 %v4677, %v4694
      %v4697 = vmul.f32 %v4679, %v4695
      %v4700 = vcombine.low %v1569, %v1570
      %v4702 = vunpack.c.l.s4 1983009808
      %v4703 = vunpack.c.0.s8 %v4702
      %v4704 = vlaneseq
      %v4705 = vshrl.u32 %v4704, 7
      %v4706 = vsub.s32 %v4703, %v4705
      %v4707 = vrot.slane %v4700, %v4706
      %4709 = vst [vmem:[%s625] sm:$0xf] %v4707
      %v4710 = vcombine.low %v2426, %v2427
      %v4712 = vunpack.c.l.s4 1983009808
      %v4713 = vunpack.c.0.s8 %v4712
      %v4714 = vlaneseq
      %v4715 = vshrl.u32 %v4714, 7
      %v4716 = vsub.s32 %v4713, %v4715
      %v4717 = vrot.slane %v4710, %v4716
      %4719 = vst [vmem:[%s630] sm:$0xf] %v4717
      %4720 = vst.msk [vmem:[%s634] sm:$0x3] %vm2558, %v2553
      %4721 = vst [vmem:[%s639] sm:$0xff] %v3529
      %4722 = vst [vmem:[%s639 + $0x8] sm:$0xff] %v3530
      %4723 = vst [vmem:[%s639 + $0x10] sm:$0xff] %v3531
      %4724 = vst [vmem:[%s639 + $0x18] sm:$0xff] %v3532
      %v4727 = vcombine.low %v4696, %v4697
      %4729 = vst [vmem:[%s644] sm:$0x77] %v4727
      %p4730 = scmp.lt.s32.totalorder %s32, 1
      %s4731 = scalar_select %p4730, %s32, 1
      %s4732 = smul.addr %s4731, 2
      %s4733 = smul.addr %s4732, 2
      %s4734 = scalar_lea.vmem %s14, %s4733
      %p4735 = scmp.lt.s32.totalorder %s32, 1
      %s4736 = scalar_select %p4735, %s32, 1
      %s4737 = smul.addr %s4736, 2
      %s4738 = smul.addr %s4737, 2
      %s4739 = scalar_lea.vmem %s15, %s4738
      %p4740 = scmp.lt.s32.totalorder %s32, 1
      %s4741 = scalar_select %p4740, %s32, 1
      %s4742 = smul.addr %s4741, 2
      %s4743 = scalar_lea.vmem %s16, %s4742
      %p4744 = scmp.lt.s32.totalorder %s32, 1
      %s4745 = scalar_select %p4744, %s32, 1
      %s4746 = smul.addr %s4745, 4
      %s4747 = smul.addr %s4746, 8
      %s4748 = scalar_lea.vmem %s17, %s4747
      %p4749 = scmp.lt.s32.totalorder %s32, 1
      %s4750 = scalar_select %p4749, %s32, 1
      %s4751 = smul.addr %s4750, 2
      %s4752 = smul.addr %s4751, 4
      %s4753 = scalar_lea.vmem %s18, %s4752
      // Predicated region
      $region77: #{vonet_forward.1} parent=75 // pred_check
        %p4754 = pneg %p354
      $region78: #{vonet_forward.1} parent=75 // pred_check_branch
        %4756 = sbr.rel (%p4754) target = $region80
      $region79: #{vonet_forward.1} parent=75 // pred_region
        _
      $region80: #{vonet_forward.1} parent=75 // pred_fallthru
        _
      // Predicated region
      $region81: #{vonet_forward.1} parent=75 // pred_check
        %p4757 = pneg %p380
      $region82: #{vonet_forward.1} parent=75 // pred_check_branch
        %4759 = sbr.rel (%p4757) target = $region84
      $region83: #{vonet_forward.1} parent=75 // pred_region
        _
      $region84: #{vonet_forward.1} parent=75 // pred_fallthru
        _
      // Predicated region
      $region85: #{vonet_forward.1} parent=75 // pred_check
        %p4760 = pneg %p406
      $region86: #{vonet_forward.1} parent=75 // pred_check_branch
        %4762 = sbr.rel (%p4760) target = $region88
      $region87: #{vonet_forward.1} parent=75 // pred_region
        _
      $region88: #{vonet_forward.1} parent=75 // pred_fallthru
        _
      // Predicated region
      $region89: #{vonet_forward.1} parent=75 // pred_check
        %p4763 = pneg %p432
      $region90: #{vonet_forward.1} parent=75 // pred_check_branch
        %4765 = sbr.rel (%p4763) target = $region92
      $region91: #{vonet_forward.1} parent=75 // pred_region
        _
      $region92: #{vonet_forward.1} parent=75 // pred_fallthru
        _
      // Predicated region
      $region93: #{vonet_forward.1} parent=75 // pred_check
        %p4766 = pneg %p458
      $region94: #{vonet_forward.1} parent=75 // pred_check_branch
        %4768 = sbr.rel (%p4766) target = $region96
      $region95: #{vonet_forward.1} parent=75 // pred_region
        _
      $region96: #{vonet_forward.1} parent=75 // pred_fallthru
        _
    $region76: #{vonet_forward.1} parent=5 // pred_fallthru
      _
    %p4769 = scmp.le.s32.totalorder 2, %s27
    // Predicated region
    $region97: #{vonet_forward.1} parent=5 // pred_check
      %p4770 = pneg %p4769
    $region98: #{vonet_forward.1} parent=5 // pred_check_branch
      %4772 = sbr.rel (%p4770) target = $region100
    $region99: #{vonet_forward.1} parent=5 // pred_region
      %s4773 = ssub.s32 %s27, 2
      // Predicated region
      $region101: #{vonet_forward.1} parent=99 // pred_check
        %p4774 = pneg %p360
      $region102: #{vonet_forward.1} parent=99 // pred_check_branch
        %4776 = sbr.rel (%p4774) target = $region104
      $region103: #{vonet_forward.1} parent=99 // pred_region
        %p4777 = scmp.lt.s32.totalorder %s33, 1
        %s4778 = scalar_select %p4777, %s33, 1
        %s4779 = smul.addr %s4778, 2
        %s4780 = smul.addr %s4779, 2
        %s4781 = scalar_lea.vmem %s14, %s4780
      $region104: #{vonet_forward.1} parent=99 // pred_fallthru
        _
      // Predicated region
      $region105: #{vonet_forward.1} parent=99 // pred_check
        %p4782 = pneg %p386
      $region106: #{vonet_forward.1} parent=99 // pred_check_branch
        %4784 = sbr.rel (%p4782) target = $region108
      $region107: #{vonet_forward.1} parent=99 // pred_region
        %p4785 = scmp.lt.s32.totalorder %s33, 1
        %s4786 = scalar_select %p4785, %s33, 1
        %s4787 = smul.addr %s4786, 2
        %s4788 = smul.addr %s4787, 2
        %s4789 = scalar_lea.vmem %s15, %s4788
      $region108: #{vonet_forward.1} parent=99 // pred_fallthru
        _
      // Predicated region
      $region109: #{vonet_forward.1} parent=99 // pred_check
        %p4790 = pneg %p412
      $region110: #{vonet_forward.1} parent=99 // pred_check_branch
        %4792 = sbr.rel (%p4790) target = $region112
      $region111: #{vonet_forward.1} parent=99 // pred_region
        %p4793 = scmp.lt.s32.totalorder %s33, 1
        %s4794 = scalar_select %p4793, %s33, 1
        %s4795 = smul.addr %s4794, 2
        %s4796 = scalar_lea.vmem %s16, %s4795
      $region112: #{vonet_forward.1} parent=99 // pred_fallthru
        _
      // Predicated region
      $region113: #{vonet_forward.1} parent=99 // pred_check
        %p4797 = pneg %p438
      $region114: #{vonet_forward.1} parent=99 // pred_check_branch
        %4799 = sbr.rel (%p4797) target = $region116
      $region115: #{vonet_forward.1} parent=99 // pred_region
        %p4800 = scmp.lt.s32.totalorder %s33, 1
        %s4801 = scalar_select %p4800, %s33, 1
        %s4802 = smul.addr %s4801, 4
        %s4803 = smul.addr %s4802, 8
        %s4804 = scalar_lea.vmem %s17, %s4803
      $region116: #{vonet_forward.1} parent=99 // pred_fallthru
        _
      // Predicated region
      $region117: #{vonet_forward.1} parent=99 // pred_check
        %p4805 = pneg %p464
      $region118: #{vonet_forward.1} parent=99 // pred_check_branch
        %4807 = sbr.rel (%p4805) target = $region120
      $region119: #{vonet_forward.1} parent=99 // pred_region
        %p4808 = scmp.lt.s32.totalorder %s33, 1
        %s4809 = scalar_select %p4808, %s33, 1
        %s4810 = smul.addr %s4809, 2
        %s4811 = smul.addr %s4810, 4
        %s4812 = scalar_lea.vmem %s18, %s4811
      $region120: #{vonet_forward.1} parent=99 // pred_fallthru
        _
    $region100: #{vonet_forward.1} parent=5 // pred_fallthru
      _
  $region6: #{vonet_forward.1} parent=0 // loop_footer
    %s31 = sadd.s32 1, %s27
  $region7: #{vonet_forward.1} parent=0 // loop_footer_branch
    %26 = sbr.rel target = $region3
  $region8: #{vonet_forward.1} parent=0 // loop_exit
    _

</llo_original>
